<compile_context>
chip_gen: v5e
topology: v5e:2x2
jax: 0.10.0
libtpu: 0.0.40
codegen_flags: <defaults>
</compile_context>

<pallas_src>
import jax
import jax.numpy as jnp
from jax.experimental import pallas as pl
from jax.experimental.pallas import tpu as pltpu

INPUT_DIM = 784
HIDDEN_DIM = 400
LATENT_DIM = 32
BN_EPS = 1e-5

_COMPILER_PARAMS = pltpu.CompilerParams(
    dimension_semantics=("parallel",),        # batch tiles are independent
    vmem_limit_bytes=32 * 1024 * 1024,        # safe on v5e/v6e/v7x; usage << limit
)


def _round_up(n, m):
    return ((n + m - 1) // m) * m


def vae_forward(x, eps, params, *, batch_tile=256, recon_dtype=jnp.float32):
    """x: [B, 784] f32, eps: [B, 32] f32 (reparameterization noise).
    Returns (x_reconstructed [B,784] recon_dtype, mu [B,32] f32, logvar [B,32] f32)."""
    (ew1, eb1, eg1, ebt1, wmu, bmu, wlv, blv,
     dw1, db1, dg1, dbt1, dw2, db2) = params
    # eb1 / db1 feed training-mode BatchNorm and are cancelled exactly by the
    # batch-mean subtraction -> not used by the kernels (saves two DMAs + VPU passes).
    del eb1, db1

    assert batch_tile % 8 == 0, "batch tile must be a multiple of the 8-row sublane"
    B = x.shape[0]
    TB = min(batch_tile, _round_up(B, 8))
    # Keep >= 2 batch tiles when B allows it so the "parallel" axis can be sharded
    # across both v7x TensorCores (harmless on single-core v5e/v6e).
    if B > 8 and _round_up(B, TB) == TB:
        TB = _round_up((B + 1) // 2, 8)
    B_pad = _round_up(B, TB)
    nbt = B_pad // TB
    needs_mask = B_pad != B
    inv_b = 1.0 / B

    # bf16 weights (half the HBM weight bytes, 2x MXU rate); fused mu|logvar projection.
    ew1_b = ew1.astype(jnp.bfloat16)                                        # [784, 400]
    wmulv_b = jnp.concatenate([wmu, wlv], axis=1).astype(jnp.bfloat16)      # [400, 64]
    bmulv = jnp.concatenate([bmu, blv])[None, :].astype(jnp.float32)        # [1, 64]
    dw1_b = dw1.astype(jnp.bfloat16)                                        # [32, 400]
    dw2_b = dw2.astype(jnp.bfloat16)                                        # [400, 784]
    db2_r = db2[None, :].astype(jnp.float32)                                # [1, 784]
    enc_gb = jnp.stack([eg1, ebt1], axis=0).astype(jnp.float32)             # [2, 400]
    dec_gb = jnp.stack([dg1, dbt1], axis=0).astype(jnp.float32)             # [2, 400]
    # TODO(synk): on v7x the two big weights (ew1, dw2) could be stored as fp8 (e4m3)
    # with per-output-channel scales folded into the BN affine / db2 for another ~2x
    # weight-bandwidth cut (fp8 MXU path).

    x_p = jnp.pad(x.astype(jnp.bfloat16), ((0, B_pad - B), (0, 0)))
    eps_p = jnp.pad(eps.astype(jnp.float32), ((0, B_pad - B), (0, 0)))

    def tile_stats(h):
        # Per-tile (sum, sum-of-squares) of a [TB, H] pre-activation -> [1, 2, H].
        s = jnp.sum(h, axis=0, keepdims=True)
        sq = jnp.sum(h * h, axis=0, keepdims=True)
        return jnp.concatenate([s, sq], axis=0)[None]

    def fold_affine(stat_ref, gb_ref):
        # Fold the per-tile stats [nbt, 2, H] and (gamma, beta) [2, H] into the
        # training-mode (biased-variance) BN affine: BN(h) = h * scale + shift.
        s = stat_ref[0]
        for t in range(1, nbt):                  # nbt is static -> unrolled adds
            s = s + stat_ref[t]
        mean = s[0:1, :] * inv_b
        var = jnp.maximum(s[1:2, :] * inv_b - mean * mean, 0.0)
        scale = gb_ref[0:1, :] * jax.lax.rsqrt(var + BN_EPS)
        shift = gb_ref[1:2, :] - mean * scale
        return scale, shift

    # ---------------- pass 1: encoder fc1 pre-activation + its batch statistics ----------------
    def enc_pre_kernel(x_ref, ew1_ref, hpre_ref, stat_ref):
        h_pre = jnp.dot(x_ref[...], ew1_ref[...], preferred_element_type=jnp.float32)
        hpre_ref[...] = h_pre
        # Padded x rows are zero and the fc1 bias is dropped, so they contribute
        # exactly zero to the stats -> no row mask needed in this pass.
        stat_ref[...] = tile_stats(h_pre)

    h_pre_p, enc_stats = pl.pallas_call(
        enc_pre_kernel,
        grid=(nbt,),
        in_specs=[
            pl.BlockSpec((TB, INPUT_DIM), lambda i: (i, 0)),             # x tile (streamed)
            pl.BlockSpec((INPUT_DIM, HIDDEN_DIM), lambda i: (0, 0)),     # ew1 (resident)
        ],
        out_specs=(
            pl.BlockSpec((TB, HIDDEN_DIM), lambda i: (i, 0)),            # h_pre stash
            pl.BlockSpec((1, 2, HIDDEN_DIM), lambda i: (i, 0, 0)),       # per-tile stats
        ),
        out_shape=(
            jax.ShapeDtypeStruct((B_pad, HIDDEN_DIM), jnp.float32),
            jax.ShapeDtypeStruct((nbt, 2, HIDDEN_DIM), jnp.float32),
        ),
        compiler_params=_COMPILER_PARAMS,
        cost_estimate=pl.CostEstimate(
            flops=2 * B_pad * INPUT_DIM * HIDDEN_DIM,
            transcendentals=0,
            bytes_accessed=(B_pad * INPUT_DIM * 2 + INPUT_DIM * HIDDEN_DIM * 2
                            + B_pad * HIDDEN_DIM * 4 + nbt * 2 * HIDDEN_DIM * 4),
        ),
    )(x_p, ew1_b)

    # ---- pass 2: encoder BN+ReLU, fused mu|logvar, reparameterize, decoder fc1 stats ----
    def enc_apply_kernel(hpre_ref, eps_ref, estat_ref, egb_ref, wmulv_ref, bmulv_ref,
                         dw1_ref, mulv_ref, z_ref, dstat_ref):
        scale, shift = fold_affine(estat_ref, egb_ref)
        h = jnp.maximum(hpre_ref[...] * scale + shift, 0.0)                  # BN + ReLU (f32)
        mulv = jnp.dot(h.astype(jnp.bfloat16), wmulv_ref[...],
                       preferred_element_type=jnp.float32) + bmulv_ref[...]  # fused mu|logvar
        mulv_ref[...] = mulv                                                 # one 64-lane store
        z = mulv[:, :LATENT_DIM] + eps_ref[...] * jnp.exp(0.5 * mulv[:, LATENT_DIM:])
        if needs_mask:
            # Padded rows pick up bmu|blv -> zero their z so the decoder BN stats stay exact.
            row = pl.program_id(0) * TB + jax.lax.broadcasted_iota(jnp.int32, (TB, 1), 0)
            z = jnp.where(row < B, z, 0.0)
        z_bf = z.astype(jnp.bfloat16)
        z_ref[...] = z_bf
        d_pre = jnp.dot(z_bf, dw1_ref[...], preferred_element_type=jnp.float32)
        dstat_ref[...] = tile_stats(d_pre)

    mulv_p, z_p, dec_stats = pl.pallas_call(
        enc_apply_kernel,
        grid=(nbt,),
        in_specs=[
            pl.BlockSpec((TB, HIDDEN_DIM), lambda i: (i, 0)),                # h_pre tile
            pl.BlockSpec((TB, LATENT_DIM), lambda i: (i, 0)),                # eps tile
            pl.BlockSpec((nbt, 2, HIDDEN_DIM), lambda i: (0, 0, 0)),         # enc stats (all tiles)
            pl.BlockSpec((2, HIDDEN_DIM), lambda i: (0, 0)),                 # enc gamma|beta
            pl.BlockSpec((HIDDEN_DIM, 2 * LATENT_DIM), lambda i: (0, 0)),    # wmu|wlv fused
            pl.BlockSpec((1, 2 * LATENT_DIM), lambda i: (0, 0)),             # bmu|blv fused
            pl.BlockSpec((LATENT_DIM, HIDDEN_DIM), lambda i: (0, 0)),        # dw1 (resident)
        ],
        out_specs=(
            pl.BlockSpec((TB, 2 * LATENT_DIM), lambda i: (i, 0)),            # mu|logvar fused
            pl.BlockSpec((TB, LATENT_DIM), lambda i: (i, 0)),                # z (bf16)
            pl.BlockSpec((1, 2, HIDDEN_DIM), lambda i: (i, 0, 0)),           # dec per-tile stats
        ),
        out_shape=(
            jax.ShapeDtypeStruct((B_pad, 2 * LATENT_DIM), jnp.float32),
            jax.ShapeDtypeStruct((B_pad, LATENT_DIM), jnp.bfloat16),
            jax.ShapeDtypeStruct((nbt, 2, HIDDEN_DIM), jnp.float32),
        ),
        compiler_params=_COMPILER_PARAMS,
        cost_estimate=pl.CostEstimate(
            flops=2 * B_pad * HIDDEN_DIM * 3 * LATENT_DIM,
            transcendentals=B_pad * LATENT_DIM,
            bytes_accessed=(B_pad * (HIDDEN_DIM * 4 + LATENT_DIM * 4
                                     + 2 * LATENT_DIM * 4 + LATENT_DIM * 2)
                            + HIDDEN_DIM * 3 * LATENT_DIM * 2
                            + 2 * nbt * 2 * HIDDEN_DIM * 4 + 4 * HIDDEN_DIM * 4),
        ),
    )(h_pre_p, eps_p, enc_stats, enc_gb, wmulv_b, bmulv, dw1_b)

    # ---------------- pass 3: decoder BN+ReLU + fc2 + sigmoid ----------------
    def dec_apply_kernel(z_ref, dstat_ref, dgb_ref, dw1_ref, dw2_ref, db2_ref, xr_ref):
        scale, shift = fold_affine(dstat_ref, dgb_ref)
        d_pre = jnp.dot(z_ref[...], dw1_ref[...], preferred_element_type=jnp.float32)
        hd = jnp.maximum(d_pre * scale + shift, 0.0)                         # BN + ReLU (f32)
        logits = jnp.dot(hd.astype(jnp.bfloat16), dw2_ref[...],
                         preferred_element_type=jnp.float32) + db2_ref[...]
        xr_ref[...] = jax.nn.sigmoid(logits).astype(xr_ref.dtype)

    recon_bytes = jnp.dtype(recon_dtype).itemsize
    xr_p = pl.pallas_call(
        dec_apply_kernel,
        grid=(nbt,),
        in_specs=[
            pl.BlockSpec((TB, LATENT_DIM), lambda i: (i, 0)),                # z tile (bf16)
            pl.BlockSpec((nbt, 2, HIDDEN_DIM), lambda i: (0, 0, 0)),         # dec stats (all tiles)
            pl.BlockSpec((2, HIDDEN_DIM), lambda i: (0, 0)),                 # dec gamma|beta
            pl.BlockSpec((LATENT_DIM, HIDDEN_DIM), lambda i: (0, 0)),        # dw1 (resident)
            pl.BlockSpec((HIDDEN_DIM, INPUT_DIM), lambda i: (0, 0)),         # dw2 (resident)
            pl.BlockSpec((1, INPUT_DIM), lambda i: (0, 0)),                  # db2
        ],
        out_specs=pl.BlockSpec((TB, INPUT_DIM), lambda i: (i, 0)),
        out_shape=jax.ShapeDtypeStruct((B_pad, INPUT_DIM), recon_dtype),
        compiler_params=_COMPILER_PARAMS,
        cost_estimate=pl.CostEstimate(
            flops=2 * B_pad * (LATENT_DIM * HIDDEN_DIM + HIDDEN_DIM * INPUT_DIM),
            transcendentals=B_pad * INPUT_DIM,
            bytes_accessed=(B_pad * (LATENT_DIM * 2 + INPUT_DIM * recon_bytes)
                            + (LATENT_DIM * HIDDEN_DIM + HIDDEN_DIM * INPUT_DIM) * 2
                            + nbt * 2 * HIDDEN_DIM * 4 + 2 * HIDDEN_DIM * 4 + INPUT_DIM * 4),
        ),
    )(z_p, dec_stats, dec_gb, dw1_b, dw2_b, db2_r)

    mu = mulv_p[:B, :LATENT_DIM]
    logvar = mulv_p[:B, LATENT_DIM:]
    return xr_p[:B], mu, logvar


def init_params(key):
    """PyTorch-equivalent parameters; Linear weights stored pre-transposed [in, out]."""
    ks = jax.random.split(key, 5)

    def linear(k, din, dout):
        bound = 1.0 / (din ** 0.5)
        kw, kb = jax.random.split(k)
        w = jax.random.uniform(kw, (din, dout), jnp.float32, -bound, bound)
        b = jax.random.uniform(kb, (dout,), jnp.float32, -bound, bound)
        return w, b

    ew1, eb1 = linear(ks[0], INPUT_DIM, HIDDEN_DIM)
    eg1 = jnp.ones((HIDDEN_DIM,), jnp.float32)      # encoder bn1 gamma
    ebt1 = jnp.zeros((HIDDEN_DIM,), jnp.float32)    # encoder bn1 beta
    wmu, bmu = linear(ks[1], HIDDEN_DIM, LATENT_DIM)
    wlv, blv = linear(ks[2], HIDDEN_DIM, LATENT_DIM)
    dw1, db1 = linear(ks[3], LATENT_DIM, HIDDEN_DIM)
    dg1 = jnp.ones((HIDDEN_DIM,), jnp.float32)      # decoder bn1 gamma
    dbt1 = jnp.zeros((HIDDEN_DIM,), jnp.float32)    # decoder bn1 beta
    dw2, db2 = linear(ks[4], HIDDEN_DIM, INPUT_DIM)
    return (ew1, eb1, eg1, ebt1, wmu, bmu, wlv, blv,
            dw1, db1, dg1, dbt1, dw2, db2)


def _reference(x, eps, params):
    """Pure-JAX mirror of the PyTorch forward (training-mode BatchNorm, biased variance),
    using the same bf16 matmul-input precision as the kernels so the check is tight.
    The pre-BN Linear biases are kept here — the kernels drop them because the BN
    mean subtraction cancels them exactly."""
    (ew1, eb1, eg1, ebt1, wmu, bmu, wlv, blv,
     dw1, db1, dg1, dbt1, dw2, db2) = params
    bf = lambda a: a.astype(jnp.bfloat16)

    def bn_train(h, gamma, beta):
        mean = jnp.mean(h, axis=0, keepdims=True)
        var = jnp.mean((h - mean) ** 2, axis=0, keepdims=True)
        return (h - mean) * jax.lax.rsqrt(var + BN_EPS) * gamma + beta

    h = jnp.dot(bf(x), bf(ew1), preferred_element_type=jnp.float32) + eb1
    h = jnp.maximum(bn_train(h, eg1, ebt1), 0.0)
    mu = jnp.dot(bf(h), bf(wmu), preferred_element_type=jnp.float32) + bmu
    logvar = jnp.dot(bf(h), bf(wlv), preferred_element_type=jnp.float32) + blv
    z = mu + eps * jnp.exp(0.5 * logvar)
    hd = jnp.dot(bf(z), bf(dw1), preferred_element_type=jnp.float32) + db1
    hd = jnp.maximum(bn_train(hd, dg1, dbt1), 0.0)
    xr = jax.nn.sigmoid(jnp.dot(bf(hd), bf(dw2), preferred_element_type=jnp.float32) + db2)
    return xr, mu, logvar


if __name__ == "__main__":
    key = jax.random.PRNGKey(0)
    kx1, ke1, kx2, ke2, kp = jax.random.split(key, 5)
    params = init_params(kp)

    fwd = jax.jit(vae_forward, static_argnames=("batch_tile", "recon_dtype"))

    # Case 1: small batch, default tile -> split into two 8-row tiles (>=2 tiles rule).
    B1 = 16
    x1 = jax.random.uniform(kx1, (B1, INPUT_DIM), jnp.float32)     # MNIST-like pixels
    e1 = jax.random.normal(ke1, (B1, LATENT_DIM), jnp.float32)     # reparam noise
    xr1, mu1, lv1 = jax.block_until_ready(fwd(x1, e1, params))

    # Case 2: batch not a multiple of the tile -> multi-tile grid + masked padded rows.
    B2 = 20
    x2 = jax.random.uniform(kx2, (B2, INPUT_DIM), jnp.float32)
    e2 = jax.random.normal(ke2, (B2, LATENT_DIM), jnp.float32)
    xr2, mu2, lv2 = jax.block_until_ready(fwd(x2, e2, params, batch_tile=8))

    xr1_r, mu1_r, lv1_r = _reference(x1, e1, params)
    xr2_r, mu2_r, lv2_r = _reference(x2, e2, params)

    tol = dict(atol=1e-2, rtol=1e-2)
    assert xr1.shape == (B1, INPUT_DIM) and mu1.shape == (B1, LATENT_DIM) and lv1.shape == (B1, LATENT_DIM)
    assert xr2.shape == (B2, INPUT_DIM) and mu2.shape == (B2, LATENT_DIM) and lv2.shape == (B2, LATENT_DIM)
    assert jnp.allclose(xr1, xr1_r, **tol)
    assert jnp.allclose(mu1, mu1_r, **tol)
    assert jnp.allclose(lv1, lv1_r, **tol)
    assert jnp.allclose(xr2, xr2_r, **tol)
    assert jnp.allclose(mu2, mu2_r, **tol)
    assert jnp.allclose(lv2, lv2_r, **tol)

    print("KERNEL_OK")
</pallas_src>

<mosaic_0001>
module attributes {stable_mosaic.version = 11 : i64} {
  func.func @enc_pre_kernel(%arg0: i32, %arg1: memref<8x784xbf16, #tpu.memory_space<vmem>>, %arg2: memref<784x400xbf16, #tpu.memory_space<vmem>>, %arg3: memref<8x400xf32, #tpu.memory_space<vmem>>, %arg4: memref<1x2x400xf32, #tpu.memory_space<vmem>>) attributes {dimension_semantics = [#tpu.dimension_semantics<parallel>], iteration_bounds = array<i64: 2>, scalar_prefetch = 0 : i64, scratch_operands = 0 : i64, tpu.core_type = #tpu.core_type<tc>, window_params = [{transform_indices = @transform_0, window_bounds = array<i64: 8, 784>}, {pipeline_mode = #tpu.pipeline_mode<synchronous>, transform_indices = @transform_1, window_bounds = array<i64: 784, 400>}, {transform_indices = @transform_2, window_bounds = array<i64: 8, 400>}, {transform_indices = @transform_3, window_bounds = array<i64: 1, 2, 400>}]} {
    %c0 = arith.constant 0 : index
    %c0_0 = arith.constant 0 : index
    %0 = vector.load %arg1[%c0, %c0_0] : memref<8x784xbf16, #tpu.memory_space<vmem>>, vector<8x784xbf16>
    %c0_1 = arith.constant 0 : index
    %c0_2 = arith.constant 0 : index
    %1 = vector.load %arg2[%c0_1, %c0_2] : memref<784x400xbf16, #tpu.memory_space<vmem>>, vector<784x400xbf16>
    %cst = arith.constant dense<0.000000e+00> : vector<8x400xf32>
    %2 = tpu.matmul %0, %1, %cst {dimension_numbers = #tpu.dot_dimension_numbers<[1], [0], [0], [1], [0, 0, 1, 1], [], []>} : vector<8x784xbf16>, vector<784x400xbf16>, vector<8x400xf32> -> vector<8x400xf32>
    %c0_3 = arith.constant 0 : index
    %c0_4 = arith.constant 0 : index
    %3 = vector.load %arg3[%c0_3, %c0_4] : memref<8x400xf32, #tpu.memory_space<vmem>>, vector<8x400xf32>
    tpu.vector_store %arg3[%c0_3, %c0_4], %2 {strides = array<i32>} : memref<8x400xf32, #tpu.memory_space<vmem>>, vector<8x400xf32>,
    %cst_5 = arith.constant dense<0.000000e+00> : vector<400xf32>
    %4 = vector.multi_reduction <add>, %2, %cst_5 [0] : vector<8x400xf32> to vector<400xf32>
    %5 = vector.shape_cast %4 : vector<400xf32> to vector<1x400xf32>
    %6 = arith.mulf %2, %2 : vector<8x400xf32>
    %cst_6 = arith.constant dense<0.000000e+00> : vector<400xf32>
    %7 = vector.multi_reduction <add>, %6, %cst_6 [0] : vector<8x400xf32> to vector<400xf32>
    %8 = vector.shape_cast %7 : vector<400xf32> to vector<1x400xf32>
    %9 = tpu.concatenate %5, %8 in 0 : vector<1x400xf32>, vector<1x400xf32> -> vector<2x400xf32>
    %10 = vector.shape_cast %9 : vector<2x400xf32> to vector<1x2x400xf32>
    %c0_7 = arith.constant 0 : index
    %c0_8 = arith.constant 0 : index
    %c0_9 = arith.constant 0 : index
    %11 = vector.load %arg4[%c0_7, %c0_8, %c0_9] : memref<1x2x400xf32, #tpu.memory_space<vmem>>, vector<1x2x400xf32>
    tpu.vector_store %arg4[%c0_7, %c0_8, %c0_9], %10 {strides = array<i32>} : memref<1x2x400xf32, #tpu.memory_space<vmem>>, vector<1x2x400xf32>,
    return
  }
  func.func @transform_0(%arg0: i32) -> (i32, i32) {
    %c0_i32 = arith.constant 0 : i32
    %c0_i32_0 = arith.constant 0 : i32
    return %arg0, %c0_i32 : i32, i32
  }
  func.func @transform_1(%arg0: i32) -> (i32, i32) {
    %c0_i32 = arith.constant 0 : i32
    %c0_i32_0 = arith.constant 0 : i32
    %c0_i32_1 = arith.constant 0 : i32
    return %c0_i32, %c0_i32_0 : i32, i32
  }
  func.func @transform_2(%arg0: i32) -> (i32, i32) {
    %c0_i32 = arith.constant 0 : i32
    %c0_i32_0 = arith.constant 0 : i32
    return %arg0, %c0_i32 : i32, i32
  }
  func.func @transform_3(%arg0: i32) -> (i32, i32, i32) {
    %c0_i32 = arith.constant 0 : i32
    %c0_i32_0 = arith.constant 0 : i32
    %c0_i32_1 = arith.constant 0 : i32
    return %arg0, %c0_i32, %c0_i32_0 : i32, i32, i32
  }
}

module attributes {stable_mosaic.version = 11 : i64} {
  func.func @enc_apply_kernel(%arg0: i32, %arg1: memref<8x400xf32, #tpu.memory_space<vmem>>, %arg2: memref<8x32xf32, #tpu.memory_space<vmem>>, %arg3: memref<2x2x400xf32, #tpu.memory_space<vmem>>, %arg4: memref<2x400xf32, #tpu.memory_space<vmem>>, %arg5: memref<400x64xbf16, #tpu.memory_space<vmem>>, %arg6: memref<1x64xf32, #tpu.memory_space<vmem>>, %arg7: memref<32x400xbf16, #tpu.memory_space<vmem>>, %arg8: memref<8x64xf32, #tpu.memory_space<vmem>>, %arg9: memref<8x32xbf16, #tpu.memory_space<vmem>>, %arg10: memref<1x2x400xf32, #tpu.memory_space<vmem>>) attributes {dimension_semantics = [#tpu.dimension_semantics<parallel>], iteration_bounds = array<i64: 2>, scalar_prefetch = 0 : i64, scratch_operands = 0 : i64, tpu.core_type = #tpu.core_type<tc>, window_params = [{transform_indices = @transform_0, window_bounds = array<i64: 8, 400>}, {transform_indices = @transform_1, window_bounds = array<i64: 8, 32>}, {pipeline_mode = #tpu.pipeline_mode<synchronous>, transform_indices = @transform_2, window_bounds = array<i64: 2, 2, 400>}, {pipeline_mode = #tpu.pipeline_mode<synchronous>, transform_indices = @transform_3, window_bounds = array<i64: 2, 400>}, {pipeline_mode = #tpu.pipeline_mode<synchronous>, transform_indices = @transform_4, window_bounds = array<i64: 400, 64>}, {pipeline_mode = #tpu.pipeline_mode<synchronous>, transform_indices = @transform_5, window_bounds = array<i64: 1, 64>}, {pipeline_mode = #tpu.pipeline_mode<synchronous>, transform_indices = @transform_6, window_bounds = array<i64: 32, 400>}, {transform_indices = @transform_7, window_bounds = array<i64: 8, 64>}, {transform_indices = @transform_8, window_bounds = array<i64: 8, 32>}, {transform_indices = @transform_9, window_bounds = array<i64: 1, 2, 400>}]} {
    %c0 = arith.constant 0 : index
    %c0_0 = arith.constant 0 : index
    %c0_1 = arith.constant 0 : index
    %0 = vector.load %arg3[%c0, %c0_0, %c0_1] : memref<2x2x400xf32, #tpu.memory_space<vmem>>, vector<1x2x400xf32>
    %1 = vector.shape_cast %0 : vector<1x2x400xf32> to vector<2x400xf32>
    %c1 = arith.constant 1 : index
    %c0_2 = arith.constant 0 : index
    %c0_3 = arith.constant 0 : index
    %2 = vector.load %arg3[%c1, %c0_2, %c0_3] : memref<2x2x400xf32, #tpu.memory_space<vmem>>, vector<1x2x400xf32>
    %3 = vector.shape_cast %2 : vector<1x2x400xf32> to vector<2x400xf32>
    %4 = arith.addf %1, %3 : vector<2x400xf32>
    %5 = vector.extract_strided_slice %4 {offsets = [0, 0], sizes = [1, 400], strides = [1, 1]} : vector<2x400xf32> to vector<1x400xf32>
    %cst = arith.constant 6.250000e-02 : f32
    %6 = vector.broadcast %cst : f32 to vector<1x400xf32>
    %7 = arith.mulf %5, %6 : vector<1x400xf32>
    %8 = vector.extract_strided_slice %4 {offsets = [1, 0], sizes = [1, 400], strides = [1, 1]} : vector<2x400xf32> to vector<1x400xf32>
    %cst_4 = arith.constant 6.250000e-02 : f32
    %9 = vector.broadcast %cst_4 : f32 to vector<1x400xf32>
    %10 = arith.mulf %8, %9 : vector<1x400xf32>
    %11 = arith.mulf %7, %7 : vector<1x400xf32>
    %12 = arith.subf %10, %11 : vector<1x400xf32>
    %cst_5 = arith.constant 0.000000e+00 : f32
    %13 = vector.broadcast %cst_5 : f32 to vector<1x400xf32>
    %14 = arith.maximumf %12, %13 : vector<1x400xf32>
    %c0_6 = arith.constant 0 : index
    %c0_7 = arith.constant 0 : index
    %15 = vector.load %arg4[%c0_6, %c0_7] : memref<2x400xf32, #tpu.memory_space<vmem>>, vector<1x400xf32>
    %cst_8 = arith.constant 9.99999974E-6 : f32
    %16 = vector.broadcast %cst_8 : f32 to vector<1x400xf32>
    %17 = arith.addf %14, %16 : vector<1x400xf32>
    %18 = math.rsqrt %17 : vector<1x400xf32>
    %19 = arith.mulf %15, %18 : vector<1x400xf32>
    %c1_9 = arith.constant 1 : index
    %c0_10 = arith.constant 0 : index
    %20 = vector.load %arg4[%c1_9, %c0_10] : memref<2x400xf32, #tpu.memory_space<vmem>>, vector<1x400xf32>
    %21 = arith.mulf %7, %19 : vector<1x400xf32>
    %22 = arith.subf %20, %21 : vector<1x400xf32>
    %c0_11 = arith.constant 0 : index
    %c0_12 = arith.constant 0 : index
    %23 = vector.load %arg1[%c0_11, %c0_12] : memref<8x400xf32, #tpu.memory_space<vmem>>, vector<8x400xf32>
    %24 = vector.broadcast %19 : vector<1x400xf32> to vector<8x400xf32>
    %25 = arith.mulf %23, %24 : vector<8x400xf32>
    %26 = vector.broadcast %22 : vector<1x400xf32> to vector<8x400xf32>
    %27 = arith.addf %25, %26 : vector<8x400xf32>
    %cst_13 = arith.constant 0.000000e+00 : f32
    %28 = vector.broadcast %cst_13 : f32 to vector<8x400xf32>
    %29 = arith.maximumf %27, %28 : vector<8x400xf32>
    %30 = arith.truncf %29 : vector<8x400xf32> to vector<8x400xbf16>
    %c0_14 = arith.constant 0 : index
    %c0_15 = arith.constant 0 : index
    %31 = vector.load %arg5[%c0_14, %c0_15] : memref<400x64xbf16, #tpu.memory_space<vmem>>, vector<400x64xbf16>
    %cst_16 = arith.constant dense<0.000000e+00> : vector<8x64xf32>
    %32 = tpu.matmul %30, %31, %cst_16 {dimension_numbers = #tpu.dot_dimension_numbers<[1], [0], [0], [1], [0, 0, 1, 1], [], []>} : vector<8x400xbf16>, vector<400x64xbf16>, vector<8x64xf32> -> vector<8x64xf32>
    %c0_17 = arith.constant 0 : index
    %c0_18 = arith.constant 0 : index
    %33 = vector.load %arg6[%c0_17, %c0_18] : memref<1x64xf32, #tpu.memory_space<vmem>>, vector<1x64xf32>
    %34 = vector.broadcast %33 : vector<1x64xf32> to vector<8x64xf32>
    %35 = arith.addf %32, %34 : vector<8x64xf32>
    %c0_19 = arith.constant 0 : index
    %c0_20 = arith.constant 0 : index
    %36 = vector.load %arg8[%c0_19, %c0_20] : memref<8x64xf32, #tpu.memory_space<vmem>>, vector<8x64xf32>
    tpu.vector_store %arg8[%c0_19, %c0_20], %35 {strides = array<i32>} : memref<8x64xf32, #tpu.memory_space<vmem>>, vector<8x64xf32>,
    %37 = vector.extract_strided_slice %35 {offsets = [0, 0], sizes = [8, 32], strides = [1, 1]} : vector<8x64xf32> to vector<8x32xf32>
    %c0_21 = arith.constant 0 : index
    %c0_22 = arith.constant 0 : index
    %38 = vector.load %arg2[%c0_21, %c0_22] : memref<8x32xf32, #tpu.memory_space<vmem>>, vector<8x32xf32>
    %39 = vector.extract_strided_slice %35 {offsets = [0, 32], sizes = [8, 32], strides = [1, 1]} : vector<8x64xf32> to vector<8x32xf32>
    %cst_23 = arith.constant 5.000000e-01 : f32
    %40 = vector.broadcast %cst_23 : f32 to vector<8x32xf32>
    %41 = arith.mulf %40, %39 : vector<8x32xf32>
    %42 = math.exp %41 : vector<8x32xf32>
    %43 = arith.mulf %38, %42 : vector<8x32xf32>
    %44 = arith.addf %37, %43 : vector<8x32xf32>
    %45 = arith.truncf %44 : vector<8x32xf32> to vector<8x32xbf16>
    %c0_24 = arith.constant 0 : index
    %c0_25 = arith.constant 0 : index
    %46 = vector.load %arg9[%c0_24, %c0_25] : memref<8x32xbf16, #tpu.memory_space<vmem>>, vector<8x32xbf16>
    tpu.vector_store %arg9[%c0_24, %c0_25], %45 {strides = array<i32>} : memref<8x32xbf16, #tpu.memory_space<vmem>>, vector<8x32xbf16>,
    %c0_26 = arith.constant 0 : index
    %c0_27 = arith.constant 0 : index
    %47 = vector.load %arg7[%c0_26, %c0_27] : memref<32x400xbf16, #tpu.memory_space<vmem>>, vector<32x400xbf16>
    %cst_28 = arith.constant dense<0.000000e+00> : vector<8x400xf32>
    %48 = tpu.matmul %45, %47, %cst_28 {dimension_numbers = #tpu.dot_dimension_numbers<[1], [0], [0], [1], [0, 0, 1, 1], [], []>} : vector<8x32xbf16>, vector<32x400xbf16>, vector<8x400xf32> -> vector<8x400xf32>
    %cst_29 = arith.constant dense<0.000000e+00> : vector<400xf32>
    %49 = vector.multi_reduction <add>, %48, %cst_29 [0] : vector<8x400xf32> to vector<400xf32>
    %50 = vector.shape_cast %49 : vector<400xf32> to vector<1x400xf32>
    %51 = arith.mulf %48, %48 : vector<8x400xf32>
    %cst_30 = arith.constant dense<0.000000e+00> : vector<400xf32>
    %52 = vector.multi_reduction <add>, %51, %cst_30 [0] : vector<8x400xf32> to vector<400xf32>
    %53 = vector.shape_cast %52 : vector<400xf32> to vector<1x400xf32>
    %54 = tpu.concatenate %50, %53 in 0 : vector<1x400xf32>, vector<1x400xf32> -> vector<2x400xf32>
    %55 = vector.shape_cast %54 : vector<2x400xf32> to vector<1x2x400xf32>
    %c0_31 = arith.constant 0 : index
    %c0_32 = arith.constant 0 : index
    %c0_33 = arith.constant 0 : index
    %56 = vector.load %arg10[%c0_31, %c0_32, %c0_33] : memref<1x2x400xf32, #tpu.memory_space<vmem>>, vector<1x2x400xf32>
    tpu.vector_store %arg10[%c0_31, %c0_32, %c0_33], %55 {strides = array<i32>} : memref<1x2x400xf32, #tpu.memory_space<vmem>>, vector<1x2x400xf32>,
    return
  }
  func.func @transform_0(%arg0: i32) -> (i32, i32) {
    %c0_i32 = arith.constant 0 : i32
    %c0_i32_0 = arith.constant 0 : i32
    return %arg0, %c0_i32 : i32, i32
  }
  func.func @transform_1(%arg0: i32) -> (i32, i32) {
    %c0_i32 = arith.constant 0 : i32
    %c0_i32_0 = arith.constant 0 : i32
    return %arg0, %c0_i32 : i32, i32
  }
  func.func @transform_2(%arg0: i32) -> (i32, i32, i32) {
    %c0_i32 = arith.constant 0 : i32
    %c0_i32_0 = arith.constant 0 : i32
    %c0_i32_1 = arith.constant 0 : i32
    %c0_i32_2 = arith.constant 0 : i32
    return %c0_i32, %c0_i32_0, %c0_i32_1 : i32, i32, i32
  }
  func.func @transform_3(%arg0: i32) -> (i32, i32) {
    %c0_i32 = arith.constant 0 : i32
    %c0_i32_0 = arith.constant 0 : i32
    %c0_i32_1 = arith.constant 0 : i32
    return %c0_i32, %c0_i32_0 : i32, i32
  }
  func.func @transform_4(%arg0: i32) -> (i32, i32) {
    %c0_i32 = arith.constant 0 : i32
    %c0_i32_0 = arith.constant 0 : i32
    %c0_i32_1 = arith.constant 0 : i32
    return %c0_i32, %c0_i32_0 : i32, i32
  }
  func.func @transform_5(%arg0: i32) -> (i32, i32) {
    %c0_i32 = arith.constant 0 : i32
    %c0_i32_0 = arith.constant 0 : i32
    %c0_i32_1 = arith.constant 0 : i32
    return %c0_i32, %c0_i32_0 : i32, i32
  }
  func.func @transform_6(%arg0: i32) -> (i32, i32) {
    %c0_i32 = arith.constant 0 : i32
    %c0_i32_0 = arith.constant 0 : i32
    %c0_i32_1 = arith.constant 0 : i32
    return %c0_i32, %c0_i32_0 : i32, i32
  }
  func.func @transform_7(%arg0: i32) -> (i32, i32) {
    %c0_i32 = arith.constant 0 : i32
    %c0_i32_0 = arith.constant 0 : i32
    return %arg0, %c0_i32 : i32, i32
  }
  func.func @transform_8(%arg0: i32) -> (i32, i32) {
    %c0_i32 = arith.constant 0 : i32
    %c0_i32_0 = arith.constant 0 : i32
    return %arg0, %c0_i32 : i32, i32
  }
  func.func @transform_9(%arg0: i32) -> (i32, i32, i32) {
    %c0_i32 = arith.constant 0 : i32
    %c0_i32_0 = arith.constant 0 : i32
    %c0_i32_1 = arith.constant 0 : i32
    return %arg0, %c0_i32, %c0_i32_0 : i32, i32, i32
  }
}

module attributes {stable_mosaic.version = 11 : i64} {
  func.func @dec_apply_kernel(%arg0: i32, %arg1: memref<8x32xbf16, #tpu.memory_space<vmem>>, %arg2: memref<2x2x400xf32, #tpu.memory_space<vmem>>, %arg3: memref<2x400xf32, #tpu.memory_space<vmem>>, %arg4: memref<32x400xbf16, #tpu.memory_space<vmem>>, %arg5: memref<400x784xbf16, #tpu.memory_space<vmem>>, %arg6: memref<1x784xf32, #tpu.memory_space<vmem>>, %arg7: memref<8x784xf32, #tpu.memory_space<vmem>>) attributes {dimension_semantics = [#tpu.dimension_semantics<parallel>], iteration_bounds = array<i64: 2>, scalar_prefetch = 0 : i64, scratch_operands = 0 : i64, tpu.core_type = #tpu.core_type<tc>, window_params = [{transform_indices = @transform_0, window_bounds = array<i64: 8, 32>}, {pipeline_mode = #tpu.pipeline_mode<synchronous>, transform_indices = @transform_1, window_bounds = array<i64: 2, 2, 400>}, {pipeline_mode = #tpu.pipeline_mode<synchronous>, transform_indices = @transform_2, window_bounds = array<i64: 2, 400>}, {pipeline_mode = #tpu.pipeline_mode<synchronous>, transform_indices = @transform_3, window_bounds = array<i64: 32, 400>}, {pipeline_mode = #tpu.pipeline_mode<synchronous>, transform_indices = @transform_4, window_bounds = array<i64: 400, 784>}, {pipeline_mode = #tpu.pipeline_mode<synchronous>, transform_indices = @transform_5, window_bounds = array<i64: 1, 784>}, {transform_indices = @transform_6, window_bounds = array<i64: 8, 784>}]} {
    %c0 = arith.constant 0 : index
    %c0_0 = arith.constant 0 : index
    %c0_1 = arith.constant 0 : index
    %0 = vector.load %arg2[%c0, %c0_0, %c0_1] : memref<2x2x400xf32, #tpu.memory_space<vmem>>, vector<1x2x400xf32>
    %1 = vector.shape_cast %0 : vector<1x2x400xf32> to vector<2x400xf32>
    %c1 = arith.constant 1 : index
    %c0_2 = arith.constant 0 : index
    %c0_3 = arith.constant 0 : index
    %2 = vector.load %arg2[%c1, %c0_2, %c0_3] : memref<2x2x400xf32, #tpu.memory_space<vmem>>, vector<1x2x400xf32>
    %3 = vector.shape_cast %2 : vector<1x2x400xf32> to vector<2x400xf32>
    %4 = arith.addf %1, %3 : vector<2x400xf32>
    %5 = vector.extract_strided_slice %4 {offsets = [0, 0], sizes = [1, 400], strides = [1, 1]} : vector<2x400xf32> to vector<1x400xf32>
    %cst = arith.constant 6.250000e-02 : f32
    %6 = vector.broadcast %cst : f32 to vector<1x400xf32>
    %7 = arith.mulf %5, %6 : vector<1x400xf32>
    %8 = vector.extract_strided_slice %4 {offsets = [1, 0], sizes = [1, 400], strides = [1, 1]} : vector<2x400xf32> to vector<1x400xf32>
    %cst_4 = arith.constant 6.250000e-02 : f32
    %9 = vector.broadcast %cst_4 : f32 to vector<1x400xf32>
    %10 = arith.mulf %8, %9 : vector<1x400xf32>
    %11 = arith.mulf %7, %7 : vector<1x400xf32>
    %12 = arith.subf %10, %11 : vector<1x400xf32>
    %cst_5 = arith.constant 0.000000e+00 : f32
    %13 = vector.broadcast %cst_5 : f32 to vector<1x400xf32>
    %14 = arith.maximumf %12, %13 : vector<1x400xf32>
    %c0_6 = arith.constant 0 : index
    %c0_7 = arith.constant 0 : index
    %15 = vector.load %arg3[%c0_6, %c0_7] : memref<2x400xf32, #tpu.memory_space<vmem>>, vector<1x400xf32>
    %cst_8 = arith.constant 9.99999974E-6 : f32
    %16 = vector.broadcast %cst_8 : f32 to vector<1x400xf32>
    %17 = arith.addf %14, %16 : vector<1x400xf32>
    %18 = math.rsqrt %17 : vector<1x400xf32>
    %19 = arith.mulf %15, %18 : vector<1x400xf32>
    %c1_9 = arith.constant 1 : index
    %c0_10 = arith.constant 0 : index
    %20 = vector.load %arg3[%c1_9, %c0_10] : memref<2x400xf32, #tpu.memory_space<vmem>>, vector<1x400xf32>
    %21 = arith.mulf %7, %19 : vector<1x400xf32>
    %22 = arith.subf %20, %21 : vector<1x400xf32>
    %c0_11 = arith.constant 0 : index
    %c0_12 = arith.constant 0 : index
    %23 = vector.load %arg1[%c0_11, %c0_12] : memref<8x32xbf16, #tpu.memory_space<vmem>>, vector<8x32xbf16>
    %c0_13 = arith.constant 0 : index
    %c0_14 = arith.constant 0 : index
    %24 = vector.load %arg4[%c0_13, %c0_14] : memref<32x400xbf16, #tpu.memory_space<vmem>>, vector<32x400xbf16>
    %cst_15 = arith.constant dense<0.000000e+00> : vector<8x400xf32>
    %25 = tpu.matmul %23, %24, %cst_15 {dimension_numbers = #tpu.dot_dimension_numbers<[1], [0], [0], [1], [0, 0, 1, 1], [], []>} : vector<8x32xbf16>, vector<32x400xbf16>, vector<8x400xf32> -> vector<8x400xf32>
    %26 = vector.broadcast %19 : vector<1x400xf32> to vector<8x400xf32>
    %27 = arith.mulf %25, %26 : vector<8x400xf32>
    %28 = vector.broadcast %22 : vector<1x400xf32> to vector<8x400xf32>
    %29 = arith.addf %27, %28 : vector<8x400xf32>
    %cst_16 = arith.constant 0.000000e+00 : f32
    %30 = vector.broadcast %cst_16 : f32 to vector<8x400xf32>
    %31 = arith.maximumf %29, %30 : vector<8x400xf32>
    %32 = arith.truncf %31 : vector<8x400xf32> to vector<8x400xbf16>
    %c0_17 = arith.constant 0 : index
    %c0_18 = arith.constant 0 : index
    %33 = vector.load %arg5[%c0_17, %c0_18] : memref<400x784xbf16, #tpu.memory_space<vmem>>, vector<400x784xbf16>
    %cst_19 = arith.constant dense<0.000000e+00> : vector<8x784xf32>
    %34 = tpu.matmul %32, %33, %cst_19 {dimension_numbers = #tpu.dot_dimension_numbers<[1], [0], [0], [1], [0, 0, 1, 1], [], []>} : vector<8x400xbf16>, vector<400x784xbf16>, vector<8x784xf32> -> vector<8x784xf32>
    %c0_20 = arith.constant 0 : index
    %c0_21 = arith.constant 0 : index
    %35 = vector.load %arg6[%c0_20, %c0_21] : memref<1x784xf32, #tpu.memory_space<vmem>>, vector<1x784xf32>
    %36 = vector.broadcast %35 : vector<1x784xf32> to vector<8x784xf32>
    %37 = arith.addf %34, %36 : vector<8x784xf32>
    %38 = arith.negf %37 : vector<8x784xf32>
    %39 = math.exp %38 : vector<8x784xf32>
    %cst_22 = arith.constant 1.000000e+00 : f32
    %40 = vector.broadcast %cst_22 : f32 to vector<8x784xf32>
    %41 = arith.addf %40, %39 : vector<8x784xf32>
    %42 = arith.divf %40, %41 : vector<8x784xf32>
    %c0_23 = arith.constant 0 : index
    %c0_24 = arith.constant 0 : index
    %43 = vector.load %arg7[%c0_23, %c0_24] : memref<8x784xf32, #tpu.memory_space<vmem>>, vector<8x784xf32>
    tpu.vector_store %arg7[%c0_23, %c0_24], %42 {strides = array<i32>} : memref<8x784xf32, #tpu.memory_space<vmem>>, vector<8x784xf32>,
    return
  }
  func.func @transform_0(%arg0: i32) -> (i32, i32) {
    %c0_i32 = arith.constant 0 : i32
    %c0_i32_0 = arith.constant 0 : i32
    return %arg0, %c0_i32 : i32, i32
  }
  func.func @transform_1(%arg0: i32) -> (i32, i32, i32) {
    %c0_i32 = arith.constant 0 : i32
    %c0_i32_0 = arith.constant 0 : i32
    %c0_i32_1 = arith.constant 0 : i32
    %c0_i32_2 = arith.constant 0 : i32
    return %c0_i32, %c0_i32_0, %c0_i32_1 : i32, i32, i32
  }
  func.func @transform_2(%arg0: i32) -> (i32, i32) {
    %c0_i32 = arith.constant 0 : i32
    %c0_i32_0 = arith.constant 0 : i32
    %c0_i32_1 = arith.constant 0 : i32
    return %c0_i32, %c0_i32_0 : i32, i32
  }
  func.func @transform_3(%arg0: i32) -> (i32, i32) {
    %c0_i32 = arith.constant 0 : i32
    %c0_i32_0 = arith.constant 0 : i32
    %c0_i32_1 = arith.constant 0 : i32
    return %c0_i32, %c0_i32_0 : i32, i32
  }
  func.func @transform_4(%arg0: i32) -> (i32, i32) {
    %c0_i32 = arith.constant 0 : i32
    %c0_i32_0 = arith.constant 0 : i32
    %c0_i32_1 = arith.constant 0 : i32
    return %c0_i32, %c0_i32_0 : i32, i32
  }
  func.func @transform_5(%arg0: i32) -> (i32, i32) {
    %c0_i32 = arith.constant 0 : i32
    %c0_i32_0 = arith.constant 0 : i32
    %c0_i32_1 = arith.constant 0 : i32
    return %c0_i32, %c0_i32_0 : i32, i32
  }
  func.func @transform_6(%arg0: i32) -> (i32, i32) {
    %c0_i32 = arith.constant 0 : i32
    %c0_i32_0 = arith.constant 0 : i32
    return %arg0, %c0_i32 : i32, i32
  }
}

</mosaic_0001>

<llo_original>
// kernel: vae_forward.3
$region0: #{vae_forward.3}
  #allocation0 [shape = 'u32[]', space=smem, size = 0x4, offset = 0x4, fixed_abs, tag = 'smem constant byte address 0x4 - core index']
  #allocation1 [shape = 'u32[72,128]{1,0:T(1,128)}', space=vmem, size = 0x9000, scoped, tag = 'internal scratch']
  %s0 = inlined_call_operand.vmem [shape: bf16[16,784], index: 0, kind: input, shape index: {}]
  %s1 = inlined_call_operand.vmem [shape: bf16[784,400], index: 1, kind: input, shape index: {}]
  %s2 = inlined_call_operand.vmem [shape: f32[16,400], index: 2, kind: output, shape index: {0}]
  %s3 = inlined_call_operand.vmem [shape: f32[2,2,400], index: 3, kind: output, shape index: {1}]
  %4 = xla_tuple %s2, %s3
  %s5 = sld [smem:[#allocation0]]
  $region49: #{vae_forward.3} parent=0
    _
  %s7 = ssub.s32 1, %s5
  %s8 = scalar_select 0, %s7, %s5
  loop: start=0, step=1, limit=4
  $region2: #{vae_forward.3} parent=0 // loop_pre_header
    _
  $region3: #{vae_forward.3} parent=0 // loop_header
    %s10 = sphi 0, %s14
    %p11 = scmp.ge.s32.totalorder %s10, 4
    %s20 = sphi 0, %s22
    %s23 = sphi 0, %s20
    %s24 = sphi 0, %s23
    %s40 = sphi 0, %s24
    %s44 = sphi 0, %s44
    %s46 = sphi 0, %s44
    %s47 = sphi 0, %s46
    %s61 = sphi 0, %s47
    %s67 = sphi 0, %s69
    %s70 = sphi 0, %s67
    %s71 = sphi 0, %s70
    %s87 = sphi 0, %s71
    %s93 = sphi 0, %s95
    %s96 = sphi 0, %s93
    %s97 = sphi 0, %s96
    %s113 = sphi 0, %s97
  $region4: #{vae_forward.3} parent=0 // loop_header_branch
    %13 = sbr.rel (%p11) target = $region8
  $region5: #{vae_forward.3} parent=0 // loop_body
    %s15 = ssub.s32 %s10, 1
    %s16 = ssub.s32 %s10, 2
    %s17 = sadd.s32 %s10, 1
    %s18 = ssub.s32 %s10, %s17
    %p19 = scmp.eq.s32.totalorder %s18, 0
    %s21 = sadd.s32 %s20, 1
    %s22 = scalar_select %p19, %s20, %s21
    %p25 = pneg %p19
    %p26 = scmp.eq.s32.totalorder %s10, 1
    %p27 = por %p25, %p26
    %p28 = scmp.ne.s32.totalorder %s20, %s23
    %p29 = scmp.eq.s32.totalorder %s10, 0
    %p30 = por %p28, %p29
    %p31 = scmp.ne.s32.totalorder %s20, %s23
    %p32 = scmp.eq.s32.totalorder %s15, 1
    %p33 = por %p31, %p32
    %p34 = scmp.ne.s32.totalorder %s23, %s24
    %p35 = scmp.eq.s32.totalorder %s15, 0
    %p36 = por %p34, %p35
    %p37 = scmp.ne.s32.totalorder %s23, %s24
    %p38 = scmp.eq.s32.totalorder %s16, 1
    %p39 = por %p37, %p38
    %p41 = scmp.ne.s32.totalorder %s24, %s40
    %p42 = scmp.eq.s32.totalorder %s16, 0
    %p43 = por %p41, %p42
    %s45 = sadd.s32 %s44, 1
    %p48 = scmp.eq.s32.totalorder %s10, 1
    %p49 = scmp.ne.s32.totalorder %s44, %s46
    %p50 = scmp.eq.s32.totalorder %s10, 0
    %p51 = por %p49, %p50
    %p52 = scmp.ne.s32.totalorder %s44, %s46
    %p53 = scmp.eq.s32.totalorder %s15, 1
    %p54 = por %p52, %p53
    %p55 = scmp.ne.s32.totalorder %s46, %s47
    %p56 = scmp.eq.s32.totalorder %s15, 0
    %p57 = por %p55, %p56
    %p58 = scmp.ne.s32.totalorder %s46, %s47
    %p59 = scmp.eq.s32.totalorder %s16, 1
    %p60 = por %p58, %p59
    %p62 = scmp.ne.s32.totalorder %s47, %s61
    %p63 = scmp.eq.s32.totalorder %s16, 0
    %p64 = por %p62, %p63
    %s65 = ssub.s32 %s10, %s17
    %p66 = scmp.eq.s32.totalorder %s65, 0
    %s68 = sadd.s32 %s67, 1
    %s69 = scalar_select %p66, %s67, %s68
    %p72 = pneg %p66
    %p73 = scmp.eq.s32.totalorder %s10, 1
    %p74 = por %p72, %p73
    %p75 = scmp.ne.s32.totalorder %s67, %s70
    %p76 = scmp.eq.s32.totalorder %s10, 0
    %p77 = por %p75, %p76
    %p78 = scmp.ne.s32.totalorder %s67, %s70
    %p79 = scmp.eq.s32.totalorder %s15, 1
    %p80 = por %p78, %p79
    %p81 = scmp.ne.s32.totalorder %s70, %s71
    %p82 = scmp.eq.s32.totalorder %s15, 0
    %p83 = por %p81, %p82
    %p84 = scmp.ne.s32.totalorder %s70, %s71
    %p85 = scmp.eq.s32.totalorder %s16, 1
    %p86 = por %p84, %p85
    %p88 = scmp.ne.s32.totalorder %s71, %s87
    %p89 = scmp.eq.s32.totalorder %s16, 0
    %p90 = por %p88, %p89
    %s91 = ssub.s32 %s10, %s17
    %p92 = scmp.eq.s32.totalorder %s91, 0
    %s94 = sadd.s32 %s93, 1
    %s95 = scalar_select %p92, %s93, %s94
    %p98 = pneg %p92
    %p99 = scmp.eq.s32.totalorder %s10, 1
    %p100 = por %p98, %p99
    %p101 = scmp.ne.s32.totalorder %s93, %s96
    %p102 = scmp.eq.s32.totalorder %s10, 0
    %p103 = por %p101, %p102
    %p104 = scmp.ne.s32.totalorder %s93, %s96
    %p105 = scmp.eq.s32.totalorder %s15, 1
    %p106 = por %p104, %p105
    %p107 = scmp.ne.s32.totalorder %s96, %s97
    %p108 = scmp.eq.s32.totalorder %s15, 0
    %p109 = por %p107, %p108
    %p110 = scmp.ne.s32.totalorder %s96, %s97
    %p111 = scmp.eq.s32.totalorder %s16, 1
    %p112 = por %p110, %p111
    %p114 = scmp.ne.s32.totalorder %s97, %s113
    %p115 = scmp.eq.s32.totalorder %s16, 0
    %p116 = por %p114, %p115
    %p117 = scmp.le.s32.totalorder 1, %s10
    %p118 = scmp.lt.s32.totalorder %s10, 3
    %p119 = pnand %p117, %p118
    %p120 = pneg %p119
    // Predicated region
    $region9: #{vae_forward.3} parent=5 // pred_check
      _
    $region10: #{vae_forward.3} parent=5 // pred_check_branch
      %122 = sbr.rel (%p119) target = $region12
    $region11: #{vae_forward.3} parent=5 // pred_region
      %s123 = ssub.s32 %s10, 1
      // Predicated region
      $region13: #{vae_forward.3} parent=11 // pred_check
        %p124 = pneg %p57
      $region14: #{vae_forward.3} parent=11 // pred_check_branch
        %126 = sbr.rel (%p124) target = $region16
      $region15: #{vae_forward.3} parent=11 // pred_region
        _
      $region16: #{vae_forward.3} parent=11 // pred_fallthru
        _
    $region12: #{vae_forward.3} parent=5 // pred_fallthru
      _
    %p127 = scmp.lt.s32.totalorder %s10, 2
    // Predicated region
    $region17: #{vae_forward.3} parent=5 // pred_check
      %p128 = pneg %p127
    $region18: #{vae_forward.3} parent=5 // pred_check_branch
      %130 = sbr.rel (%p128) target = $region20
    $region19: #{vae_forward.3} parent=5 // pred_region
      // Predicated region
      $region21: #{vae_forward.3} parent=19 // pred_check
        %p131 = pneg %p30
      $region22: #{vae_forward.3} parent=19 // pred_check_branch
        %133 = sbr.rel (%p131) target = $region24
      $region23: #{vae_forward.3} parent=19 // pred_region
        %p134 = scmp.lt.s32.totalorder %s10, 1
        %s135 = scalar_select %p134, %s10, 1
        %s136 = smul.addr %s135, 7
        %s137 = smul.addr %s136, 4
        %s138 = scalar_lea.vmem %s0, %s137
      $region24: #{vae_forward.3} parent=19 // pred_fallthru
        _
    $region20: #{vae_forward.3} parent=5 // pred_fallthru
      _
    %p139 = scmp.le.s32.totalorder 1, %s10
    %p140 = scmp.lt.s32.totalorder %s10, 3
    %p141 = pnand %p139, %p140
    %p142 = pneg %p141
    // Predicated region
    $region25: #{vae_forward.3} parent=5 // pred_check
      _
    $region26: #{vae_forward.3} parent=5 // pred_check_branch
      %144 = sbr.rel (%p141) target = $region28
    $region27: #{vae_forward.3} parent=5 // pred_region
      %s145 = ssub.s32 %s10, 1
      %p146 = scmp.lt.s32.totalorder %s15, 1
      %s147 = scalar_select %p146, %s15, 1
      %s148 = smul.addr %s147, 7
      %s149 = smul.addr %s148, 4
      %s150 = scalar_lea.vmem %s0, %s149
      %p151 = pneg %p36
      %p152 = pneg %p33
      %p153 = pneg %p57
      %p154 = pneg %p54
      %p155 = pneg %p83
      %p156 = pneg %p80
      %p157 = scmp.lt.s32.totalorder %s15, 1
      %s158 = scalar_select %p157, %s15, 1
      %s159 = smul.addr %s158, 4
      %s160 = smul.addr %s159, 8
      %s161 = scalar_lea.vmem %s2, %s160
      %p162 = pneg %p109
      %p163 = pneg %p106
      %p164 = scmp.lt.s32.totalorder %s15, 1
      %s165 = scalar_select %p164, %s15, 1
      %s166 = smul.addr %s165, 4
      %s167 = smul.addr %s166, 2
      %s168 = scalar_lea.vmem %s3, %s167
      %p169 = scmp.lt.s32.totalorder %s15, 1
      %s170 = scalar_select %p169, %s15, 1
      %s171 = smul.addr %s170, 7
      %s172 = smul.addr %s171, 4
      %s173 = scalar_lea.vmem %s0, %s172
      %p174 = scmp.lt.s32.totalorder %s15, 1
      %s175 = scalar_select %p174, %s15, 1
      %s176 = smul.addr %s175, 4
      %s177 = smul.addr %s176, 8
      %s178 = scalar_lea.vmem %s2, %s177
      %p179 = scmp.lt.s32.totalorder %s15, 1
      %s180 = scalar_select %p179, %s15, 1
      %s181 = smul.addr %s180, 4
      %s182 = smul.addr %s181, 2
      %s183 = scalar_lea.vmem %s3, %s182
      %v185 = vld [vmem:[%s173] sm:$0xff]
      %v186 = vld [vmem:[%s173 + $0x8] sm:$0xff]
      %v187 = vld [vmem:[%s173 + $0x10] sm:$0xff]
      %v188 = vld [vmem:[%s173 + $0x18] sm:$0xf]
      %v189 = vld [vmem:[%s1] sm:$0xff]
      %v190 = vld [vmem:[%s1 + $0x8] sm:$0xff]
      %v191 = vld [vmem:[%s1 + $0x10] sm:$0xff]
      %v192 = vld [vmem:[%s1 + $0x18] sm:$0xff]
      %v193 = vld [vmem:[%s1 + $0x20] sm:$0xff]
      %v194 = vld [vmem:[%s1 + $0x28] sm:$0xff]
      %v195 = vld [vmem:[%s1 + $0x30] sm:$0xff]
      %v196 = vld [vmem:[%s1 + $0x38] sm:$0xff]
      %v197 = vld [vmem:[%s1 + $0x40] sm:$0xff]
      %v198 = vld [vmem:[%s1 + $0x48] sm:$0xff]
      %v199 = vld [vmem:[%s1 + $0x50] sm:$0xff]
      %v200 = vld [vmem:[%s1 + $0x58] sm:$0xff]
      %v201 = vld [vmem:[%s1 + $0x60] sm:$0xff]
      %v202 = vld [vmem:[%s1 + $0x68] sm:$0xff]
      %v203 = vld [vmem:[%s1 + $0x70] sm:$0xff]
      %v204 = vld [vmem:[%s1 + $0x78] sm:$0xff]
      %v205 = vld [vmem:[%s1 + $0x80] sm:$0xff]
      %v206 = vld [vmem:[%s1 + $0x88] sm:$0xff]
      %v207 = vld [vmem:[%s1 + $0x90] sm:$0xff]
      %v208 = vld [vmem:[%s1 + $0x98] sm:$0xff]
      %v209 = vld [vmem:[%s1 + $0xa0] sm:$0xff]
      %v210 = vld [vmem:[%s1 + $0xa8] sm:$0xff]
      %v211 = vld [vmem:[%s1 + $0xb0] sm:$0xff]
      %v212 = vld [vmem:[%s1 + $0xb8] sm:$0xff]
      %v213 = vld [vmem:[%s1 + $0xc0] sm:$0xff]
      %v214 = vld [vmem:[%s1 + $0xc8] sm:$0xff]
      %v215 = vld [vmem:[%s1 + $0xd0] sm:$0xff]
      %v216 = vld [vmem:[%s1 + $0xd8] sm:$0xff]
      %v217 = vld [vmem:[%s1 + $0xe0] sm:$0xff]
      %v218 = vld [vmem:[%s1 + $0xe8] sm:$0xff]
      %v219 = vld [vmem:[%s1 + $0xf0] sm:$0xff]
      %v220 = vld [vmem:[%s1 + $0xf8] sm:$0xff]
      %v221 = vld [vmem:[%s1 + $0x100] sm:$0xff]
      %v222 = vld [vmem:[%s1 + $0x108] sm:$0xff]
      %v223 = vld [vmem:[%s1 + $0x110] sm:$0xff]
      %v224 = vld [vmem:[%s1 + $0x118] sm:$0xff]
      %v225 = vld [vmem:[%s1 + $0x120] sm:$0xff]
      %v226 = vld [vmem:[%s1 + $0x128] sm:$0xff]
      %v227 = vld [vmem:[%s1 + $0x130] sm:$0xff]
      %v228 = vld [vmem:[%s1 + $0x138] sm:$0xff]
      %v229 = vld [vmem:[%s1 + $0x140] sm:$0xff]
      %v230 = vld [vmem:[%s1 + $0x148] sm:$0xff]
      %v231 = vld [vmem:[%s1 + $0x150] sm:$0xff]
      %v232 = vld [vmem:[%s1 + $0x158] sm:$0xff]
      %v233 = vld [vmem:[%s1 + $0x160] sm:$0xff]
      %v234 = vld [vmem:[%s1 + $0x168] sm:$0xff]
      %v235 = vld [vmem:[%s1 + $0x170] sm:$0xff]
      %v236 = vld [vmem:[%s1 + $0x178] sm:$0xff]
      %v237 = vld [vmem:[%s1 + $0x180] sm:$0xff]
      %v238 = vld [vmem:[%s1 + $0x188] sm:$0xff]
      %v239 = vld [vmem:[%s1 + $0x190] sm:$0xff]
      %v240 = vld [vmem:[%s1 + $0x198] sm:$0xff]
      %v241 = vld [vmem:[%s1 + $0x1a0] sm:$0xff]
      %v242 = vld [vmem:[%s1 + $0x1a8] sm:$0xff]
      %v243 = vld [vmem:[%s1 + $0x1b0] sm:$0xff]
      %v244 = vld [vmem:[%s1 + $0x1b8] sm:$0xff]
      %v245 = vld [vmem:[%s1 + $0x1c0] sm:$0xff]
      %v246 = vld [vmem:[%s1 + $0x1c8] sm:$0xff]
      %v247 = vld [vmem:[%s1 + $0x1d0] sm:$0xff]
      %v248 = vld [vmem:[%s1 + $0x1d8] sm:$0xff]
      %v249 = vld [vmem:[%s1 + $0x1e0] sm:$0xff]
      %v250 = vld [vmem:[%s1 + $0x1e8] sm:$0xff]
      %v251 = vld [vmem:[%s1 + $0x1f0] sm:$0xff]
      %v252 = vld [vmem:[%s1 + $0x1f8] sm:$0xff]
      %v253 = vld [vmem:[%s1 + $0x200] sm:$0xff]
      %v254 = vld [vmem:[%s1 + $0x208] sm:$0xff]
      %v255 = vld [vmem:[%s1 + $0x210] sm:$0xff]
      %v256 = vld [vmem:[%s1 + $0x218] sm:$0xff]
      %v257 = vld [vmem:[%s1 + $0x220] sm:$0xff]
      %v258 = vld [vmem:[%s1 + $0x228] sm:$0xff]
      %v259 = vld [vmem:[%s1 + $0x230] sm:$0xff]
      %v260 = vld [vmem:[%s1 + $0x238] sm:$0xff]
      %v261 = vld [vmem:[%s1 + $0x240] sm:$0xff]
      %v262 = vld [vmem:[%s1 + $0x248] sm:$0xff]
      %v263 = vld [vmem:[%s1 + $0x250] sm:$0xff]
      %v264 = vld [vmem:[%s1 + $0x258] sm:$0xff]
      %v265 = vld [vmem:[%s1 + $0x260] sm:$0xff]
      %v266 = vld [vmem:[%s1 + $0x268] sm:$0xff]
      %v267 = vld [vmem:[%s1 + $0x270] sm:$0xff]
      %v268 = vld [vmem:[%s1 + $0x278] sm:$0xff]
      %v269 = vld [vmem:[%s1 + $0x280] sm:$0xff]
      %v270 = vld [vmem:[%s1 + $0x288] sm:$0xff]
      %v271 = vld [vmem:[%s1 + $0x290] sm:$0xff]
      %v272 = vld [vmem:[%s1 + $0x298] sm:$0xff]
      %v273 = vld [vmem:[%s1 + $0x2a0] sm:$0xff]
      %v274 = vld [vmem:[%s1 + $0x2a8] sm:$0xff]
      %v275 = vld [vmem:[%s1 + $0x2b0] sm:$0xff]
      %v276 = vld [vmem:[%s1 + $0x2b8] sm:$0xff]
      %v277 = vld [vmem:[%s1 + $0x2c0] sm:$0xff]
      %v278 = vld [vmem:[%s1 + $0x2c8] sm:$0xff]
      %v279 = vld [vmem:[%s1 + $0x2d0] sm:$0xff]
      %v280 = vld [vmem:[%s1 + $0x2d8] sm:$0xff]
      %v281 = vld [vmem:[%s1 + $0x2e0] sm:$0xff]
      %v282 = vld [vmem:[%s1 + $0x2e8] sm:$0xff]
      %v283 = vld [vmem:[%s1 + $0x2f0] sm:$0xff]
      %v284 = vld [vmem:[%s1 + $0x2f8] sm:$0xff]
      %v285 = vld [vmem:[%s1 + $0x300] sm:$0xff]
      %v286 = vld [vmem:[%s1 + $0x308] sm:$0xff]
      %v287 = vld [vmem:[%s1 + $0x310] sm:$0xff]
      %v288 = vld [vmem:[%s1 + $0x318] sm:$0xff]
      %v289 = vld [vmem:[%s1 + $0x320] sm:$0xff]
      %v290 = vld [vmem:[%s1 + $0x328] sm:$0xff]
      %v291 = vld [vmem:[%s1 + $0x330] sm:$0xff]
      %v292 = vld [vmem:[%s1 + $0x338] sm:$0xff]
      %v293 = vld [vmem:[%s1 + $0x340] sm:$0xff]
      %v294 = vld [vmem:[%s1 + $0x348] sm:$0xff]
      %v295 = vld [vmem:[%s1 + $0x350] sm:$0xff]
      %v296 = vld [vmem:[%s1 + $0x358] sm:$0xff]
      %v297 = vld [vmem:[%s1 + $0x360] sm:$0xff]
      %v298 = vld [vmem:[%s1 + $0x368] sm:$0xff]
      %v299 = vld [vmem:[%s1 + $0x370] sm:$0xff]
      %v300 = vld [vmem:[%s1 + $0x378] sm:$0xff]
      %v301 = vld [vmem:[%s1 + $0x380] sm:$0xff]
      %v302 = vld [vmem:[%s1 + $0x388] sm:$0xff]
      %v303 = vld [vmem:[%s1 + $0x390] sm:$0xff]
      %v304 = vld [vmem:[%s1 + $0x398] sm:$0xff]
      %v305 = vld [vmem:[%s1 + $0x3a0] sm:$0xff]
      %v306 = vld [vmem:[%s1 + $0x3a8] sm:$0xff]
      %v307 = vld [vmem:[%s1 + $0x3b0] sm:$0xff]
      %v308 = vld [vmem:[%s1 + $0x3b8] sm:$0xff]
      %v309 = vld [vmem:[%s1 + $0x3c0] sm:$0xff]
      %v310 = vld [vmem:[%s1 + $0x3c8] sm:$0xff]
      %v311 = vld [vmem:[%s1 + $0x3d0] sm:$0xff]
      %v312 = vld [vmem:[%s1 + $0x3d8] sm:$0xff]
      %v313 = vld [vmem:[%s1 + $0x3e0] sm:$0xff]
      %v314 = vld [vmem:[%s1 + $0x3e8] sm:$0xff]
      %v315 = vld [vmem:[%s1 + $0x3f0] sm:$0xff]
      %v316 = vld [vmem:[%s1 + $0x3f8] sm:$0xff]
      %v317 = vld [vmem:[%s1 + $0x400] sm:$0xff]
      %v318 = vld [vmem:[%s1 + $0x408] sm:$0xff]
      %v319 = vld [vmem:[%s1 + $0x410] sm:$0xff]
      %v320 = vld [vmem:[%s1 + $0x418] sm:$0xff]
      %v321 = vld [vmem:[%s1 + $0x420] sm:$0xff]
      %v322 = vld [vmem:[%s1 + $0x428] sm:$0xff]
      %v323 = vld [vmem:[%s1 + $0x430] sm:$0xff]
      %v324 = vld [vmem:[%s1 + $0x438] sm:$0xff]
      %v325 = vld [vmem:[%s1 + $0x440] sm:$0xff]
      %v326 = vld [vmem:[%s1 + $0x448] sm:$0xff]
      %v327 = vld [vmem:[%s1 + $0x450] sm:$0xff]
      %v328 = vld [vmem:[%s1 + $0x458] sm:$0xff]
      %v329 = vld [vmem:[%s1 + $0x460] sm:$0xff]
      %v330 = vld [vmem:[%s1 + $0x468] sm:$0xff]
      %v331 = vld [vmem:[%s1 + $0x470] sm:$0xff]
      %v332 = vld [vmem:[%s1 + $0x478] sm:$0xff]
      %v333 = vld [vmem:[%s1 + $0x480] sm:$0xff]
      %v334 = vld [vmem:[%s1 + $0x488] sm:$0xff]
      %v335 = vld [vmem:[%s1 + $0x490] sm:$0xff]
      %v336 = vld [vmem:[%s1 + $0x498] sm:$0xff]
      %v337 = vld [vmem:[%s1 + $0x4a0] sm:$0xff]
      %v338 = vld [vmem:[%s1 + $0x4a8] sm:$0xff]
      %v339 = vld [vmem:[%s1 + $0x4b0] sm:$0xff]
      %v340 = vld [vmem:[%s1 + $0x4b8] sm:$0xff]
      %v341 = vld [vmem:[%s1 + $0x4c0] sm:$0xff]
      %v342 = vld [vmem:[%s1 + $0x4c8] sm:$0xff]
      %v343 = vld [vmem:[%s1 + $0x4d0] sm:$0xff]
      %v344 = vld [vmem:[%s1 + $0x4d8] sm:$0xff]
      %v345 = vld [vmem:[%s1 + $0x4e0] sm:$0xff]
      %v346 = vld [vmem:[%s1 + $0x4e8] sm:$0xff]
      %v347 = vld [vmem:[%s1 + $0x4f0] sm:$0xff]
      %v348 = vld [vmem:[%s1 + $0x4f8] sm:$0xff]
      %v349 = vld [vmem:[%s1 + $0x500] sm:$0xff]
      %v350 = vld [vmem:[%s1 + $0x508] sm:$0xff]
      %v351 = vld [vmem:[%s1 + $0x510] sm:$0xff]
      %v352 = vld [vmem:[%s1 + $0x518] sm:$0xff]
      %v353 = vld [vmem:[%s1 + $0x520] sm:$0xff]
      %v354 = vld [vmem:[%s1 + $0x528] sm:$0xff]
      %v355 = vld [vmem:[%s1 + $0x530] sm:$0xff]
      %v356 = vld [vmem:[%s1 + $0x538] sm:$0xff]
      %v357 = vld [vmem:[%s1 + $0x540] sm:$0xff]
      %v358 = vld [vmem:[%s1 + $0x548] sm:$0xff]
      %v359 = vld [vmem:[%s1 + $0x550] sm:$0xff]
      %v360 = vld [vmem:[%s1 + $0x558] sm:$0xff]
      %v361 = vld [vmem:[%s1 + $0x560] sm:$0xff]
      %v362 = vld [vmem:[%s1 + $0x568] sm:$0xff]
      %v363 = vld [vmem:[%s1 + $0x570] sm:$0xff]
      %v364 = vld [vmem:[%s1 + $0x578] sm:$0xff]
      %v365 = vld [vmem:[%s1 + $0x580] sm:$0xff]
      %v366 = vld [vmem:[%s1 + $0x588] sm:$0xff]
      %v367 = vld [vmem:[%s1 + $0x590] sm:$0xff]
      %v368 = vld [vmem:[%s1 + $0x598] sm:$0xff]
      %v369 = vld [vmem:[%s1 + $0x5a0] sm:$0xff]
      %v370 = vld [vmem:[%s1 + $0x5a8] sm:$0xff]
      %v371 = vld [vmem:[%s1 + $0x5b0] sm:$0xff]
      %v372 = vld [vmem:[%s1 + $0x5b8] sm:$0xff]
      %v373 = vld [vmem:[%s1 + $0x5c0] sm:$0xff]
      %v374 = vld [vmem:[%s1 + $0x5c8] sm:$0xff]
      %v375 = vld [vmem:[%s1 + $0x5d0] sm:$0xff]
      %v376 = vld [vmem:[%s1 + $0x5d8] sm:$0xff]
      %v377 = vld [vmem:[%s1 + $0x5e0] sm:$0xff]
      %v378 = vld [vmem:[%s1 + $0x5e8] sm:$0xff]
      %v379 = vld [vmem:[%s1 + $0x5f0] sm:$0xff]
      %v380 = vld [vmem:[%s1 + $0x5f8] sm:$0xff]
      %v381 = vld [vmem:[%s1 + $0x600] sm:$0xff]
      %v382 = vld [vmem:[%s1 + $0x608] sm:$0xff]
      %v383 = vld [vmem:[%s1 + $0x610] sm:$0xff]
      %v384 = vld [vmem:[%s1 + $0x618] sm:$0xff]
      %v389 = vunpack.c.l.b16 %v185
      %v390 = vunpack.c.h.b16 %v185
      %v391 = vunpack.c.l.b16 %v186
      %v392 = vunpack.c.h.b16 %v186
      %v393 = vunpack.c.l.b16 %v187
      %v394 = vunpack.c.h.b16 %v187
      %v395 = vunpack.c.l.b16 %v188
      %v396 = vpack.c.b16 %v389, %v389
      %v397 = vpack.c.b16 %v390, %v390
      %v398 = vpack.c.b16 %v391, %v391
      %v399 = vpack.c.b16 %v392, %v392
      %v400 = vpack.c.b16 %v393, %v393
      %v401 = vpack.c.b16 %v394, %v394
      %v402 = vpack.c.b16 %v395, %v395
      %v605 = vunpack.c.l.b16 %v189
      %v606 = vunpack.c.h.b16 %v189
      %v607 = vunpack.c.l.b16 %v190
      %v608 = vunpack.c.h.b16 %v190
      %v609 = vunpack.c.l.b16 %v191
      %v610 = vunpack.c.h.b16 %v191
      %v611 = vunpack.c.l.b16 %v192
      %v612 = vunpack.c.h.b16 %v192
      %v613 = vunpack.c.l.b16 %v193
      %v614 = vunpack.c.h.b16 %v193
      %v615 = vunpack.c.l.b16 %v194
      %v616 = vunpack.c.h.b16 %v194
      %v617 = vunpack.c.l.b16 %v195
      %v618 = vunpack.c.h.b16 %v195
      %v619 = vunpack.c.l.b16 %v196
      %v620 = vunpack.c.h.b16 %v196
      %v621 = vunpack.c.l.b16 %v197
      %v622 = vunpack.c.h.b16 %v197
      %v623 = vunpack.c.l.b16 %v198
      %v624 = vunpack.c.h.b16 %v198
      %v625 = vunpack.c.l.b16 %v199
      %v626 = vunpack.c.h.b16 %v199
      %v627 = vunpack.c.l.b16 %v200
      %v628 = vunpack.c.h.b16 %v200
      %v629 = vunpack.c.l.b16 %v201
      %v630 = vunpack.c.h.b16 %v201
      %v631 = vunpack.c.l.b16 %v202
      %v632 = vunpack.c.h.b16 %v202
      %v633 = vunpack.c.l.b16 %v203
      %v634 = vunpack.c.h.b16 %v203
      %v635 = vunpack.c.l.b16 %v204
      %v636 = vunpack.c.h.b16 %v204
      %v637 = vunpack.c.l.b16 %v205
      %v638 = vunpack.c.h.b16 %v205
      %v639 = vunpack.c.l.b16 %v206
      %v640 = vunpack.c.h.b16 %v206
      %v641 = vunpack.c.l.b16 %v207
      %v642 = vunpack.c.h.b16 %v207
      %v643 = vunpack.c.l.b16 %v208
      %v644 = vunpack.c.h.b16 %v208
      %v645 = vunpack.c.l.b16 %v209
      %v646 = vunpack.c.h.b16 %v209
      %v647 = vunpack.c.l.b16 %v210
      %v648 = vunpack.c.h.b16 %v210
      %v649 = vunpack.c.l.b16 %v211
      %v650 = vunpack.c.h.b16 %v211
      %v651 = vunpack.c.l.b16 %v212
      %v652 = vunpack.c.h.b16 %v212
      %v653 = vunpack.c.l.b16 %v213
      %v654 = vunpack.c.h.b16 %v213
      %v655 = vunpack.c.l.b16 %v214
      %v656 = vunpack.c.h.b16 %v214
      %v657 = vunpack.c.l.b16 %v215
      %v658 = vunpack.c.h.b16 %v215
      %v659 = vunpack.c.l.b16 %v216
      %v660 = vunpack.c.h.b16 %v216
      %v661 = vunpack.c.l.b16 %v217
      %v662 = vunpack.c.h.b16 %v217
      %v663 = vunpack.c.l.b16 %v218
      %v664 = vunpack.c.h.b16 %v218
      %v665 = vunpack.c.l.b16 %v219
      %v666 = vunpack.c.h.b16 %v219
      %v667 = vunpack.c.l.b16 %v220
      %v668 = vunpack.c.h.b16 %v220
      %v669 = vunpack.c.l.b16 %v221
      %v670 = vunpack.c.h.b16 %v221
      %v671 = vunpack.c.l.b16 %v222
      %v672 = vunpack.c.h.b16 %v222
      %v673 = vunpack.c.l.b16 %v223
      %v674 = vunpack.c.h.b16 %v223
      %v675 = vunpack.c.l.b16 %v224
      %v676 = vunpack.c.h.b16 %v224
      %v677 = vunpack.c.l.b16 %v225
      %v678 = vunpack.c.h.b16 %v225
      %v679 = vunpack.c.l.b16 %v226
      %v680 = vunpack.c.h.b16 %v226
      %v681 = vunpack.c.l.b16 %v227
      %v682 = vunpack.c.h.b16 %v227
      %v683 = vunpack.c.l.b16 %v228
      %v684 = vunpack.c.h.b16 %v228
      %v685 = vunpack.c.l.b16 %v229
      %v686 = vunpack.c.h.b16 %v229
      %v687 = vunpack.c.l.b16 %v230
      %v688 = vunpack.c.h.b16 %v230
      %v689 = vunpack.c.l.b16 %v231
      %v690 = vunpack.c.h.b16 %v231
      %v691 = vunpack.c.l.b16 %v232
      %v692 = vunpack.c.h.b16 %v232
      %v693 = vunpack.c.l.b16 %v233
      %v694 = vunpack.c.h.b16 %v233
      %v695 = vunpack.c.l.b16 %v234
      %v696 = vunpack.c.h.b16 %v234
      %v697 = vunpack.c.l.b16 %v235
      %v698 = vunpack.c.h.b16 %v235
      %v699 = vunpack.c.l.b16 %v236
      %v700 = vunpack.c.h.b16 %v236
      %v701 = vunpack.c.l.b16 %v237
      %v702 = vunpack.c.h.b16 %v237
      %v703 = vunpack.c.l.b16 %v238
      %v704 = vunpack.c.h.b16 %v238
      %v705 = vunpack.c.l.b16 %v239
      %v706 = vunpack.c.h.b16 %v239
      %v707 = vunpack.c.l.b16 %v240
      %v708 = vunpack.c.h.b16 %v240
      %v709 = vunpack.c.l.b16 %v241
      %v710 = vunpack.c.h.b16 %v241
      %v711 = vunpack.c.l.b16 %v242
      %v712 = vunpack.c.h.b16 %v242
      %v713 = vunpack.c.l.b16 %v243
      %v714 = vunpack.c.h.b16 %v243
      %v715 = vunpack.c.l.b16 %v244
      %v716 = vunpack.c.h.b16 %v244
      %v717 = vunpack.c.l.b16 %v245
      %v718 = vunpack.c.h.b16 %v245
      %v719 = vunpack.c.l.b16 %v246
      %v720 = vunpack.c.h.b16 %v246
      %v721 = vunpack.c.l.b16 %v247
      %v722 = vunpack.c.h.b16 %v247
      %v723 = vunpack.c.l.b16 %v248
      %v724 = vunpack.c.h.b16 %v248
      %v725 = vunpack.c.l.b16 %v249
      %v726 = vunpack.c.h.b16 %v249
      %v727 = vunpack.c.l.b16 %v250
      %v728 = vunpack.c.h.b16 %v250
      %v729 = vunpack.c.l.b16 %v251
      %v730 = vunpack.c.h.b16 %v251
      %v731 = vunpack.c.l.b16 %v252
      %v732 = vunpack.c.h.b16 %v252
      %v733 = vunpack.c.l.b16 %v253
      %v734 = vunpack.c.h.b16 %v253
      %v735 = vunpack.c.l.b16 %v254
      %v736 = vunpack.c.h.b16 %v254
      %v737 = vunpack.c.l.b16 %v255
      %v738 = vunpack.c.h.b16 %v255
      %v739 = vunpack.c.l.b16 %v256
      %v740 = vunpack.c.h.b16 %v256
      %v741 = vunpack.c.l.b16 %v257
      %v742 = vunpack.c.h.b16 %v257
      %v743 = vunpack.c.l.b16 %v258
      %v744 = vunpack.c.h.b16 %v258
      %v745 = vunpack.c.l.b16 %v259
      %v746 = vunpack.c.h.b16 %v259
      %v747 = vunpack.c.l.b16 %v260
      %v748 = vunpack.c.h.b16 %v260
      %v749 = vunpack.c.l.b16 %v261
      %v750 = vunpack.c.h.b16 %v261
      %v751 = vunpack.c.l.b16 %v262
      %v752 = vunpack.c.h.b16 %v262
      %v753 = vunpack.c.l.b16 %v263
      %v754 = vunpack.c.h.b16 %v263
      %v755 = vunpack.c.l.b16 %v264
      %v756 = vunpack.c.h.b16 %v264
      %v757 = vunpack.c.l.b16 %v265
      %v758 = vunpack.c.h.b16 %v265
      %v759 = vunpack.c.l.b16 %v266
      %v760 = vunpack.c.h.b16 %v266
      %v761 = vunpack.c.l.b16 %v267
      %v762 = vunpack.c.h.b16 %v267
      %v763 = vunpack.c.l.b16 %v268
      %v764 = vunpack.c.h.b16 %v268
      %v765 = vunpack.c.l.b16 %v269
      %v766 = vunpack.c.h.b16 %v269
      %v767 = vunpack.c.l.b16 %v270
      %v768 = vunpack.c.h.b16 %v270
      %v769 = vunpack.c.l.b16 %v271
      %v770 = vunpack.c.h.b16 %v271
      %v771 = vunpack.c.l.b16 %v272
      %v772 = vunpack.c.h.b16 %v272
      %v773 = vunpack.c.l.b16 %v273
      %v774 = vunpack.c.h.b16 %v273
      %v775 = vunpack.c.l.b16 %v274
      %v776 = vunpack.c.h.b16 %v274
      %v777 = vunpack.c.l.b16 %v275
      %v778 = vunpack.c.h.b16 %v275
      %v779 = vunpack.c.l.b16 %v276
      %v780 = vunpack.c.h.b16 %v276
      %v781 = vunpack.c.l.b16 %v277
      %v782 = vunpack.c.h.b16 %v277
      %v783 = vunpack.c.l.b16 %v278
      %v784 = vunpack.c.h.b16 %v278
      %v785 = vunpack.c.l.b16 %v279
      %v786 = vunpack.c.h.b16 %v279
      %v787 = vunpack.c.l.b16 %v280
      %v788 = vunpack.c.h.b16 %v280
      %v789 = vunpack.c.l.b16 %v281
      %v790 = vunpack.c.h.b16 %v281
      %v791 = vunpack.c.l.b16 %v282
      %v792 = vunpack.c.h.b16 %v282
      %v793 = vunpack.c.l.b16 %v283
      %v794 = vunpack.c.h.b16 %v283
      %v795 = vunpack.c.l.b16 %v284
      %v796 = vunpack.c.h.b16 %v284
      %v797 = vunpack.c.l.b16 %v285
      %v798 = vunpack.c.h.b16 %v285
      %v799 = vunpack.c.l.b16 %v286
      %v800 = vunpack.c.h.b16 %v286
      %v801 = vunpack.c.l.b16 %v287
      %v802 = vunpack.c.h.b16 %v287
      %v803 = vunpack.c.l.b16 %v288
      %v804 = vunpack.c.h.b16 %v288
      %v805 = vunpack.c.l.b16 %v289
      %v806 = vunpack.c.h.b16 %v289
      %v807 = vunpack.c.l.b16 %v290
      %v808 = vunpack.c.h.b16 %v290
      %v809 = vunpack.c.l.b16 %v291
      %v810 = vunpack.c.h.b16 %v291
      %v811 = vunpack.c.l.b16 %v292
      %v812 = vunpack.c.h.b16 %v292
      %v813 = vunpack.c.l.b16 %v293
      %v814 = vunpack.c.h.b16 %v293
      %v815 = vunpack.c.l.b16 %v294
      %v816 = vunpack.c.h.b16 %v294
      %v817 = vunpack.c.l.b16 %v295
      %v818 = vunpack.c.h.b16 %v295
      %v819 = vunpack.c.l.b16 %v296
      %v820 = vunpack.c.h.b16 %v296
      %v821 = vunpack.c.l.b16 %v297
      %v822 = vunpack.c.h.b16 %v297
      %v823 = vunpack.c.l.b16 %v298
      %v824 = vunpack.c.h.b16 %v298
      %v825 = vunpack.c.l.b16 %v299
      %v826 = vunpack.c.h.b16 %v299
      %v827 = vunpack.c.l.b16 %v300
      %v828 = vunpack.c.h.b16 %v300
      %v829 = vunpack.c.l.b16 %v301
      %v830 = vunpack.c.h.b16 %v301
      %v831 = vunpack.c.l.b16 %v302
      %v832 = vunpack.c.h.b16 %v302
      %v833 = vunpack.c.l.b16 %v303
      %v834 = vunpack.c.h.b16 %v303
      %v835 = vunpack.c.l.b16 %v304
      %v836 = vunpack.c.h.b16 %v304
      %v837 = vunpack.c.l.b16 %v305
      %v838 = vunpack.c.h.b16 %v305
      %v839 = vunpack.c.l.b16 %v306
      %v840 = vunpack.c.h.b16 %v306
      %v841 = vunpack.c.l.b16 %v307
      %v842 = vunpack.c.h.b16 %v307
      %v843 = vunpack.c.l.b16 %v308
      %v844 = vunpack.c.h.b16 %v308
      %v845 = vunpack.c.l.b16 %v309
      %v846 = vunpack.c.h.b16 %v309
      %v847 = vunpack.c.l.b16 %v310
      %v848 = vunpack.c.h.b16 %v310
      %v849 = vunpack.c.l.b16 %v311
      %v850 = vunpack.c.h.b16 %v311
      %v851 = vunpack.c.l.b16 %v312
      %v852 = vunpack.c.h.b16 %v312
      %v853 = vunpack.c.l.b16 %v313
      %v854 = vunpack.c.h.b16 %v313
      %v855 = vunpack.c.l.b16 %v314
      %v856 = vunpack.c.h.b16 %v314
      %v857 = vunpack.c.l.b16 %v315
      %v858 = vunpack.c.h.b16 %v315
      %v859 = vunpack.c.l.b16 %v316
      %v860 = vunpack.c.h.b16 %v316
      %v861 = vunpack.c.l.b16 %v317
      %v862 = vunpack.c.h.b16 %v317
      %v863 = vunpack.c.l.b16 %v318
      %v864 = vunpack.c.h.b16 %v318
      %v865 = vunpack.c.l.b16 %v319
      %v866 = vunpack.c.h.b16 %v319
      %v867 = vunpack.c.l.b16 %v320
      %v868 = vunpack.c.h.b16 %v320
      %v869 = vunpack.c.l.b16 %v321
      %v870 = vunpack.c.h.b16 %v321
      %v871 = vunpack.c.l.b16 %v322
      %v872 = vunpack.c.h.b16 %v322
      %v873 = vunpack.c.l.b16 %v323
      %v874 = vunpack.c.h.b16 %v323
      %v875 = vunpack.c.l.b16 %v324
      %v876 = vunpack.c.h.b16 %v324
      %v877 = vunpack.c.l.b16 %v325
      %v878 = vunpack.c.h.b16 %v325
      %v879 = vunpack.c.l.b16 %v326
      %v880 = vunpack.c.h.b16 %v326
      %v881 = vunpack.c.l.b16 %v327
      %v882 = vunpack.c.h.b16 %v327
      %v883 = vunpack.c.l.b16 %v328
      %v884 = vunpack.c.h.b16 %v328
      %v885 = vunpack.c.l.b16 %v329
      %v886 = vunpack.c.h.b16 %v329
      %v887 = vunpack.c.l.b16 %v330
      %v888 = vunpack.c.h.b16 %v330
      %v889 = vunpack.c.l.b16 %v331
      %v890 = vunpack.c.h.b16 %v331
      %v891 = vunpack.c.l.b16 %v332
      %v892 = vunpack.c.h.b16 %v332
      %v893 = vunpack.c.l.b16 %v333
      %v894 = vunpack.c.h.b16 %v333
      %v895 = vunpack.c.l.b16 %v334
      %v896 = vunpack.c.h.b16 %v334
      %v897 = vunpack.c.l.b16 %v335
      %v898 = vunpack.c.h.b16 %v335
      %v899 = vunpack.c.l.b16 %v336
      %v900 = vunpack.c.h.b16 %v336
      %v901 = vunpack.c.l.b16 %v337
      %v902 = vunpack.c.h.b16 %v337
      %v903 = vunpack.c.l.b16 %v338
      %v904 = vunpack.c.h.b16 %v338
      %v905 = vunpack.c.l.b16 %v339
      %v906 = vunpack.c.h.b16 %v339
      %v907 = vunpack.c.l.b16 %v340
      %v908 = vunpack.c.h.b16 %v340
      %v909 = vunpack.c.l.b16 %v341
      %v910 = vunpack.c.h.b16 %v341
      %v911 = vunpack.c.l.b16 %v342
      %v912 = vunpack.c.h.b16 %v342
      %v913 = vunpack.c.l.b16 %v343
      %v914 = vunpack.c.h.b16 %v343
      %v915 = vunpack.c.l.b16 %v344
      %v916 = vunpack.c.h.b16 %v344
      %v917 = vunpack.c.l.b16 %v345
      %v918 = vunpack.c.h.b16 %v345
      %v919 = vunpack.c.l.b16 %v346
      %v920 = vunpack.c.h.b16 %v346
      %v921 = vunpack.c.l.b16 %v347
      %v922 = vunpack.c.h.b16 %v347
      %v923 = vunpack.c.l.b16 %v348
      %v924 = vunpack.c.h.b16 %v348
      %v925 = vunpack.c.l.b16 %v349
      %v926 = vunpack.c.h.b16 %v349
      %v927 = vunpack.c.l.b16 %v350
      %v928 = vunpack.c.h.b16 %v350
      %v929 = vunpack.c.l.b16 %v351
      %v930 = vunpack.c.h.b16 %v351
      %v931 = vunpack.c.l.b16 %v352
      %v932 = vunpack.c.h.b16 %v352
      %v933 = vunpack.c.l.b16 %v353
      %v934 = vunpack.c.h.b16 %v353
      %v935 = vunpack.c.l.b16 %v354
      %v936 = vunpack.c.h.b16 %v354
      %v937 = vunpack.c.l.b16 %v355
      %v938 = vunpack.c.h.b16 %v355
      %v939 = vunpack.c.l.b16 %v356
      %v940 = vunpack.c.h.b16 %v356
      %v941 = vunpack.c.l.b16 %v357
      %v942 = vunpack.c.h.b16 %v357
      %v943 = vunpack.c.l.b16 %v358
      %v944 = vunpack.c.h.b16 %v358
      %v945 = vunpack.c.l.b16 %v359
      %v946 = vunpack.c.h.b16 %v359
      %v947 = vunpack.c.l.b16 %v360
      %v948 = vunpack.c.h.b16 %v360
      %v949 = vunpack.c.l.b16 %v361
      %v950 = vunpack.c.h.b16 %v361
      %v951 = vunpack.c.l.b16 %v362
      %v952 = vunpack.c.h.b16 %v362
      %v953 = vunpack.c.l.b16 %v363
      %v954 = vunpack.c.h.b16 %v363
      %v955 = vunpack.c.l.b16 %v364
      %v956 = vunpack.c.h.b16 %v364
      %v957 = vunpack.c.l.b16 %v365
      %v958 = vunpack.c.h.b16 %v365
      %v959 = vunpack.c.l.b16 %v366
      %v960 = vunpack.c.h.b16 %v366
      %v961 = vunpack.c.l.b16 %v367
      %v962 = vunpack.c.h.b16 %v367
      %v963 = vunpack.c.l.b16 %v368
      %v964 = vunpack.c.h.b16 %v368
      %v965 = vunpack.c.l.b16 %v369
      %v966 = vunpack.c.h.b16 %v369
      %v967 = vunpack.c.l.b16 %v370
      %v968 = vunpack.c.h.b16 %v370
      %v969 = vunpack.c.l.b16 %v371
      %v970 = vunpack.c.h.b16 %v371
      %v971 = vunpack.c.l.b16 %v372
      %v972 = vunpack.c.h.b16 %v372
      %v973 = vunpack.c.l.b16 %v373
      %v974 = vunpack.c.h.b16 %v373
      %v975 = vunpack.c.l.b16 %v374
      %v976 = vunpack.c.h.b16 %v374
      %v977 = vunpack.c.l.b16 %v375
      %v978 = vunpack.c.h.b16 %v375
      %v979 = vunpack.c.l.b16 %v376
      %v980 = vunpack.c.h.b16 %v376
      %v981 = vunpack.c.l.b16 %v377
      %v982 = vunpack.c.h.b16 %v377
      %v983 = vunpack.c.l.b16 %v378
      %v984 = vunpack.c.h.b16 %v378
      %v985 = vunpack.c.l.b16 %v379
      %v986 = vunpack.c.h.b16 %v379
      %v987 = vunpack.c.l.b16 %v380
      %v988 = vunpack.c.h.b16 %v380
      %v989 = vunpack.c.l.b16 %v381
      %v990 = vunpack.c.h.b16 %v381
      %v991 = vunpack.c.l.b16 %v382
      %v992 = vunpack.c.h.b16 %v382
      %v993 = vunpack.c.l.b16 %v383
      %v994 = vunpack.c.h.b16 %v383
      %v995 = vunpack.c.l.b16 %v384
      %v996 = vunpack.c.h.b16 %v384
      %v997 = vpack.c.b16 %v609, %v605
      %v998 = vpack.c.b16 %v610, %v606
      %v999 = vpack.c.b16 %v611, %v607
      %v1000 = vpack.c.b16 %v612, %v608
      %v1001 = vpack.c.b16 %v617, %v613
      %v1002 = vpack.c.b16 %v618, %v614
      %v1003 = vpack.c.b16 %v619, %v615
      %v1004 = vpack.c.b16 %v620, %v616
      %v1005 = vpack.c.b16 %v625, %v621
      %v1006 = vpack.c.b16 %v626, %v622
      %v1007 = vpack.c.b16 %v627, %v623
      %v1008 = vpack.c.b16 %v628, %v624
      %v1009 = vpack.c.b16 %v633, %v629
      %v1010 = vpack.c.b16 %v634, %v630
      %v1011 = vpack.c.b16 %v635, %v631
      %v1012 = vpack.c.b16 %v636, %v632
      %v1013 = vpack.c.b16 %v641, %v637
      %v1014 = vpack.c.b16 %v642, %v638
      %v1015 = vpack.c.b16 %v643, %v639
      %v1016 = vpack.c.b16 %v644, %v640
      %v1017 = vpack.c.b16 %v649, %v645
      %v1018 = vpack.c.b16 %v650, %v646
      %v1019 = vpack.c.b16 %v651, %v647
      %v1020 = vpack.c.b16 %v652, %v648
      %v1021 = vpack.c.b16 %v657, %v653
      %v1022 = vpack.c.b16 %v658, %v654
      %v1023 = vpack.c.b16 %v659, %v655
      %v1024 = vpack.c.b16 %v660, %v656
      %v1025 = vpack.c.b16 %v665, %v661
      %v1026 = vpack.c.b16 %v666, %v662
      %v1027 = vpack.c.b16 %v667, %v663
      %v1028 = vpack.c.b16 %v668, %v664
      %v1029 = vpack.c.b16 %v673, %v669
      %v1030 = vpack.c.b16 %v674, %v670
      %v1031 = vpack.c.b16 %v675, %v671
      %v1032 = vpack.c.b16 %v676, %v672
      %v1033 = vpack.c.b16 %v681, %v677
      %v1034 = vpack.c.b16 %v682, %v678
      %v1035 = vpack.c.b16 %v683, %v679
      %v1036 = vpack.c.b16 %v684, %v680
      %v1037 = vpack.c.b16 %v689, %v685
      %v1038 = vpack.c.b16 %v690, %v686
      %v1039 = vpack.c.b16 %v691, %v687
      %v1040 = vpack.c.b16 %v692, %v688
      %v1041 = vpack.c.b16 %v697, %v693
      %v1042 = vpack.c.b16 %v698, %v694
      %v1043 = vpack.c.b16 %v699, %v695
      %v1044 = vpack.c.b16 %v700, %v696
      %v1045 = vpack.c.b16 %v705, %v701
      %v1046 = vpack.c.b16 %v706, %v702
      %v1047 = vpack.c.b16 %v707, %v703
      %v1048 = vpack.c.b16 %v708, %v704
      %v1049 = vpack.c.b16 %v713, %v709
      %v1050 = vpack.c.b16 %v714, %v710
      %v1051 = vpack.c.b16 %v715, %v711
      %v1052 = vpack.c.b16 %v716, %v712
      %v1053 = vpack.c.b16 %v721, %v717
      %v1054 = vpack.c.b16 %v722, %v718
      %v1055 = vpack.c.b16 %v723, %v719
      %v1056 = vpack.c.b16 %v724, %v720
      %v1057 = vpack.c.b16 %v729, %v725
      %v1058 = vpack.c.b16 %v730, %v726
      %v1059 = vpack.c.b16 %v731, %v727
      %v1060 = vpack.c.b16 %v732, %v728
      %v1061 = vpack.c.b16 %v737, %v733
      %v1062 = vpack.c.b16 %v738, %v734
      %v1063 = vpack.c.b16 %v739, %v735
      %v1064 = vpack.c.b16 %v740, %v736
      %v1065 = vpack.c.b16 %v745, %v741
      %v1066 = vpack.c.b16 %v746, %v742
      %v1067 = vpack.c.b16 %v747, %v743
      %v1068 = vpack.c.b16 %v748, %v744
      %v1069 = vpack.c.b16 %v753, %v749
      %v1070 = vpack.c.b16 %v754, %v750
      %v1071 = vpack.c.b16 %v755, %v751
      %v1072 = vpack.c.b16 %v756, %v752
      %v1073 = vpack.c.b16 %v761, %v757
      %v1074 = vpack.c.b16 %v762, %v758
      %v1075 = vpack.c.b16 %v763, %v759
      %v1076 = vpack.c.b16 %v764, %v760
      %v1077 = vpack.c.b16 %v769, %v765
      %v1078 = vpack.c.b16 %v770, %v766
      %v1079 = vpack.c.b16 %v771, %v767
      %v1080 = vpack.c.b16 %v772, %v768
      %v1081 = vpack.c.b16 %v777, %v773
      %v1082 = vpack.c.b16 %v778, %v774
      %v1083 = vpack.c.b16 %v779, %v775
      %v1084 = vpack.c.b16 %v780, %v776
      %v1085 = vpack.c.b16 %v785, %v781
      %v1086 = vpack.c.b16 %v786, %v782
      %v1087 = vpack.c.b16 %v787, %v783
      %v1088 = vpack.c.b16 %v788, %v784
      %v1089 = vpack.c.b16 %v793, %v789
      %v1090 = vpack.c.b16 %v794, %v790
      %v1091 = vpack.c.b16 %v795, %v791
      %v1092 = vpack.c.b16 %v796, %v792
      %v1093 = vpack.c.b16 %v801, %v797
      %v1094 = vpack.c.b16 %v802, %v798
      %v1095 = vpack.c.b16 %v803, %v799
      %v1096 = vpack.c.b16 %v804, %v800
      %v1097 = vpack.c.b16 %v809, %v805
      %v1098 = vpack.c.b16 %v810, %v806
      %v1099 = vpack.c.b16 %v811, %v807
      %v1100 = vpack.c.b16 %v812, %v808
      %v1101 = vpack.c.b16 %v817, %v813
      %v1102 = vpack.c.b16 %v818, %v814
      %v1103 = vpack.c.b16 %v819, %v815
      %v1104 = vpack.c.b16 %v820, %v816
      %v1105 = vpack.c.b16 %v825, %v821
      %v1106 = vpack.c.b16 %v826, %v822
      %v1107 = vpack.c.b16 %v827, %v823
      %v1108 = vpack.c.b16 %v828, %v824
      %v1109 = vpack.c.b16 %v833, %v829
      %v1110 = vpack.c.b16 %v834, %v830
      %v1111 = vpack.c.b16 %v835, %v831
      %v1112 = vpack.c.b16 %v836, %v832
      %v1113 = vpack.c.b16 %v841, %v837
      %v1114 = vpack.c.b16 %v842, %v838
      %v1115 = vpack.c.b16 %v843, %v839
      %v1116 = vpack.c.b16 %v844, %v840
      %v1117 = vpack.c.b16 %v849, %v845
      %v1118 = vpack.c.b16 %v850, %v846
      %v1119 = vpack.c.b16 %v851, %v847
      %v1120 = vpack.c.b16 %v852, %v848
      %v1121 = vpack.c.b16 %v857, %v853
      %v1122 = vpack.c.b16 %v858, %v854
      %v1123 = vpack.c.b16 %v859, %v855
      %v1124 = vpack.c.b16 %v860, %v856
      %v1125 = vpack.c.b16 %v865, %v861
      %v1126 = vpack.c.b16 %v866, %v862
      %v1127 = vpack.c.b16 %v867, %v863
      %v1128 = vpack.c.b16 %v868, %v864
      %v1129 = vpack.c.b16 %v873, %v869
      %v1130 = vpack.c.b16 %v874, %v870
      %v1131 = vpack.c.b16 %v875, %v871
      %v1132 = vpack.c.b16 %v876, %v872
      %v1133 = vpack.c.b16 %v881, %v877
      %v1134 = vpack.c.b16 %v882, %v878
      %v1135 = vpack.c.b16 %v883, %v879
      %v1136 = vpack.c.b16 %v884, %v880
      %v1137 = vpack.c.b16 %v889, %v885
      %v1138 = vpack.c.b16 %v890, %v886
      %v1139 = vpack.c.b16 %v891, %v887
      %v1140 = vpack.c.b16 %v892, %v888
      %v1141 = vpack.c.b16 %v897, %v893
      %v1142 = vpack.c.b16 %v898, %v894
      %v1143 = vpack.c.b16 %v899, %v895
      %v1144 = vpack.c.b16 %v900, %v896
      %v1145 = vpack.c.b16 %v905, %v901
      %v1146 = vpack.c.b16 %v906, %v902
      %v1147 = vpack.c.b16 %v907, %v903
      %v1148 = vpack.c.b16 %v908, %v904
      %v1149 = vpack.c.b16 %v913, %v909
      %v1150 = vpack.c.b16 %v914, %v910
      %v1151 = vpack.c.b16 %v915, %v911
      %v1152 = vpack.c.b16 %v916, %v912
      %v1153 = vpack.c.b16 %v921, %v917
      %v1154 = vpack.c.b16 %v922, %v918
      %v1155 = vpack.c.b16 %v923, %v919
      %v1156 = vpack.c.b16 %v924, %v920
      %v1157 = vpack.c.b16 %v929, %v925
      %v1158 = vpack.c.b16 %v930, %v926
      %v1159 = vpack.c.b16 %v931, %v927
      %v1160 = vpack.c.b16 %v932, %v928
      %v1161 = vpack.c.b16 %v937, %v933
      %v1162 = vpack.c.b16 %v938, %v934
      %v1163 = vpack.c.b16 %v939, %v935
      %v1164 = vpack.c.b16 %v940, %v936
      %v1165 = vpack.c.b16 %v945, %v941
      %v1166 = vpack.c.b16 %v946, %v942
      %v1167 = vpack.c.b16 %v947, %v943
      %v1168 = vpack.c.b16 %v948, %v944
      %v1169 = vpack.c.b16 %v953, %v949
      %v1170 = vpack.c.b16 %v954, %v950
      %v1171 = vpack.c.b16 %v955, %v951
      %v1172 = vpack.c.b16 %v956, %v952
      %v1173 = vpack.c.b16 %v961, %v957
      %v1174 = vpack.c.b16 %v962, %v958
      %v1175 = vpack.c.b16 %v963, %v959
      %v1176 = vpack.c.b16 %v964, %v960
      %v1177 = vpack.c.b16 %v969, %v965
      %v1178 = vpack.c.b16 %v970, %v966
      %v1179 = vpack.c.b16 %v971, %v967
      %v1180 = vpack.c.b16 %v972, %v968
      %v1181 = vpack.c.b16 %v977, %v973
      %v1182 = vpack.c.b16 %v978, %v974
      %v1183 = vpack.c.b16 %v979, %v975
      %v1184 = vpack.c.b16 %v980, %v976
      %v1185 = vpack.c.b16 %v985, %v981
      %v1186 = vpack.c.b16 %v986, %v982
      %v1187 = vpack.c.b16 %v987, %v983
      %v1188 = vpack.c.b16 %v988, %v984
      %v1189 = vpack.c.b16 %v993, %v989
      %v1190 = vpack.c.b16 %v994, %v990
      %v1191 = vpack.c.b16 %v995, %v991
      %v1192 = vpack.c.b16 %v996, %v992
      %vm1389 = vcmask 130048
      %v1391 = vsel %vm1389, %v402, 0
      %1393 = vmatpush.bf16.msra.mxu0 %v1025
      %1394 = vmatpush.bf16.msra.mxu0 %v1021
      %1395 = vmatpush.bf16.msra.mxu0 %v1017
      %1396 = vmatpush.bf16.msra.mxu0 %v1013
      %1397 = vmatpush.bf16.msra.mxu0 %v1009
      %1398 = vmatpush.bf16.msra.mxu0 %v1005
      %1399 = vmatpush.bf16.msra.mxu0 %v1001
      %1400 = vmatpush.bf16.msra.mxu0 %v997
      %1401 = vmatmul.bf16.gmra.mxu0 %v396
      %v1402 = vpop.f32.mrf.mxu0
      %v1403 = vadd.f32 0.0, %v1402
      %v1404 = vpop.f32.mrf.mxu0
      %1405 = vdwg.mxu0
      %1406 = vmatpush.bf16.msra.mxu0 %v1057
      %1407 = vmatpush.bf16.msra.mxu0 %v1053
      %1408 = vmatpush.bf16.msra.mxu0 %v1049
      %1409 = vmatpush.bf16.msra.mxu0 %v1045
      %1410 = vmatpush.bf16.msra.mxu0 %v1041
      %1411 = vmatpush.bf16.msra.mxu0 %v1037
      %1412 = vmatpush.bf16.msra.mxu0 %v1033
      %1413 = vmatpush.bf16.msra.mxu0 %v1029
      %1414 = vmatmul.bf16.gmra.mxu0 %v397
      %v1415 = vpop.f32.mrf.mxu0
      %v1416 = vadd.f32 %v1403, %v1415
      %v1417 = vpop.f32.mrf.mxu0
      %1418 = vdwg.mxu0
      %1419 = vmatpush.bf16.msra.mxu0 %v1089
      %1420 = vmatpush.bf16.msra.mxu0 %v1085
      %1421 = vmatpush.bf16.msra.mxu0 %v1081
      %1422 = vmatpush.bf16.msra.mxu0 %v1077
      %1423 = vmatpush.bf16.msra.mxu0 %v1073
      %1424 = vmatpush.bf16.msra.mxu0 %v1069
      %1425 = vmatpush.bf16.msra.mxu0 %v1065
      %1426 = vmatpush.bf16.msra.mxu0 %v1061
      %1427 = vmatmul.bf16.gmra.mxu0 %v398
      %v1428 = vpop.f32.mrf.mxu0
      %v1429 = vadd.f32 %v1416, %v1428
      %v1430 = vpop.f32.mrf.mxu0
      %1431 = vdwg.mxu0
      %1432 = vmatpush.bf16.msra.mxu0 %v1121
      %1433 = vmatpush.bf16.msra.mxu0 %v1117
      %1434 = vmatpush.bf16.msra.mxu0 %v1113
      %1435 = vmatpush.bf16.msra.mxu0 %v1109
      %1436 = vmatpush.bf16.msra.mxu0 %v1105
      %1437 = vmatpush.bf16.msra.mxu0 %v1101
      %1438 = vmatpush.bf16.msra.mxu0 %v1097
      %1439 = vmatpush.bf16.msra.mxu0 %v1093
      %1440 = vmatmul.bf16.gmra.mxu0 %v399
      %v1441 = vpop.f32.mrf.mxu0
      %v1442 = vadd.f32 %v1429, %v1441
      %v1443 = vpop.f32.mrf.mxu0
      %1444 = vdwg.mxu0
      %1445 = vmatpush.bf16.msra.mxu0 %v1153
      %1446 = vmatpush.bf16.msra.mxu0 %v1149
      %1447 = vmatpush.bf16.msra.mxu0 %v1145
      %1448 = vmatpush.bf16.msra.mxu0 %v1141
      %1449 = vmatpush.bf16.msra.mxu0 %v1137
      %1450 = vmatpush.bf16.msra.mxu0 %v1133
      %1451 = vmatpush.bf16.msra.mxu0 %v1129
      %1452 = vmatpush.bf16.msra.mxu0 %v1125
      %1453 = vmatmul.bf16.gmra.mxu0 %v400
      %v1454 = vpop.f32.mrf.mxu0
      %v1455 = vadd.f32 %v1442, %v1454
      %v1456 = vpop.f32.mrf.mxu0
      %1457 = vdwg.mxu0
      %1458 = vmatpush.bf16.msra.mxu0 %v1185
      %1459 = vmatpush.bf16.msra.mxu0 %v1181
      %1460 = vmatpush.bf16.msra.mxu0 %v1177
      %1461 = vmatpush.bf16.msra.mxu0 %v1173
      %1462 = vmatpush.bf16.msra.mxu0 %v1169
      %1463 = vmatpush.bf16.msra.mxu0 %v1165
      %1464 = vmatpush.bf16.msra.mxu0 %v1161
      %1465 = vmatpush.bf16.msra.mxu0 %v1157
      %1466 = vmatmul.bf16.gmra.mxu0 %v401
      %v1467 = vpop.f32.mrf.mxu0
      %v1468 = vadd.f32 %v1455, %v1467
      %v1469 = vpop.f32.mrf.mxu0
      %1470 = vdwg.mxu0
      %1471 = vmatpush.bf16.msra.mxu0 0
      %1472 = vmatpush.bf16.msra.mxu0 0
      %1473 = vmatpush.bf16.msra.mxu0 0
      %1474 = vmatpush.bf16.msra.mxu0 0
      %1475 = vmatpush.bf16.msra.mxu0 0
      %1476 = vmatpush.bf16.msra.mxu0 0
      %1477 = vmatpush.bf16.msra.mxu0 0
      %1478 = vmatpush.bf16.msra.mxu0 %v1189
      %1479 = vmatmul.bf16.gmra.mxu0 %v1391
      %v1480 = vpop.f32.mrf.mxu0
      %v1481 = vadd.f32 %v1468, %v1480
      %v1482 = vpop.f32.mrf.mxu0
      %1483 = vdwg.mxu0
      %1484 = vmatpush.bf16.msra.mxu0 %v1026
      %1485 = vmatpush.bf16.msra.mxu0 %v1022
      %1486 = vmatpush.bf16.msra.mxu0 %v1018
      %1487 = vmatpush.bf16.msra.mxu0 %v1014
      %1488 = vmatpush.bf16.msra.mxu0 %v1010
      %1489 = vmatpush.bf16.msra.mxu0 %v1006
      %1490 = vmatpush.bf16.msra.mxu0 %v1002
      %1491 = vmatpush.bf16.msra.mxu0 %v998
      %1492 = vmatmul.bf16.gmra.mxu0 %v396
      %v1493 = vpop.f32.mrf.mxu0
      %v1494 = vadd.f32 0.0, %v1493
      %v1495 = vpop.f32.mrf.mxu0
      %1496 = vdwg.mxu0
      %1497 = vmatpush.bf16.msra.mxu0 %v1058
      %1498 = vmatpush.bf16.msra.mxu0 %v1054
      %1499 = vmatpush.bf16.msra.mxu0 %v1050
      %1500 = vmatpush.bf16.msra.mxu0 %v1046
      %1501 = vmatpush.bf16.msra.mxu0 %v1042
      %1502 = vmatpush.bf16.msra.mxu0 %v1038
      %1503 = vmatpush.bf16.msra.mxu0 %v1034
      %1504 = vmatpush.bf16.msra.mxu0 %v1030
      %1505 = vmatmul.bf16.gmra.mxu0 %v397
      %v1506 = vpop.f32.mrf.mxu0
      %v1507 = vadd.f32 %v1494, %v1506
      %v1508 = vpop.f32.mrf.mxu0
      %1509 = vdwg.mxu0
      %1510 = vmatpush.bf16.msra.mxu0 %v1090
      %1511 = vmatpush.bf16.msra.mxu0 %v1086
      %1512 = vmatpush.bf16.msra.mxu0 %v1082
      %1513 = vmatpush.bf16.msra.mxu0 %v1078
      %1514 = vmatpush.bf16.msra.mxu0 %v1074
      %1515 = vmatpush.bf16.msra.mxu0 %v1070
      %1516 = vmatpush.bf16.msra.mxu0 %v1066
      %1517 = vmatpush.bf16.msra.mxu0 %v1062
      %1518 = vmatmul.bf16.gmra.mxu0 %v398
      %v1519 = vpop.f32.mrf.mxu0
      %v1520 = vadd.f32 %v1507, %v1519
      %v1521 = vpop.f32.mrf.mxu0
      %1522 = vdwg.mxu0
      %1523 = vmatpush.bf16.msra.mxu0 %v1122
      %1524 = vmatpush.bf16.msra.mxu0 %v1118
      %1525 = vmatpush.bf16.msra.mxu0 %v1114
      %1526 = vmatpush.bf16.msra.mxu0 %v1110
      %1527 = vmatpush.bf16.msra.mxu0 %v1106
      %1528 = vmatpush.bf16.msra.mxu0 %v1102
      %1529 = vmatpush.bf16.msra.mxu0 %v1098
      %1530 = vmatpush.bf16.msra.mxu0 %v1094
      %1531 = vmatmul.bf16.gmra.mxu0 %v399
      %v1532 = vpop.f32.mrf.mxu0
      %v1533 = vadd.f32 %v1520, %v1532
      %v1534 = vpop.f32.mrf.mxu0
      %1535 = vdwg.mxu0
      %1536 = vmatpush.bf16.msra.mxu0 %v1154
      %1537 = vmatpush.bf16.msra.mxu0 %v1150
      %1538 = vmatpush.bf16.msra.mxu0 %v1146
      %1539 = vmatpush.bf16.msra.mxu0 %v1142
      %1540 = vmatpush.bf16.msra.mxu0 %v1138
      %1541 = vmatpush.bf16.msra.mxu0 %v1134
      %1542 = vmatpush.bf16.msra.mxu0 %v1130
      %1543 = vmatpush.bf16.msra.mxu0 %v1126
      %1544 = vmatmul.bf16.gmra.mxu0 %v400
      %v1545 = vpop.f32.mrf.mxu0
      %v1546 = vadd.f32 %v1533, %v1545
      %v1547 = vpop.f32.mrf.mxu0
      %1548 = vdwg.mxu0
      %1549 = vmatpush.bf16.msra.mxu0 %v1186
      %1550 = vmatpush.bf16.msra.mxu0 %v1182
      %1551 = vmatpush.bf16.msra.mxu0 %v1178
      %1552 = vmatpush.bf16.msra.mxu0 %v1174
      %1553 = vmatpush.bf16.msra.mxu0 %v1170
      %1554 = vmatpush.bf16.msra.mxu0 %v1166
      %1555 = vmatpush.bf16.msra.mxu0 %v1162
      %1556 = vmatpush.bf16.msra.mxu0 %v1158
      %1557 = vmatmul.bf16.gmra.mxu0 %v401
      %v1558 = vpop.f32.mrf.mxu0
      %v1559 = vadd.f32 %v1546, %v1558
      %v1560 = vpop.f32.mrf.mxu0
      %1561 = vdwg.mxu0
      %1562 = vmatpush.bf16.msra.mxu0 0
      %1563 = vmatpush.bf16.msra.mxu0 0
      %1564 = vmatpush.bf16.msra.mxu0 0
      %1565 = vmatpush.bf16.msra.mxu0 0
      %1566 = vmatpush.bf16.msra.mxu0 0
      %1567 = vmatpush.bf16.msra.mxu0 0
      %1568 = vmatpush.bf16.msra.mxu0 0
      %1569 = vmatpush.bf16.msra.mxu0 %v1190
      %1570 = vmatmul.bf16.gmra.mxu0 %v1391
      %v1571 = vpop.f32.mrf.mxu0
      %v1572 = vadd.f32 %v1559, %v1571
      %v1573 = vpop.f32.mrf.mxu0
      %1574 = vdwg.mxu0
      %1575 = vmatpush.bf16.msra.mxu0 %v1027
      %1576 = vmatpush.bf16.msra.mxu0 %v1023
      %1577 = vmatpush.bf16.msra.mxu0 %v1019
      %1578 = vmatpush.bf16.msra.mxu0 %v1015
      %1579 = vmatpush.bf16.msra.mxu0 %v1011
      %1580 = vmatpush.bf16.msra.mxu0 %v1007
      %1581 = vmatpush.bf16.msra.mxu0 %v1003
      %1582 = vmatpush.bf16.msra.mxu0 %v999
      %1583 = vmatmul.bf16.gmra.mxu0 %v396
      %v1584 = vpop.f32.mrf.mxu0
      %v1585 = vadd.f32 0.0, %v1584
      %v1586 = vpop.f32.mrf.mxu0
      %1587 = vdwg.mxu0
      %1588 = vmatpush.bf16.msra.mxu0 %v1059
      %1589 = vmatpush.bf16.msra.mxu0 %v1055
      %1590 = vmatpush.bf16.msra.mxu0 %v1051
      %1591 = vmatpush.bf16.msra.mxu0 %v1047
      %1592 = vmatpush.bf16.msra.mxu0 %v1043
      %1593 = vmatpush.bf16.msra.mxu0 %v1039
      %1594 = vmatpush.bf16.msra.mxu0 %v1035
      %1595 = vmatpush.bf16.msra.mxu0 %v1031
      %1596 = vmatmul.bf16.gmra.mxu0 %v397
      %v1597 = vpop.f32.mrf.mxu0
      %v1598 = vadd.f32 %v1585, %v1597
      %v1599 = vpop.f32.mrf.mxu0
      %1600 = vdwg.mxu0
      %1601 = vmatpush.bf16.msra.mxu0 %v1091
      %1602 = vmatpush.bf16.msra.mxu0 %v1087
      %1603 = vmatpush.bf16.msra.mxu0 %v1083
      %1604 = vmatpush.bf16.msra.mxu0 %v1079
      %1605 = vmatpush.bf16.msra.mxu0 %v1075
      %1606 = vmatpush.bf16.msra.mxu0 %v1071
      %1607 = vmatpush.bf16.msra.mxu0 %v1067
      %1608 = vmatpush.bf16.msra.mxu0 %v1063
      %1609 = vmatmul.bf16.gmra.mxu0 %v398
      %v1610 = vpop.f32.mrf.mxu0
      %v1611 = vadd.f32 %v1598, %v1610
      %v1612 = vpop.f32.mrf.mxu0
      %1613 = vdwg.mxu0
      %1614 = vmatpush.bf16.msra.mxu0 %v1123
      %1615 = vmatpush.bf16.msra.mxu0 %v1119
      %1616 = vmatpush.bf16.msra.mxu0 %v1115
      %1617 = vmatpush.bf16.msra.mxu0 %v1111
      %1618 = vmatpush.bf16.msra.mxu0 %v1107
      %1619 = vmatpush.bf16.msra.mxu0 %v1103
      %1620 = vmatpush.bf16.msra.mxu0 %v1099
      %1621 = vmatpush.bf16.msra.mxu0 %v1095
      %1622 = vmatmul.bf16.gmra.mxu0 %v399
      %v1623 = vpop.f32.mrf.mxu0
      %v1624 = vadd.f32 %v1611, %v1623
      %v1625 = vpop.f32.mrf.mxu0
      %1626 = vdwg.mxu0
      %1627 = vmatpush.bf16.msra.mxu0 %v1155
      %1628 = vmatpush.bf16.msra.mxu0 %v1151
      %1629 = vmatpush.bf16.msra.mxu0 %v1147
      %1630 = vmatpush.bf16.msra.mxu0 %v1143
      %1631 = vmatpush.bf16.msra.mxu0 %v1139
      %1632 = vmatpush.bf16.msra.mxu0 %v1135
      %1633 = vmatpush.bf16.msra.mxu0 %v1131
      %1634 = vmatpush.bf16.msra.mxu0 %v1127
      %1635 = vmatmul.bf16.gmra.mxu0 %v400
      %v1636 = vpop.f32.mrf.mxu0
      %v1637 = vadd.f32 %v1624, %v1636
      %v1638 = vpop.f32.mrf.mxu0
      %1639 = vdwg.mxu0
      %1640 = vmatpush.bf16.msra.mxu0 %v1187
      %1641 = vmatpush.bf16.msra.mxu0 %v1183
      %1642 = vmatpush.bf16.msra.mxu0 %v1179
      %1643 = vmatpush.bf16.msra.mxu0 %v1175
      %1644 = vmatpush.bf16.msra.mxu0 %v1171
      %1645 = vmatpush.bf16.msra.mxu0 %v1167
      %1646 = vmatpush.bf16.msra.mxu0 %v1163
      %1647 = vmatpush.bf16.msra.mxu0 %v1159
      %1648 = vmatmul.bf16.gmra.mxu0 %v401
      %v1649 = vpop.f32.mrf.mxu0
      %v1650 = vadd.f32 %v1637, %v1649
      %v1651 = vpop.f32.mrf.mxu0
      %1652 = vdwg.mxu0
      %1653 = vmatpush.bf16.msra.mxu0 0
      %1654 = vmatpush.bf16.msra.mxu0 0
      %1655 = vmatpush.bf16.msra.mxu0 0
      %1656 = vmatpush.bf16.msra.mxu0 0
      %1657 = vmatpush.bf16.msra.mxu0 0
      %1658 = vmatpush.bf16.msra.mxu0 0
      %1659 = vmatpush.bf16.msra.mxu0 0
      %1660 = vmatpush.bf16.msra.mxu0 %v1191
      %1661 = vmatmul.bf16.gmra.mxu0 %v1391
      %v1662 = vpop.f32.mrf.mxu0
      %v1663 = vadd.f32 %v1650, %v1662
      %v1664 = vpop.f32.mrf.mxu0
      %1665 = vdwg.mxu0
      %1666 = vmatpush.bf16.msra.mxu0 %v1028
      %1667 = vmatpush.bf16.msra.mxu0 %v1024
      %1668 = vmatpush.bf16.msra.mxu0 %v1020
      %1669 = vmatpush.bf16.msra.mxu0 %v1016
      %1670 = vmatpush.bf16.msra.mxu0 %v1012
      %1671 = vmatpush.bf16.msra.mxu0 %v1008
      %1672 = vmatpush.bf16.msra.mxu0 %v1004
      %1673 = vmatpush.bf16.msra.mxu0 %v1000
      %1674 = vmatmul.bf16.gmra.mxu0 %v396
      %v1675 = vpop.f32.mrf.mxu0
      %v1676 = vadd.f32 0.0, %v1675
      %v1677 = vpop.f32.mrf.mxu0
      %1678 = vdwg.mxu0
      %1679 = vmatpush.bf16.msra.mxu0 %v1060
      %1680 = vmatpush.bf16.msra.mxu0 %v1056
      %1681 = vmatpush.bf16.msra.mxu0 %v1052
      %1682 = vmatpush.bf16.msra.mxu0 %v1048
      %1683 = vmatpush.bf16.msra.mxu0 %v1044
      %1684 = vmatpush.bf16.msra.mxu0 %v1040
      %1685 = vmatpush.bf16.msra.mxu0 %v1036
      %1686 = vmatpush.bf16.msra.mxu0 %v1032
      %1687 = vmatmul.bf16.gmra.mxu0 %v397
      %v1688 = vpop.f32.mrf.mxu0
      %v1689 = vadd.f32 %v1676, %v1688
      %v1690 = vpop.f32.mrf.mxu0
      %1691 = vdwg.mxu0
      %1692 = vmatpush.bf16.msra.mxu0 %v1092
      %1693 = vmatpush.bf16.msra.mxu0 %v1088
      %1694 = vmatpush.bf16.msra.mxu0 %v1084
      %1695 = vmatpush.bf16.msra.mxu0 %v1080
      %1696 = vmatpush.bf16.msra.mxu0 %v1076
      %1697 = vmatpush.bf16.msra.mxu0 %v1072
      %1698 = vmatpush.bf16.msra.mxu0 %v1068
      %1699 = vmatpush.bf16.msra.mxu0 %v1064
      %1700 = vmatmul.bf16.gmra.mxu0 %v398
      %v1701 = vpop.f32.mrf.mxu0
      %v1702 = vadd.f32 %v1689, %v1701
      %v1703 = vpop.f32.mrf.mxu0
      %1704 = vdwg.mxu0
      %1705 = vmatpush.bf16.msra.mxu0 %v1124
      %1706 = vmatpush.bf16.msra.mxu0 %v1120
      %1707 = vmatpush.bf16.msra.mxu0 %v1116
      %1708 = vmatpush.bf16.msra.mxu0 %v1112
      %1709 = vmatpush.bf16.msra.mxu0 %v1108
      %1710 = vmatpush.bf16.msra.mxu0 %v1104
      %1711 = vmatpush.bf16.msra.mxu0 %v1100
      %1712 = vmatpush.bf16.msra.mxu0 %v1096
      %1713 = vmatmul.bf16.gmra.mxu0 %v399
      %v1714 = vpop.f32.mrf.mxu0
      %v1715 = vadd.f32 %v1702, %v1714
      %v1716 = vpop.f32.mrf.mxu0
      %1717 = vdwg.mxu0
      %1718 = vmatpush.bf16.msra.mxu0 %v1156
      %1719 = vmatpush.bf16.msra.mxu0 %v1152
      %1720 = vmatpush.bf16.msra.mxu0 %v1148
      %1721 = vmatpush.bf16.msra.mxu0 %v1144
      %1722 = vmatpush.bf16.msra.mxu0 %v1140
      %1723 = vmatpush.bf16.msra.mxu0 %v1136
      %1724 = vmatpush.bf16.msra.mxu0 %v1132
      %1725 = vmatpush.bf16.msra.mxu0 %v1128
      %1726 = vmatmul.bf16.gmra.mxu0 %v400
      %v1727 = vpop.f32.mrf.mxu0
      %v1728 = vadd.f32 %v1715, %v1727
      %v1729 = vpop.f32.mrf.mxu0
      %1730 = vdwg.mxu0
      %1731 = vmatpush.bf16.msra.mxu0 %v1188
      %1732 = vmatpush.bf16.msra.mxu0 %v1184
      %1733 = vmatpush.bf16.msra.mxu0 %v1180
      %1734 = vmatpush.bf16.msra.mxu0 %v1176
      %1735 = vmatpush.bf16.msra.mxu0 %v1172
      %1736 = vmatpush.bf16.msra.mxu0 %v1168
      %1737 = vmatpush.bf16.msra.mxu0 %v1164
      %1738 = vmatpush.bf16.msra.mxu0 %v1160
      %1739 = vmatmul.bf16.gmra.mxu0 %v401
      %v1740 = vpop.f32.mrf.mxu0
      %v1741 = vadd.f32 %v1728, %v1740
      %v1742 = vpop.f32.mrf.mxu0
      %1743 = vdwg.mxu0
      %1744 = vmatpush.bf16.msra.mxu0 0
      %1745 = vmatpush.bf16.msra.mxu0 0
      %1746 = vmatpush.bf16.msra.mxu0 0
      %1747 = vmatpush.bf16.msra.mxu0 0
      %1748 = vmatpush.bf16.msra.mxu0 0
      %1749 = vmatpush.bf16.msra.mxu0 0
      %1750 = vmatpush.bf16.msra.mxu0 0
      %1751 = vmatpush.bf16.msra.mxu0 %v1192
      %1752 = vmatmul.bf16.gmra.mxu0 %v1391
      %v1753 = vpop.f32.mrf.mxu0
      %v1754 = vadd.f32 %v1741, %v1753
      %v1755 = vpop.f32.mrf.mxu0
      %1756 = vdwg.mxu0
      %1757 = vst [vmem:[%s178] sm:$0xff] %v1481
      %1758 = vst [vmem:[%s178 + $0x8] sm:$0xff] %v1572
      %1759 = vst [vmem:[%s178 + $0x10] sm:$0xff] %v1663
      %1760 = vst.msk [vmem:[%s178 + $0x18] sm:$0xff] %vm1389, %v1754
      %v1761 = vrot.slane %v1481, 4
      %v1762 = vadd.f32 %v1481, %v1761
      %v1763 = vrot.slane %v1762, 2
      %v1764 = vadd.f32 %v1762, %v1763
      %v1765 = vrot.slane %v1764, 1
      %v1766 = vadd.f32 %v1764, %v1765
      %v1767 = vrot.slane %v1572, 4
      %v1768 = vadd.f32 %v1572, %v1767
      %v1769 = vrot.slane %v1768, 2
      %v1770 = vadd.f32 %v1768, %v1769
      %v1771 = vrot.slane %v1770, 1
      %v1772 = vadd.f32 %v1770, %v1771
      %v1773 = vrot.slane %v1663, 4
      %v1774 = vadd.f32 %v1663, %v1773
      %v1775 = vrot.slane %v1774, 2
      %v1776 = vadd.f32 %v1774, %v1775
      %v1777 = vrot.slane %v1776, 1
      %v1778 = vadd.f32 %v1776, %v1777
      %v1779 = vsel %vm1389, %v1754, 0.0
      %v1780 = vrot.slane %v1779, 4
      %v1781 = vadd.f32 %v1779, %v1780
      %v1782 = vrot.slane %v1781, 2
      %v1783 = vadd.f32 %v1781, %v1782
      %v1784 = vrot.slane %v1783, 1
      %v1785 = vadd.f32 %v1783, %v1784
      %v1786 = vmul.f32 %v1481, %v1481
      %v1787 = vmul.f32 %v1572, %v1572
      %v1788 = vmul.f32 %v1663, %v1663
      %v1789 = vmul.f32 %v1754, %v1754
      %v1790 = vrot.slane %v1786, 4
      %v1791 = vadd.f32 %v1786, %v1790
      %v1792 = vrot.slane %v1791, 2
      %v1793 = vadd.f32 %v1791, %v1792
      %v1794 = vrot.slane %v1793, 1
      %v1795 = vadd.f32 %v1793, %v1794
      %v1796 = vrot.slane %v1787, 4
      %v1797 = vadd.f32 %v1787, %v1796
      %v1798 = vrot.slane %v1797, 2
      %v1799 = vadd.f32 %v1797, %v1798
      %v1800 = vrot.slane %v1799, 1
      %v1801 = vadd.f32 %v1799, %v1800
      %v1802 = vrot.slane %v1788, 4
      %v1803 = vadd.f32 %v1788, %v1802
      %v1804 = vrot.slane %v1803, 2
      %v1805 = vadd.f32 %v1803, %v1804
      %v1806 = vrot.slane %v1805, 1
      %v1807 = vadd.f32 %v1805, %v1806
      %v1808 = vsel %vm1389, %v1789, 0.0
      %v1809 = vrot.slane %v1808, 4
      %v1810 = vadd.f32 %v1808, %v1809
      %v1811 = vrot.slane %v1810, 2
      %v1812 = vadd.f32 %v1810, %v1811
      %v1813 = vrot.slane %v1812, 1
      %v1814 = vadd.f32 %v1812, %v1813
      %vm1815 = vcmask 1040384
      %v1816 = vsel %vm1815, %v1766, %v1795
      %v1817 = vsel %vm1815, %v1772, %v1801
      %v1818 = vsel %vm1815, %v1778, %v1807
      %v1819 = vsel %vm1815, %v1785, %v1814
      %v1824 = vrot.slane %v1817, 6
      %v1825 = vrot.slane %v1818, 4
      %v1826 = vrot.slane %v1819, 2
      %vm1827 = vcmask 1041408
      %v1828 = vsel %vm1827, %v1816, %v1824
      %vm1829 = vcmask 1045508
      %v1830 = vsel %vm1829, %v1825, %v1826
      %vm1831 = vcmask 1043456
      %v1832 = vsel %vm1831, %v1828, %v1830
      %vm1834 = vcmask 1043458
      %vm1835 = vmor %vm1834, %vm1827
      %vm1836 = vmor %vm1829, %vm1835
      %vm1837 = vcmask 130054
      %vm1838 = vmor %vm1837, %vm1836
      %1839 = vst.msk [vmem:[%s183] sm:$0xff] %vm1838, %v1832
      %p1840 = scmp.lt.s32.totalorder %s15, 1
      %s1841 = scalar_select %p1840, %s15, 1
      %s1842 = smul.addr %s1841, 4
      %s1843 = smul.addr %s1842, 8
      %s1844 = scalar_lea.vmem %s2, %s1843
      %p1845 = scmp.lt.s32.totalorder %s15, 1
      %s1846 = scalar_select %p1845, %s15, 1
      %s1847 = smul.addr %s1846, 4
      %s1848 = smul.addr %s1847, 2
      %s1849 = scalar_lea.vmem %s3, %s1848
      // Predicated region
      $region29: #{vae_forward.3} parent=27 // pred_check
        %p1850 = pneg %p80
      $region30: #{vae_forward.3} parent=27 // pred_check_branch
        %1852 = sbr.rel (%p1850) target = $region32
      $region31: #{vae_forward.3} parent=27 // pred_region
        _
      $region32: #{vae_forward.3} parent=27 // pred_fallthru
        _
      // Predicated region
      $region33: #{vae_forward.3} parent=27 // pred_check
        %p1853 = pneg %p106
      $region34: #{vae_forward.3} parent=27 // pred_check_branch
        %1855 = sbr.rel (%p1853) target = $region36
      $region35: #{vae_forward.3} parent=27 // pred_region
        _
      $region36: #{vae_forward.3} parent=27 // pred_fallthru
        _
    $region28: #{vae_forward.3} parent=5 // pred_fallthru
      _
    %p1856 = scmp.le.s32.totalorder 2, %s10
    // Predicated region
    $region37: #{vae_forward.3} parent=5 // pred_check
      %p1857 = pneg %p1856
    $region38: #{vae_forward.3} parent=5 // pred_check_branch
      %1859 = sbr.rel (%p1857) target = $region40
    $region39: #{vae_forward.3} parent=5 // pred_region
      %s1860 = ssub.s32 %s10, 2
      // Predicated region
      $region41: #{vae_forward.3} parent=39 // pred_check
        %p1861 = pneg %p86
      $region42: #{vae_forward.3} parent=39 // pred_check_branch
        %1863 = sbr.rel (%p1861) target = $region44
      $region43: #{vae_forward.3} parent=39 // pred_region
        %p1864 = scmp.lt.s32.totalorder %s16, 1
        %s1865 = scalar_select %p1864, %s16, 1
        %s1866 = smul.addr %s1865, 4
        %s1867 = smul.addr %s1866, 8
        %s1868 = scalar_lea.vmem %s2, %s1867
      $region44: #{vae_forward.3} parent=39 // pred_fallthru
        _
      // Predicated region
      $region45: #{vae_forward.3} parent=39 // pred_check
        %p1869 = pneg %p112
      $region46: #{vae_forward.3} parent=39 // pred_check_branch
        %1871 = sbr.rel (%p1869) target = $region48
      $region47: #{vae_forward.3} parent=39 // pred_region
        %p1872 = scmp.lt.s32.totalorder %s16, 1
        %s1873 = scalar_select %p1872, %s16, 1
        %s1874 = smul.addr %s1873, 4
        %s1875 = smul.addr %s1874, 2
        %s1876 = scalar_lea.vmem %s3, %s1875
      $region48: #{vae_forward.3} parent=39 // pred_fallthru
        _
    $region40: #{vae_forward.3} parent=5 // pred_fallthru
      _
  $region6: #{vae_forward.3} parent=0 // loop_footer
    %s14 = sadd.s32 1, %s10
  $region7: #{vae_forward.3} parent=0 // loop_footer_branch
    %9 = sbr.rel target = $region3
  $region8: #{vae_forward.3} parent=0 // loop_exit
    _

// kernel: vae_forward.4
$region0: #{vae_forward.4}
  #allocation0 [shape = 'u32[]', space=smem, size = 0x4, offset = 0x4, fixed_abs, tag = 'smem constant byte address 0x4 - core index']
  #allocation1 [shape = 'u32[72,128]{1,0:T(1,128)}', space=vmem, size = 0x9000, scoped, tag = 'internal scratch']
  %s0 = inlined_call_operand.vmem [shape: f32[16,400], index: 0, kind: input, shape index: {}]
  %s1 = inlined_call_operand.vmem [shape: f32[16,32], index: 1, kind: input, shape index: {}]
  %s2 = inlined_call_operand.vmem [shape: f32[2,2,400], index: 2, kind: input, shape index: {}]
  %s3 = inlined_call_operand.vmem [shape: f32[2,400], index: 3, kind: input, shape index: {}]
  %s4 = inlined_call_operand.vmem [shape: bf16[400,64], index: 4, kind: input, shape index: {}]
  %s5 = inlined_call_operand.vmem [shape: f32[1,64], index: 5, kind: input, shape index: {}]
  %s6 = inlined_call_operand.vmem [shape: bf16[32,400], index: 6, kind: input, shape index: {}]
  %s7 = inlined_call_operand.vmem [shape: f32[16,64], index: 7, kind: output, shape index: {0}]
  %s8 = inlined_call_operand.vmem [shape: bf16[16,32], index: 8, kind: output, shape index: {1}]
  %s9 = inlined_call_operand.vmem [shape: f32[2,2,400], index: 9, kind: output, shape index: {2}]
  %10 = xla_tuple %s7, %s8, %s9
  %s11 = sld [smem:[#allocation0]]
  $region77: #{vae_forward.4} parent=0
    _
  %s13 = ssub.s32 1, %s11
  %s14 = scalar_select 0, %s13, %s11
  loop: start=0, step=1, limit=4
  $region2: #{vae_forward.4} parent=0 // loop_pre_header
    _
  $region3: #{vae_forward.4} parent=0 // loop_header
    %s16 = sphi 0, %s20
    %p17 = scmp.ge.s32.totalorder %s16, 4
    %s26 = sphi 0, %s28
    %s29 = sphi 0, %s26
    %s30 = sphi 0, %s29
    %s46 = sphi 0, %s30
    %s52 = sphi 0, %s54
    %s55 = sphi 0, %s52
    %s56 = sphi 0, %s55
    %s72 = sphi 0, %s56
    %s76 = sphi 0, %s76
    %s78 = sphi 0, %s76
    %s79 = sphi 0, %s78
    %s93 = sphi 0, %s79
    %s97 = sphi 0, %s97
    %s99 = sphi 0, %s97
    %s100 = sphi 0, %s99
    %s114 = sphi 0, %s100
    %s118 = sphi 0, %s118
    %s120 = sphi 0, %s118
    %s121 = sphi 0, %s120
    %s135 = sphi 0, %s121
    %s139 = sphi 0, %s139
    %s141 = sphi 0, %s139
    %s142 = sphi 0, %s141
    %s156 = sphi 0, %s142
    %s160 = sphi 0, %s160
    %s162 = sphi 0, %s160
    %s163 = sphi 0, %s162
    %s177 = sphi 0, %s163
    %s183 = sphi 0, %s185
    %s186 = sphi 0, %s183
    %s187 = sphi 0, %s186
    %s203 = sphi 0, %s187
    %s209 = sphi 0, %s211
    %s212 = sphi 0, %s209
    %s213 = sphi 0, %s212
    %s229 = sphi 0, %s213
    %s235 = sphi 0, %s237
    %s238 = sphi 0, %s235
    %s239 = sphi 0, %s238
    %s255 = sphi 0, %s239
  $region4: #{vae_forward.4} parent=0 // loop_header_branch
    %19 = sbr.rel (%p17) target = $region8
  $region5: #{vae_forward.4} parent=0 // loop_body
    %s21 = ssub.s32 %s16, 1
    %s22 = ssub.s32 %s16, 2
    %s23 = sadd.s32 %s16, 1
    %s24 = ssub.s32 %s16, %s23
    %p25 = scmp.eq.s32.totalorder %s24, 0
    %s27 = sadd.s32 %s26, 1
    %s28 = scalar_select %p25, %s26, %s27
    %p31 = pneg %p25
    %p32 = scmp.eq.s32.totalorder %s16, 1
    %p33 = por %p31, %p32
    %p34 = scmp.ne.s32.totalorder %s26, %s29
    %p35 = scmp.eq.s32.totalorder %s16, 0
    %p36 = por %p34, %p35
    %p37 = scmp.ne.s32.totalorder %s26, %s29
    %p38 = scmp.eq.s32.totalorder %s21, 1
    %p39 = por %p37, %p38
    %p40 = scmp.ne.s32.totalorder %s29, %s30
    %p41 = scmp.eq.s32.totalorder %s21, 0
    %p42 = por %p40, %p41
    %p43 = scmp.ne.s32.totalorder %s29, %s30
    %p44 = scmp.eq.s32.totalorder %s22, 1
    %p45 = por %p43, %p44
    %p47 = scmp.ne.s32.totalorder %s30, %s46
    %p48 = scmp.eq.s32.totalorder %s22, 0
    %p49 = por %p47, %p48
    %s50 = ssub.s32 %s16, %s23
    %p51 = scmp.eq.s32.totalorder %s50, 0
    %s53 = sadd.s32 %s52, 1
    %s54 = scalar_select %p51, %s52, %s53
    %p57 = pneg %p51
    %p58 = scmp.eq.s32.totalorder %s16, 1
    %p59 = por %p57, %p58
    %p60 = scmp.ne.s32.totalorder %s52, %s55
    %p61 = scmp.eq.s32.totalorder %s16, 0
    %p62 = por %p60, %p61
    %p63 = scmp.ne.s32.totalorder %s52, %s55
    %p64 = scmp.eq.s32.totalorder %s21, 1
    %p65 = por %p63, %p64
    %p66 = scmp.ne.s32.totalorder %s55, %s56
    %p67 = scmp.eq.s32.totalorder %s21, 0
    %p68 = por %p66, %p67
    %p69 = scmp.ne.s32.totalorder %s55, %s56
    %p70 = scmp.eq.s32.totalorder %s22, 1
    %p71 = por %p69, %p70
    %p73 = scmp.ne.s32.totalorder %s56, %s72
    %p74 = scmp.eq.s32.totalorder %s22, 0
    %p75 = por %p73, %p74
    %s77 = sadd.s32 %s76, 1
    %p80 = scmp.eq.s32.totalorder %s16, 1
    %p81 = scmp.ne.s32.totalorder %s76, %s78
    %p82 = scmp.eq.s32.totalorder %s16, 0
    %p83 = por %p81, %p82
    %p84 = scmp.ne.s32.totalorder %s76, %s78
    %p85 = scmp.eq.s32.totalorder %s21, 1
    %p86 = por %p84, %p85
    %p87 = scmp.ne.s32.totalorder %s78, %s79
    %p88 = scmp.eq.s32.totalorder %s21, 0
    %p89 = por %p87, %p88
    %p90 = scmp.ne.s32.totalorder %s78, %s79
    %p91 = scmp.eq.s32.totalorder %s22, 1
    %p92 = por %p90, %p91
    %p94 = scmp.ne.s32.totalorder %s79, %s93
    %p95 = scmp.eq.s32.totalorder %s22, 0
    %p96 = por %p94, %p95
    %s98 = sadd.s32 %s97, 1
    %p101 = scmp.eq.s32.totalorder %s16, 1
    %p102 = scmp.ne.s32.totalorder %s97, %s99
    %p103 = scmp.eq.s32.totalorder %s16, 0
    %p104 = por %p102, %p103
    %p105 = scmp.ne.s32.totalorder %s97, %s99
    %p106 = scmp.eq.s32.totalorder %s21, 1
    %p107 = por %p105, %p106
    %p108 = scmp.ne.s32.totalorder %s99, %s100
    %p109 = scmp.eq.s32.totalorder %s21, 0
    %p110 = por %p108, %p109
    %p111 = scmp.ne.s32.totalorder %s99, %s100
    %p112 = scmp.eq.s32.totalorder %s22, 1
    %p113 = por %p111, %p112
    %p115 = scmp.ne.s32.totalorder %s100, %s114
    %p116 = scmp.eq.s32.totalorder %s22, 0
    %p117 = por %p115, %p116
    %s119 = sadd.s32 %s118, 1
    %p122 = scmp.eq.s32.totalorder %s16, 1
    %p123 = scmp.ne.s32.totalorder %s118, %s120
    %p124 = scmp.eq.s32.totalorder %s16, 0
    %p125 = por %p123, %p124
    %p126 = scmp.ne.s32.totalorder %s118, %s120
    %p127 = scmp.eq.s32.totalorder %s21, 1
    %p128 = por %p126, %p127
    %p129 = scmp.ne.s32.totalorder %s120, %s121
    %p130 = scmp.eq.s32.totalorder %s21, 0
    %p131 = por %p129, %p130
    %p132 = scmp.ne.s32.totalorder %s120, %s121
    %p133 = scmp.eq.s32.totalorder %s22, 1
    %p134 = por %p132, %p133
    %p136 = scmp.ne.s32.totalorder %s121, %s135
    %p137 = scmp.eq.s32.totalorder %s22, 0
    %p138 = por %p136, %p137
    %s140 = sadd.s32 %s139, 1
    %p143 = scmp.eq.s32.totalorder %s16, 1
    %p144 = scmp.ne.s32.totalorder %s139, %s141
    %p145 = scmp.eq.s32.totalorder %s16, 0
    %p146 = por %p144, %p145
    %p147 = scmp.ne.s32.totalorder %s139, %s141
    %p148 = scmp.eq.s32.totalorder %s21, 1
    %p149 = por %p147, %p148
    %p150 = scmp.ne.s32.totalorder %s141, %s142
    %p151 = scmp.eq.s32.totalorder %s21, 0
    %p152 = por %p150, %p151
    %p153 = scmp.ne.s32.totalorder %s141, %s142
    %p154 = scmp.eq.s32.totalorder %s22, 1
    %p155 = por %p153, %p154
    %p157 = scmp.ne.s32.totalorder %s142, %s156
    %p158 = scmp.eq.s32.totalorder %s22, 0
    %p159 = por %p157, %p158
    %s161 = sadd.s32 %s160, 1
    %p164 = scmp.eq.s32.totalorder %s16, 1
    %p165 = scmp.ne.s32.totalorder %s160, %s162
    %p166 = scmp.eq.s32.totalorder %s16, 0
    %p167 = por %p165, %p166
    %p168 = scmp.ne.s32.totalorder %s160, %s162
    %p169 = scmp.eq.s32.totalorder %s21, 1
    %p170 = por %p168, %p169
    %p171 = scmp.ne.s32.totalorder %s162, %s163
    %p172 = scmp.eq.s32.totalorder %s21, 0
    %p173 = por %p171, %p172
    %p174 = scmp.ne.s32.totalorder %s162, %s163
    %p175 = scmp.eq.s32.totalorder %s22, 1
    %p176 = por %p174, %p175
    %p178 = scmp.ne.s32.totalorder %s163, %s177
    %p179 = scmp.eq.s32.totalorder %s22, 0
    %p180 = por %p178, %p179
    %s181 = ssub.s32 %s16, %s23
    %p182 = scmp.eq.s32.totalorder %s181, 0
    %s184 = sadd.s32 %s183, 1
    %s185 = scalar_select %p182, %s183, %s184
    %p188 = pneg %p182
    %p189 = scmp.eq.s32.totalorder %s16, 1
    %p190 = por %p188, %p189
    %p191 = scmp.ne.s32.totalorder %s183, %s186
    %p192 = scmp.eq.s32.totalorder %s16, 0
    %p193 = por %p191, %p192
    %p194 = scmp.ne.s32.totalorder %s183, %s186
    %p195 = scmp.eq.s32.totalorder %s21, 1
    %p196 = por %p194, %p195
    %p197 = scmp.ne.s32.totalorder %s186, %s187
    %p198 = scmp.eq.s32.totalorder %s21, 0
    %p199 = por %p197, %p198
    %p200 = scmp.ne.s32.totalorder %s186, %s187
    %p201 = scmp.eq.s32.totalorder %s22, 1
    %p202 = por %p200, %p201
    %p204 = scmp.ne.s32.totalorder %s187, %s203
    %p205 = scmp.eq.s32.totalorder %s22, 0
    %p206 = por %p204, %p205
    %s207 = ssub.s32 %s16, %s23
    %p208 = scmp.eq.s32.totalorder %s207, 0
    %s210 = sadd.s32 %s209, 1
    %s211 = scalar_select %p208, %s209, %s210
    %p214 = pneg %p208
    %p215 = scmp.eq.s32.totalorder %s16, 1
    %p216 = por %p214, %p215
    %p217 = scmp.ne.s32.totalorder %s209, %s212
    %p218 = scmp.eq.s32.totalorder %s16, 0
    %p219 = por %p217, %p218
    %p220 = scmp.ne.s32.totalorder %s209, %s212
    %p221 = scmp.eq.s32.totalorder %s21, 1
    %p222 = por %p220, %p221
    %p223 = scmp.ne.s32.totalorder %s212, %s213
    %p224 = scmp.eq.s32.totalorder %s21, 0
    %p225 = por %p223, %p224
    %p226 = scmp.ne.s32.totalorder %s212, %s213
    %p227 = scmp.eq.s32.totalorder %s22, 1
    %p228 = por %p226, %p227
    %p230 = scmp.ne.s32.totalorder %s213, %s229
    %p231 = scmp.eq.s32.totalorder %s22, 0
    %p232 = por %p230, %p231
    %s233 = ssub.s32 %s16, %s23
    %p234 = scmp.eq.s32.totalorder %s233, 0
    %s236 = sadd.s32 %s235, 1
    %s237 = scalar_select %p234, %s235, %s236
    %p240 = pneg %p234
    %p241 = scmp.eq.s32.totalorder %s16, 1
    %p242 = por %p240, %p241
    %p243 = scmp.ne.s32.totalorder %s235, %s238
    %p244 = scmp.eq.s32.totalorder %s16, 0
    %p245 = por %p243, %p244
    %p246 = scmp.ne.s32.totalorder %s235, %s238
    %p247 = scmp.eq.s32.totalorder %s21, 1
    %p248 = por %p246, %p247
    %p249 = scmp.ne.s32.totalorder %s238, %s239
    %p250 = scmp.eq.s32.totalorder %s21, 0
    %p251 = por %p249, %p250
    %p252 = scmp.ne.s32.totalorder %s238, %s239
    %p253 = scmp.eq.s32.totalorder %s22, 1
    %p254 = por %p252, %p253
    %p256 = scmp.ne.s32.totalorder %s239, %s255
    %p257 = scmp.eq.s32.totalorder %s22, 0
    %p258 = por %p256, %p257
    %p259 = scmp.le.s32.totalorder 1, %s16
    %p260 = scmp.lt.s32.totalorder %s16, 3
    %p261 = pnand %p259, %p260
    %p262 = pneg %p261
    // Predicated region
    $region9: #{vae_forward.4} parent=5 // pred_check
      _
    $region10: #{vae_forward.4} parent=5 // pred_check_branch
      %264 = sbr.rel (%p261) target = $region12
    $region11: #{vae_forward.4} parent=5 // pred_region
      %s265 = ssub.s32 %s16, 1
      // Predicated region
      $region13: #{vae_forward.4} parent=11 // pred_check
        %p266 = pneg %p89
      $region14: #{vae_forward.4} parent=11 // pred_check_branch
        %268 = sbr.rel (%p266) target = $region16
      $region15: #{vae_forward.4} parent=11 // pred_region
        _
      $region16: #{vae_forward.4} parent=11 // pred_fallthru
        _
      // Predicated region
      $region17: #{vae_forward.4} parent=11 // pred_check
        %p269 = pneg %p110
      $region18: #{vae_forward.4} parent=11 // pred_check_branch
        %271 = sbr.rel (%p269) target = $region20
      $region19: #{vae_forward.4} parent=11 // pred_region
        _
      $region20: #{vae_forward.4} parent=11 // pred_fallthru
        _
      // Predicated region
      $region21: #{vae_forward.4} parent=11 // pred_check
        %p272 = pneg %p131
      $region22: #{vae_forward.4} parent=11 // pred_check_branch
        %274 = sbr.rel (%p272) target = $region24
      $region23: #{vae_forward.4} parent=11 // pred_region
        _
      $region24: #{vae_forward.4} parent=11 // pred_fallthru
        _
      // Predicated region
      $region25: #{vae_forward.4} parent=11 // pred_check
        %p275 = pneg %p152
      $region26: #{vae_forward.4} parent=11 // pred_check_branch
        %277 = sbr.rel (%p275) target = $region28
      $region27: #{vae_forward.4} parent=11 // pred_region
        _
      $region28: #{vae_forward.4} parent=11 // pred_fallthru
        _
      // Predicated region
      $region29: #{vae_forward.4} parent=11 // pred_check
        %p278 = pneg %p173
      $region30: #{vae_forward.4} parent=11 // pred_check_branch
        %280 = sbr.rel (%p278) target = $region32
      $region31: #{vae_forward.4} parent=11 // pred_region
        _
      $region32: #{vae_forward.4} parent=11 // pred_fallthru
        _
    $region12: #{vae_forward.4} parent=5 // pred_fallthru
      _
    %p281 = scmp.lt.s32.totalorder %s16, 2
    // Predicated region
    $region33: #{vae_forward.4} parent=5 // pred_check
      %p282 = pneg %p281
    $region34: #{vae_forward.4} parent=5 // pred_check_branch
      %284 = sbr.rel (%p282) target = $region36
    $region35: #{vae_forward.4} parent=5 // pred_region
      // Predicated region
      $region37: #{vae_forward.4} parent=35 // pred_check
        %p285 = pneg %p36
      $region38: #{vae_forward.4} parent=35 // pred_check_branch
        %287 = sbr.rel (%p285) target = $region40
      $region39: #{vae_forward.4} parent=35 // pred_region
        %p288 = scmp.lt.s32.totalorder %s16, 1
        %s289 = scalar_select %p288, %s16, 1
        %s290 = smul.addr %s289, 4
        %s291 = smul.addr %s290, 8
        %s292 = scalar_lea.vmem %s0, %s291
      $region40: #{vae_forward.4} parent=35 // pred_fallthru
        _
      // Predicated region
      $region41: #{vae_forward.4} parent=35 // pred_check
        %p293 = pneg %p62
      $region42: #{vae_forward.4} parent=35 // pred_check_branch
        %295 = sbr.rel (%p293) target = $region44
      $region43: #{vae_forward.4} parent=35 // pred_region
        %p296 = scmp.lt.s32.totalorder %s16, 1
        %s297 = scalar_select %p296, %s16, 1
        %s298 = smul.addr %s297, 8
        %s299 = scalar_lea.vmem %s1, %s298
      $region44: #{vae_forward.4} parent=35 // pred_fallthru
        _
    $region36: #{vae_forward.4} parent=5 // pred_fallthru
      _
    %p300 = scmp.le.s32.totalorder 1, %s16
    %p301 = scmp.lt.s32.totalorder %s16, 3
    %p302 = pnand %p300, %p301
    %p303 = pneg %p302
    // Predicated region
    $region45: #{vae_forward.4} parent=5 // pred_check
      _
    $region46: #{vae_forward.4} parent=5 // pred_check_branch
      %305 = sbr.rel (%p302) target = $region48
    $region47: #{vae_forward.4} parent=5 // pred_region
      %s306 = ssub.s32 %s16, 1
      %p307 = scmp.lt.s32.totalorder %s21, 1
      %s308 = scalar_select %p307, %s21, 1
      %s309 = smul.addr %s308, 4
      %s310 = smul.addr %s309, 8
      %s311 = scalar_lea.vmem %s0, %s310
      %p312 = pneg %p42
      %p313 = pneg %p39
      %p314 = scmp.lt.s32.totalorder %s21, 1
      %s315 = scalar_select %p314, %s21, 1
      %s316 = smul.addr %s315, 8
      %s317 = scalar_lea.vmem %s1, %s316
      %p318 = pneg %p68
      %p319 = pneg %p65
      %p320 = pneg %p89
      %p321 = pneg %p86
      %p322 = pneg %p110
      %p323 = pneg %p107
      %p324 = pneg %p131
      %p325 = pneg %p128
      %p326 = pneg %p152
      %p327 = pneg %p149
      %p328 = pneg %p173
      %p329 = pneg %p170
      %p330 = pneg %p199
      %p331 = pneg %p196
      %p332 = scmp.lt.s32.totalorder %s21, 1
      %s333 = scalar_select %p332, %s21, 1
      %s334 = smul.addr %s333, 8
      %s335 = scalar_lea.vmem %s7, %s334
      %p336 = pneg %p225
      %p337 = pneg %p222
      %p338 = scmp.lt.s32.totalorder %s21, 1
      %s339 = scalar_select %p338, %s21, 1
      %s340 = smul.addr %s339, 4
      %s341 = scalar_lea.vmem %s8, %s340
      %p342 = pneg %p251
      %p343 = pneg %p248
      %p344 = scmp.lt.s32.totalorder %s21, 1
      %s345 = scalar_select %p344, %s21, 1
      %s346 = smul.addr %s345, 4
      %s347 = smul.addr %s346, 2
      %s348 = scalar_lea.vmem %s9, %s347
      %p349 = scmp.lt.s32.totalorder %s21, 1
      %s350 = scalar_select %p349, %s21, 1
      %s351 = smul.addr %s350, 4
      %s352 = smul.addr %s351, 8
      %s353 = scalar_lea.vmem %s0, %s352
      %p354 = scmp.lt.s32.totalorder %s21, 1
      %s355 = scalar_select %p354, %s21, 1
      %s356 = smul.addr %s355, 8
      %s357 = scalar_lea.vmem %s1, %s356
      %p358 = scmp.lt.s32.totalorder %s21, 1
      %s359 = scalar_select %p358, %s21, 1
      %s360 = smul.addr %s359, 8
      %s361 = scalar_lea.vmem %s7, %s360
      %p362 = scmp.lt.s32.totalorder %s21, 1
      %s363 = scalar_select %p362, %s21, 1
      %s364 = smul.addr %s363, 4
      %s365 = scalar_lea.vmem %s8, %s364
      %p366 = scmp.lt.s32.totalorder %s21, 1
      %s367 = scalar_select %p366, %s21, 1
      %s368 = smul.addr %s367, 4
      %s369 = smul.addr %s368, 2
      %s370 = scalar_lea.vmem %s9, %s369
      %v372 = vld [vmem:[%s2] sm:$0xff]
      %s373 = scalar_lea.vmem %s2, 8
      %v374 = vld [vmem:[%s373] sm:$0xff]
      %v375 = vadd.f32 %v372, %v374
      %v376 = vmul.f32 %v375, 0.0625
      %v377 = vmul.f32 %v376, %v376
      %v379 = vrot.slane %v377, 7
      %v381 = vsub.f32 %v376, %v379
      %v382 = vmax.f32 %v381, 0.0
      %v383 = vld [vmem:[%s3] ss:$2 sm:$0xf]
      %v384 = vadd.f32 %v382, 1e-05
      %v385 = vrsqrt.pop %v384
      %v386 = vmul.f32 %v385, %v384
      %v387 = vmul.f32 %v386, %v385
      %v388 = vmul.f32 0.5, %v387
      %v389 = vsub.f32 1.5, %v388
      %v390 = vmul.f32 %v385, %v389
      %vm391 = vweird.f32 %v384
      %vm392 = vweird.f32 %v385
      %vm393 = vmor %vm391, %vm392
      %v394 = vsel %vm393, %v385, %v390
      %396 = vst [vmem:[#allocation1] sm:$0xff] %v394
      %s397 = scalar_lea.vmem [#allocation1], 1
      %v398 = vld [vmem:[%s397] ss:$2 sm:$0xff]
      %v400 = vmul.f32 %v383, %v398
      %s401 = scalar_lea.vmem %s3, 1
      %v402 = vld [vmem:[%s401] ss:$2 sm:$0xf]
      %v405 = vunpack.c.l.s4 857870592
      %v406 = vunpack.c.0.s8 %v405
      %v407 = vperm.slane %v400, %v406
      %v409 = vmul.f32 %v376, %v407
      %v411 = vrot.slane %v409, 1
      %v412 = vrot.slane %v409, 2
      %v413 = vrot.slane %v409, 3
      %vm414 = vcmask 1040384
      %v415 = vsel %vm414, %v409, %v411
      %vm416 = vcmask 1042434
      %v417 = vsel %vm416, %v412, %v413
      %vm418 = vcmask 1041408
      %v419 = vsel %vm418, %v415, %v417
      %v421 = vsub.f32 %v402, %v419
      %v422 = vld [vmem:[%s353] sm:$0xff]
      %v423 = vld [vmem:[%s353 + $0x8] sm:$0xff]
      %v424 = vld [vmem:[%s353 + $0x10] sm:$0xff]
      %v425 = vld [vmem:[%s353 + $0x18] sm:$0xff]
      %v426 = vperm.slane %v400, 0
      %v427 = vperm.slane %v400, 1
      %v428 = vperm.slane %v400, 2
      %v429 = vperm.slane %v400, 3
      %v434 = vmul.f32 %v422, %v426
      %v435 = vmul.f32 %v423, %v427
      %v436 = vmul.f32 %v424, %v428
      %v437 = vmul.f32 %v425, %v429
      %v439 = vperm.slane %v421, 0
      %v440 = vperm.slane %v421, 1
      %v441 = vperm.slane %v421, 2
      %v442 = vperm.slane %v421, 3
      %v447 = vadd.f32 %v434, %v439
      %v448 = vadd.f32 %v435, %v440
      %v449 = vadd.f32 %v436, %v441
      %v450 = vadd.f32 %v437, %v442
      %v451 = vmax.f32 %v447, 0.0
      %v452 = vmax.f32 %v448, 0.0
      %v453 = vmax.f32 %v449, 0.0
      %v454 = vmax.f32 %v450, 0.0
      %v455 = vpack.c.bf16 %v451, %v451
      %v456 = vpack.c.bf16 %v452, %v452
      %v457 = vpack.c.bf16 %v453, %v453
      %v458 = vpack.c.bf16 %v454, %v454
      %v459 = vld [vmem:[%s4] sm:$0xf]
      %v460 = vld [vmem:[%s4 + $0x4] sm:$0xf]
      %v461 = vld [vmem:[%s4 + $0x8] sm:$0xf]
      %v462 = vld [vmem:[%s4 + $0xc] sm:$0xf]
      %v463 = vld [vmem:[%s4 + $0x10] sm:$0xf]
      %v464 = vld [vmem:[%s4 + $0x14] sm:$0xf]
      %v465 = vld [vmem:[%s4 + $0x18] sm:$0xf]
      %v466 = vld [vmem:[%s4 + $0x1c] sm:$0xf]
      %v467 = vld [vmem:[%s4 + $0x20] sm:$0xf]
      %v468 = vld [vmem:[%s4 + $0x24] sm:$0xf]
      %v469 = vld [vmem:[%s4 + $0x28] sm:$0xf]
      %v470 = vld [vmem:[%s4 + $0x2c] sm:$0xf]
      %v471 = vld [vmem:[%s4 + $0x30] sm:$0xf]
      %v472 = vld [vmem:[%s4 + $0x34] sm:$0xf]
      %v473 = vld [vmem:[%s4 + $0x38] sm:$0xf]
      %v474 = vld [vmem:[%s4 + $0x3c] sm:$0xf]
      %v475 = vld [vmem:[%s4 + $0x40] sm:$0xf]
      %v476 = vld [vmem:[%s4 + $0x44] sm:$0xf]
      %v477 = vld [vmem:[%s4 + $0x48] sm:$0xf]
      %v478 = vld [vmem:[%s4 + $0x4c] sm:$0xf]
      %v479 = vld [vmem:[%s4 + $0x50] sm:$0xf]
      %v480 = vld [vmem:[%s4 + $0x54] sm:$0xf]
      %v481 = vld [vmem:[%s4 + $0x58] sm:$0xf]
      %v482 = vld [vmem:[%s4 + $0x5c] sm:$0xf]
      %v483 = vld [vmem:[%s4 + $0x60] sm:$0xf]
      %v484 = vld [vmem:[%s4 + $0x64] sm:$0xf]
      %v485 = vld [vmem:[%s4 + $0x68] sm:$0xf]
      %v486 = vld [vmem:[%s4 + $0x6c] sm:$0xf]
      %v487 = vld [vmem:[%s4 + $0x70] sm:$0xf]
      %v488 = vld [vmem:[%s4 + $0x74] sm:$0xf]
      %v489 = vld [vmem:[%s4 + $0x78] sm:$0xf]
      %v490 = vld [vmem:[%s4 + $0x7c] sm:$0xf]
      %v491 = vld [vmem:[%s4 + $0x80] sm:$0xf]
      %v492 = vld [vmem:[%s4 + $0x84] sm:$0xf]
      %v493 = vld [vmem:[%s4 + $0x88] sm:$0xf]
      %v494 = vld [vmem:[%s4 + $0x8c] sm:$0xf]
      %v495 = vld [vmem:[%s4 + $0x90] sm:$0xf]
      %v496 = vld [vmem:[%s4 + $0x94] sm:$0xf]
      %v497 = vld [vmem:[%s4 + $0x98] sm:$0xf]
      %v498 = vld [vmem:[%s4 + $0x9c] sm:$0xf]
      %v499 = vld [vmem:[%s4 + $0xa0] sm:$0xf]
      %v500 = vld [vmem:[%s4 + $0xa4] sm:$0xf]
      %v501 = vld [vmem:[%s4 + $0xa8] sm:$0xf]
      %v502 = vld [vmem:[%s4 + $0xac] sm:$0xf]
      %v503 = vld [vmem:[%s4 + $0xb0] sm:$0xf]
      %v504 = vld [vmem:[%s4 + $0xb4] sm:$0xf]
      %v505 = vld [vmem:[%s4 + $0xb8] sm:$0xf]
      %v506 = vld [vmem:[%s4 + $0xbc] sm:$0xf]
      %v507 = vld [vmem:[%s4 + $0xc0] sm:$0xf]
      %v508 = vld [vmem:[%s4 + $0xc4] sm:$0xf]
      %v509 = vld [vmem:[%s5] sm:$0x1]
      %v511 = vperm.slane %v509, 0
      %v563 = vunpack.c.l.b16 %v459
      %v564 = vunpack.c.l.b16 %v460
      %v565 = vunpack.c.l.b16 %v461
      %v566 = vunpack.c.l.b16 %v462
      %v567 = vunpack.c.l.b16 %v463
      %v568 = vunpack.c.l.b16 %v464
      %v569 = vunpack.c.l.b16 %v465
      %v570 = vunpack.c.l.b16 %v466
      %v571 = vunpack.c.l.b16 %v467
      %v572 = vunpack.c.l.b16 %v468
      %v573 = vunpack.c.l.b16 %v469
      %v574 = vunpack.c.l.b16 %v470
      %v575 = vunpack.c.l.b16 %v471
      %v576 = vunpack.c.l.b16 %v472
      %v577 = vunpack.c.l.b16 %v473
      %v578 = vunpack.c.l.b16 %v474
      %v579 = vunpack.c.l.b16 %v475
      %v580 = vunpack.c.l.b16 %v476
      %v581 = vunpack.c.l.b16 %v477
      %v582 = vunpack.c.l.b16 %v478
      %v583 = vunpack.c.l.b16 %v479
      %v584 = vunpack.c.l.b16 %v480
      %v585 = vunpack.c.l.b16 %v481
      %v586 = vunpack.c.l.b16 %v482
      %v587 = vunpack.c.l.b16 %v483
      %v588 = vunpack.c.l.b16 %v484
      %v589 = vunpack.c.l.b16 %v485
      %v590 = vunpack.c.l.b16 %v486
      %v591 = vunpack.c.l.b16 %v487
      %v592 = vunpack.c.l.b16 %v488
      %v593 = vunpack.c.l.b16 %v489
      %v594 = vunpack.c.l.b16 %v490
      %v595 = vunpack.c.l.b16 %v491
      %v596 = vunpack.c.l.b16 %v492
      %v597 = vunpack.c.l.b16 %v493
      %v598 = vunpack.c.l.b16 %v494
      %v599 = vunpack.c.l.b16 %v495
      %v600 = vunpack.c.l.b16 %v496
      %v601 = vunpack.c.l.b16 %v497
      %v602 = vunpack.c.l.b16 %v498
      %v603 = vunpack.c.l.b16 %v499
      %v604 = vunpack.c.l.b16 %v500
      %v605 = vunpack.c.l.b16 %v501
      %v606 = vunpack.c.l.b16 %v502
      %v607 = vunpack.c.l.b16 %v503
      %v608 = vunpack.c.l.b16 %v504
      %v609 = vunpack.c.l.b16 %v505
      %v610 = vunpack.c.l.b16 %v506
      %v611 = vunpack.c.l.b16 %v507
      %v612 = vunpack.c.l.b16 %v508
      %v613 = vpack.c.b16 %v564, %v563
      %v614 = vpack.c.b16 %v566, %v565
      %v615 = vpack.c.b16 %v568, %v567
      %v616 = vpack.c.b16 %v570, %v569
      %v617 = vpack.c.b16 %v572, %v571
      %v618 = vpack.c.b16 %v574, %v573
      %v619 = vpack.c.b16 %v576, %v575
      %v620 = vpack.c.b16 %v578, %v577
      %v621 = vpack.c.b16 %v580, %v579
      %v622 = vpack.c.b16 %v582, %v581
      %v623 = vpack.c.b16 %v584, %v583
      %v624 = vpack.c.b16 %v586, %v585
      %v625 = vpack.c.b16 %v588, %v587
      %v626 = vpack.c.b16 %v590, %v589
      %v627 = vpack.c.b16 %v592, %v591
      %v628 = vpack.c.b16 %v594, %v593
      %v629 = vpack.c.b16 %v596, %v595
      %v630 = vpack.c.b16 %v598, %v597
      %v631 = vpack.c.b16 %v600, %v599
      %v632 = vpack.c.b16 %v602, %v601
      %v633 = vpack.c.b16 %v604, %v603
      %v634 = vpack.c.b16 %v606, %v605
      %v635 = vpack.c.b16 %v608, %v607
      %v636 = vpack.c.b16 %v610, %v609
      %v637 = vpack.c.b16 %v612, %v611
      %vm663 = vcmask 130048
      %v665 = vsel %vm663, %v458, 0
      %667 = vmatpush.bf16.msra.mxu0 %v620
      %668 = vmatpush.bf16.msra.mxu0 %v619
      %669 = vmatpush.bf16.msra.mxu0 %v618
      %670 = vmatpush.bf16.msra.mxu0 %v617
      %671 = vmatpush.bf16.msra.mxu0 %v616
      %672 = vmatpush.bf16.msra.mxu0 %v615
      %673 = vmatpush.bf16.msra.mxu0 %v614
      %674 = vmatpush.bf16.msra.mxu0 %v613
      %675 = vmatmul.bf16.gmra.mxu0 %v455
      %v676 = vpop.f32.mrf.mxu0
      %v677 = vadd.f32 %v511, %v676
      %v678 = vpop.f32.mrf.mxu0
      %679 = vdwg.mxu0
      %680 = vmatpush.bf16.msra.mxu0 %v628
      %681 = vmatpush.bf16.msra.mxu0 %v627
      %682 = vmatpush.bf16.msra.mxu0 %v626
      %683 = vmatpush.bf16.msra.mxu0 %v625
      %684 = vmatpush.bf16.msra.mxu0 %v624
      %685 = vmatpush.bf16.msra.mxu0 %v623
      %686 = vmatpush.bf16.msra.mxu0 %v622
      %687 = vmatpush.bf16.msra.mxu0 %v621
      %688 = vmatmul.bf16.gmra.mxu0 %v456
      %v689 = vpop.f32.mrf.mxu0
      %v690 = vadd.f32 %v677, %v689
      %v691 = vpop.f32.mrf.mxu0
      %692 = vdwg.mxu0
      %693 = vmatpush.bf16.msra.mxu0 %v636
      %694 = vmatpush.bf16.msra.mxu0 %v635
      %695 = vmatpush.bf16.msra.mxu0 %v634
      %696 = vmatpush.bf16.msra.mxu0 %v633
      %697 = vmatpush.bf16.msra.mxu0 %v632
      %698 = vmatpush.bf16.msra.mxu0 %v631
      %699 = vmatpush.bf16.msra.mxu0 %v630
      %700 = vmatpush.bf16.msra.mxu0 %v629
      %701 = vmatmul.bf16.gmra.mxu0 %v457
      %v702 = vpop.f32.mrf.mxu0
      %v703 = vadd.f32 %v690, %v702
      %v704 = vpop.f32.mrf.mxu0
      %705 = vdwg.mxu0
      %706 = vmatpush.bf16.msra.mxu0 0
      %707 = vmatpush.bf16.msra.mxu0 0
      %708 = vmatpush.bf16.msra.mxu0 0
      %709 = vmatpush.bf16.msra.mxu0 0
      %710 = vmatpush.bf16.msra.mxu0 0
      %711 = vmatpush.bf16.msra.mxu0 0
      %712 = vmatpush.bf16.msra.mxu0 0
      %713 = vmatpush.bf16.msra.mxu0 %v637
      %714 = vmatmul.bf16.gmra.mxu0 %v665
      %v715 = vpop.f32.mrf.mxu0
      %v716 = vadd.f32 %v703, %v715
      %v717 = vpop.f32.mrf.mxu0
      %718 = vdwg.mxu0
      %vm719 = vcmask 523264
      %720 = vst.msk [vmem:[%s361] sm:$0xff] %vm719, %v716
      %v721 = vld [vmem:[%s357] sm:$0xff]
      %v722 = vmul.f32 %v716, 0.5
      %v723 = vmul.f32 %v722, 1.442695
      %v724 = vpow.pop %v723
      %726 = vrot.lane.b32.xlu0 %v724, 96
      %v727 = vpop.permute.xlu0 %726
      %v729 = vmul.f32 %v721, %v727
      %v730 = vadd.f32 %v716, %v729
      %v731 = vpack.c.bf16 %v730, %v730
      %vm732 = vcmask 257024
      %733 = vst.msk [vmem:[%s365] sm:$0xf] %vm732, %v731
      %v734 = vld [vmem:[%s6] sm:$0xff]
      %v735 = vld [vmem:[%s6 + $0x8] sm:$0xff]
      %v736 = vld [vmem:[%s6 + $0x10] sm:$0xff]
      %v737 = vld [vmem:[%s6 + $0x18] sm:$0xff]
      %v738 = vld [vmem:[%s6 + $0x20] sm:$0xff]
      %v739 = vld [vmem:[%s6 + $0x28] sm:$0xff]
      %v740 = vld [vmem:[%s6 + $0x30] sm:$0xff]
      %v741 = vld [vmem:[%s6 + $0x38] sm:$0xff]
      %v750 = vunpack.c.l.b16 %v734
      %v751 = vunpack.c.h.b16 %v734
      %v752 = vunpack.c.l.b16 %v735
      %v753 = vunpack.c.h.b16 %v735
      %v754 = vunpack.c.l.b16 %v736
      %v755 = vunpack.c.h.b16 %v736
      %v756 = vunpack.c.l.b16 %v737
      %v757 = vunpack.c.h.b16 %v737
      %v758 = vunpack.c.l.b16 %v738
      %v759 = vunpack.c.h.b16 %v738
      %v760 = vunpack.c.l.b16 %v739
      %v761 = vunpack.c.h.b16 %v739
      %v762 = vunpack.c.l.b16 %v740
      %v763 = vunpack.c.h.b16 %v740
      %v764 = vunpack.c.l.b16 %v741
      %v765 = vunpack.c.h.b16 %v741
      %v766 = vpack.c.b16 %v754, %v750
      %v767 = vpack.c.b16 %v755, %v751
      %v768 = vpack.c.b16 %v756, %v752
      %v769 = vpack.c.b16 %v757, %v753
      %v770 = vpack.c.b16 %v762, %v758
      %v771 = vpack.c.b16 %v763, %v759
      %v772 = vpack.c.b16 %v764, %v760
      %v773 = vpack.c.b16 %v765, %v761
      %vm782 = vcmask 261120
      %v784 = vsel %vm782, %v731, 0
      %786 = vmatpush.bf16.msra.mxu0 0
      %787 = vmatpush.bf16.msra.mxu0 0
      %788 = vmatpush.bf16.msra.mxu0 0
      %789 = vmatpush.bf16.msra.mxu0 0
      %790 = vmatpush.bf16.msra.mxu0 0
      %791 = vmatpush.bf16.msra.mxu0 0
      %792 = vmatpush.bf16.msra.mxu0 %v770
      %793 = vmatpush.bf16.msra.mxu0 %v766
      %794 = vmatmul.bf16.gmra.mxu0 %v784
      %v795 = vpop.f32.mrf.mxu0
      %v796 = vadd.f32 0.0, %v795
      %v797 = vpop.f32.mrf.mxu0
      %798 = vdwg.mxu0
      %799 = vmatpush.bf16.msra.mxu0 0
      %800 = vmatpush.bf16.msra.mxu0 0
      %801 = vmatpush.bf16.msra.mxu0 0
      %802 = vmatpush.bf16.msra.mxu0 0
      %803 = vmatpush.bf16.msra.mxu0 0
      %804 = vmatpush.bf16.msra.mxu0 0
      %805 = vmatpush.bf16.msra.mxu0 %v771
      %806 = vmatpush.bf16.msra.mxu0 %v767
      %807 = vmatmul.bf16.gmra.mxu0 %v784
      %v808 = vpop.f32.mrf.mxu0
      %v809 = vadd.f32 0.0, %v808
      %v810 = vpop.f32.mrf.mxu0
      %811 = vdwg.mxu0
      %812 = vmatpush.bf16.msra.mxu0 0
      %813 = vmatpush.bf16.msra.mxu0 0
      %814 = vmatpush.bf16.msra.mxu0 0
      %815 = vmatpush.bf16.msra.mxu0 0
      %816 = vmatpush.bf16.msra.mxu0 0
      %817 = vmatpush.bf16.msra.mxu0 0
      %818 = vmatpush.bf16.msra.mxu0 %v772
      %819 = vmatpush.bf16.msra.mxu0 %v768
      %820 = vmatmul.bf16.gmra.mxu0 %v784
      %v821 = vpop.f32.mrf.mxu0
      %v822 = vadd.f32 0.0, %v821
      %v823 = vpop.f32.mrf.mxu0
      %824 = vdwg.mxu0
      %825 = vmatpush.bf16.msra.mxu0 0
      %826 = vmatpush.bf16.msra.mxu0 0
      %827 = vmatpush.bf16.msra.mxu0 0
      %828 = vmatpush.bf16.msra.mxu0 0
      %829 = vmatpush.bf16.msra.mxu0 0
      %830 = vmatpush.bf16.msra.mxu0 0
      %831 = vmatpush.bf16.msra.mxu0 %v773
      %832 = vmatpush.bf16.msra.mxu0 %v769
      %833 = vmatmul.bf16.gmra.mxu0 %v784
      %v834 = vpop.f32.mrf.mxu0
      %v835 = vadd.f32 0.0, %v834
      %v836 = vpop.f32.mrf.mxu0
      %837 = vdwg.mxu0
      %v838 = vrot.slane %v796, 4
      %v839 = vadd.f32 %v796, %v838
      %v840 = vrot.slane %v839, 2
      %v841 = vadd.f32 %v839, %v840
      %v842 = vrot.slane %v841, 1
      %v843 = vadd.f32 %v841, %v842
      %v844 = vrot.slane %v809, 4
      %v845 = vadd.f32 %v809, %v844
      %v846 = vrot.slane %v845, 2
      %v847 = vadd.f32 %v845, %v846
      %v848 = vrot.slane %v847, 1
      %v849 = vadd.f32 %v847, %v848
      %v850 = vrot.slane %v822, 4
      %v851 = vadd.f32 %v822, %v850
      %v852 = vrot.slane %v851, 2
      %v853 = vadd.f32 %v851, %v852
      %v854 = vrot.slane %v853, 1
      %v855 = vadd.f32 %v853, %v854
      %v856 = vsel %vm663, %v835, 0.0
      %v857 = vrot.slane %v856, 4
      %v858 = vadd.f32 %v856, %v857
      %v859 = vrot.slane %v858, 2
      %v860 = vadd.f32 %v858, %v859
      %v861 = vrot.slane %v860, 1
      %v862 = vadd.f32 %v860, %v861
      %v863 = vmul.f32 %v796, %v796
      %v864 = vmul.f32 %v809, %v809
      %v865 = vmul.f32 %v822, %v822
      %v866 = vmul.f32 %v835, %v835
      %v867 = vrot.slane %v863, 4
      %v868 = vadd.f32 %v863, %v867
      %v869 = vrot.slane %v868, 2
      %v870 = vadd.f32 %v868, %v869
      %v871 = vrot.slane %v870, 1
      %v872 = vadd.f32 %v870, %v871
      %v873 = vrot.slane %v864, 4
      %v874 = vadd.f32 %v864, %v873
      %v875 = vrot.slane %v874, 2
      %v876 = vadd.f32 %v874, %v875
      %v877 = vrot.slane %v876, 1
      %v878 = vadd.f32 %v876, %v877
      %v879 = vrot.slane %v865, 4
      %v880 = vadd.f32 %v865, %v879
      %v881 = vrot.slane %v880, 2
      %v882 = vadd.f32 %v880, %v881
      %v883 = vrot.slane %v882, 1
      %v884 = vadd.f32 %v882, %v883
      %v885 = vsel %vm663, %v866, 0.0
      %v886 = vrot.slane %v885, 4
      %v887 = vadd.f32 %v885, %v886
      %v888 = vrot.slane %v887, 2
      %v889 = vadd.f32 %v887, %v888
      %v890 = vrot.slane %v889, 1
      %v891 = vadd.f32 %v889, %v890
      %v892 = vsel %vm414, %v843, %v872
      %v893 = vsel %vm414, %v849, %v878
      %v894 = vsel %vm414, %v855, %v884
      %v895 = vsel %vm414, %v862, %v891
      %v900 = vrot.slane %v893, 6
      %v901 = vrot.slane %v894, 4
      %v902 = vrot.slane %v895, 2
      %v903 = vsel %vm418, %v892, %v900
      %vm904 = vcmask 1045508
      %v905 = vsel %vm904, %v901, %v902
      %vm906 = vcmask 1043456
      %v907 = vsel %vm906, %v903, %v905
      %vm909 = vcmask 1043458
      %vm910 = vmor %vm909, %vm418
      %vm911 = vmor %vm904, %vm910
      %vm912 = vcmask 130054
      %vm913 = vmor %vm912, %vm911
      %914 = vst.msk [vmem:[%s370] sm:$0xff] %vm913, %v907
      %p915 = scmp.lt.s32.totalorder %s21, 1
      %s916 = scalar_select %p915, %s21, 1
      %s917 = smul.addr %s916, 8
      %s918 = scalar_lea.vmem %s7, %s917
      %p919 = scmp.lt.s32.totalorder %s21, 1
      %s920 = scalar_select %p919, %s21, 1
      %s921 = smul.addr %s920, 4
      %s922 = scalar_lea.vmem %s8, %s921
      %p923 = scmp.lt.s32.totalorder %s21, 1
      %s924 = scalar_select %p923, %s21, 1
      %s925 = smul.addr %s924, 4
      %s926 = smul.addr %s925, 2
      %s927 = scalar_lea.vmem %s9, %s926
      // Predicated region
      $region49: #{vae_forward.4} parent=47 // pred_check
        %p928 = pneg %p196
      $region50: #{vae_forward.4} parent=47 // pred_check_branch
        %930 = sbr.rel (%p928) target = $region52
      $region51: #{vae_forward.4} parent=47 // pred_region
        _
      $region52: #{vae_forward.4} parent=47 // pred_fallthru
        _
      // Predicated region
      $region53: #{vae_forward.4} parent=47 // pred_check
        %p931 = pneg %p222
      $region54: #{vae_forward.4} parent=47 // pred_check_branch
        %933 = sbr.rel (%p931) target = $region56
      $region55: #{vae_forward.4} parent=47 // pred_region
        _
      $region56: #{vae_forward.4} parent=47 // pred_fallthru
        _
      // Predicated region
      $region57: #{vae_forward.4} parent=47 // pred_check
        %p934 = pneg %p248
      $region58: #{vae_forward.4} parent=47 // pred_check_branch
        %936 = sbr.rel (%p934) target = $region60
      $region59: #{vae_forward.4} parent=47 // pred_region
        _
      $region60: #{vae_forward.4} parent=47 // pred_fallthru
        _
    $region48: #{vae_forward.4} parent=5 // pred_fallthru
      _
    %p937 = scmp.le.s32.totalorder 2, %s16
    // Predicated region
    $region61: #{vae_forward.4} parent=5 // pred_check
      %p938 = pneg %p937
    $region62: #{vae_forward.4} parent=5 // pred_check_branch
      %940 = sbr.rel (%p938) target = $region64
    $region63: #{vae_forward.4} parent=5 // pred_region
      %s941 = ssub.s32 %s16, 2
      // Predicated region
      $region65: #{vae_forward.4} parent=63 // pred_check
        %p942 = pneg %p202
      $region66: #{vae_forward.4} parent=63 // pred_check_branch
        %944 = sbr.rel (%p942) target = $region68
      $region67: #{vae_forward.4} parent=63 // pred_region
        %p945 = scmp.lt.s32.totalorder %s22, 1
        %s946 = scalar_select %p945, %s22, 1
        %s947 = smul.addr %s946, 8
        %s948 = scalar_lea.vmem %s7, %s947
      $region68: #{vae_forward.4} parent=63 // pred_fallthru
        _
      // Predicated region
      $region69: #{vae_forward.4} parent=63 // pred_check
        %p949 = pneg %p228
      $region70: #{vae_forward.4} parent=63 // pred_check_branch
        %951 = sbr.rel (%p949) target = $region72
      $region71: #{vae_forward.4} parent=63 // pred_region
        %p952 = scmp.lt.s32.totalorder %s22, 1
        %s953 = scalar_select %p952, %s22, 1
        %s954 = smul.addr %s953, 4
        %s955 = scalar_lea.vmem %s8, %s954
      $region72: #{vae_forward.4} parent=63 // pred_fallthru
        _
      // Predicated region
      $region73: #{vae_forward.4} parent=63 // pred_check
        %p956 = pneg %p254
      $region74: #{vae_forward.4} parent=63 // pred_check_branch
        %958 = sbr.rel (%p956) target = $region76
      $region75: #{vae_forward.4} parent=63 // pred_region
        %p959 = scmp.lt.s32.totalorder %s22, 1
        %s960 = scalar_select %p959, %s22, 1
        %s961 = smul.addr %s960, 4
        %s962 = smul.addr %s961, 2
        %s963 = scalar_lea.vmem %s9, %s962
      $region76: #{vae_forward.4} parent=63 // pred_fallthru
        _
    $region64: #{vae_forward.4} parent=5 // pred_fallthru
      _
  $region6: #{vae_forward.4} parent=0 // loop_footer
    %s20 = sadd.s32 1, %s16
  $region7: #{vae_forward.4} parent=0 // loop_footer_branch
    %15 = sbr.rel target = $region3
  $region8: #{vae_forward.4} parent=0 // loop_exit
    _

// kernel: vae_forward.5
$region0: #{vae_forward.5}
  #allocation0 [shape = 'u32[]', space=smem, size = 0x4, offset = 0x4, fixed_abs, tag = 'smem constant byte address 0x4 - core index']
  #allocation1 [shape = 'u32[72,128]{1,0:T(1,128)}', space=vmem, size = 0x9000, scoped, tag = 'internal scratch']
  %s0 = inlined_call_operand.vmem [shape: bf16[16,32], index: 0, kind: input, shape index: {}]
  %s1 = inlined_call_operand.vmem [shape: f32[2,2,400], index: 1, kind: input, shape index: {}]
  %s2 = inlined_call_operand.vmem [shape: f32[2,400], index: 2, kind: input, shape index: {}]
  %s3 = inlined_call_operand.vmem [shape: bf16[32,400], index: 3, kind: input, shape index: {}]
  %s4 = inlined_call_operand.vmem [shape: bf16[400,784], index: 4, kind: input, shape index: {}]
  %s5 = inlined_call_operand.vmem [shape: f32[1,784], index: 5, kind: input, shape index: {}]
  %s6 = inlined_call_operand.hbm [shape: f32[16,784], index: 6, kind: output, shape index: {}]
  %s7 = sld [smem:[#allocation0]]
  $region57: #{vae_forward.5} parent=0
    _
  %s9 = ssub.s32 1, %s7
  %s10 = scalar_select 0, %s9, %s7
  $region1: #{vae_forward.5} parent=0
    #allocation2 [shape = 'u8[57344]{0}', space=vmem, size = 0xe000, scoped, tag = 'output window, operand 0']
    #allocation3 [shape = 's32[2]{0}', space=sflag, size = 0x8, scoped, tag = 'scoped memory for vae_forward.5']
    %11 = vsyncpa [#allocation3], 0
    %s12 = scalar_lea.sflag [#allocation3], 1
    %13 = vsyncpa %s12, 0
    loop: start=0, step=1, limit=4
    $region2: #{vae_forward.5} parent=1 // loop_pre_header
      _
    $region3: #{vae_forward.5} parent=1 // loop_header
      %s15 = sphi 0, %s19
      %p16 = scmp.ge.s32.totalorder %s15, 4
      %s25 = sphi 0, %s27
      %s28 = sphi 0, %s25
      %s29 = sphi 0, %s28
      %s45 = sphi 0, %s29
      %s49 = sphi 0, %s49
      %s51 = sphi 0, %s49
      %s52 = sphi 0, %s51
      %s66 = sphi 0, %s52
      %s70 = sphi 0, %s70
      %s72 = sphi 0, %s70
      %s73 = sphi 0, %s72
      %s87 = sphi 0, %s73
      %s91 = sphi 0, %s91
      %s93 = sphi 0, %s91
      %s94 = sphi 0, %s93
      %s108 = sphi 0, %s94
      %s112 = sphi 0, %s112
      %s114 = sphi 0, %s112
      %s115 = sphi 0, %s114
      %s129 = sphi 0, %s115
      %s133 = sphi 0, %s133
      %s135 = sphi 0, %s133
      %s136 = sphi 0, %s135
      %s150 = sphi 0, %s136
      %s156 = sphi 0, %s158
      %s159 = sphi 0, %s156
      %s160 = sphi 0, %s159
      %s176 = sphi 0, %s160
    $region4: #{vae_forward.5} parent=1 // loop_header_branch
      %18 = sbr.rel (%p16) target = $region8
    $region5: #{vae_forward.5} parent=1 // loop_body
      %s20 = ssub.s32 %s15, 1
      %s21 = ssub.s32 %s15, 2
      %s22 = sadd.s32 %s15, 1
      %s23 = ssub.s32 %s15, %s22
      %p24 = scmp.eq.s32.totalorder %s23, 0
      %s26 = sadd.s32 %s25, 1
      %s27 = scalar_select %p24, %s25, %s26
      %p30 = pneg %p24
      %p31 = scmp.eq.s32.totalorder %s15, 1
      %p32 = por %p30, %p31
      %p33 = scmp.ne.s32.totalorder %s25, %s28
      %p34 = scmp.eq.s32.totalorder %s15, 0
      %p35 = por %p33, %p34
      %p36 = scmp.ne.s32.totalorder %s25, %s28
      %p37 = scmp.eq.s32.totalorder %s20, 1
      %p38 = por %p36, %p37
      %p39 = scmp.ne.s32.totalorder %s28, %s29
      %p40 = scmp.eq.s32.totalorder %s20, 0
      %p41 = por %p39, %p40
      %p42 = scmp.ne.s32.totalorder %s28, %s29
      %p43 = scmp.eq.s32.totalorder %s21, 1
      %p44 = por %p42, %p43
      %p46 = scmp.ne.s32.totalorder %s29, %s45
      %p47 = scmp.eq.s32.totalorder %s21, 0
      %p48 = por %p46, %p47
      %s50 = sadd.s32 %s49, 1
      %p53 = scmp.eq.s32.totalorder %s15, 1
      %p54 = scmp.ne.s32.totalorder %s49, %s51
      %p55 = scmp.eq.s32.totalorder %s15, 0
      %p56 = por %p54, %p55
      %p57 = scmp.ne.s32.totalorder %s49, %s51
      %p58 = scmp.eq.s32.totalorder %s20, 1
      %p59 = por %p57, %p58
      %p60 = scmp.ne.s32.totalorder %s51, %s52
      %p61 = scmp.eq.s32.totalorder %s20, 0
      %p62 = por %p60, %p61
      %p63 = scmp.ne.s32.totalorder %s51, %s52
      %p64 = scmp.eq.s32.totalorder %s21, 1
      %p65 = por %p63, %p64
      %p67 = scmp.ne.s32.totalorder %s52, %s66
      %p68 = scmp.eq.s32.totalorder %s21, 0
      %p69 = por %p67, %p68
      %s71 = sadd.s32 %s70, 1
      %p74 = scmp.eq.s32.totalorder %s15, 1
      %p75 = scmp.ne.s32.totalorder %s70, %s72
      %p76 = scmp.eq.s32.totalorder %s15, 0
      %p77 = por %p75, %p76
      %p78 = scmp.ne.s32.totalorder %s70, %s72
      %p79 = scmp.eq.s32.totalorder %s20, 1
      %p80 = por %p78, %p79
      %p81 = scmp.ne.s32.totalorder %s72, %s73
      %p82 = scmp.eq.s32.totalorder %s20, 0
      %p83 = por %p81, %p82
      %p84 = scmp.ne.s32.totalorder %s72, %s73
      %p85 = scmp.eq.s32.totalorder %s21, 1
      %p86 = por %p84, %p85
      %p88 = scmp.ne.s32.totalorder %s73, %s87
      %p89 = scmp.eq.s32.totalorder %s21, 0
      %p90 = por %p88, %p89
      %s92 = sadd.s32 %s91, 1
      %p95 = scmp.eq.s32.totalorder %s15, 1
      %p96 = scmp.ne.s32.totalorder %s91, %s93
      %p97 = scmp.eq.s32.totalorder %s15, 0
      %p98 = por %p96, %p97
      %p99 = scmp.ne.s32.totalorder %s91, %s93
      %p100 = scmp.eq.s32.totalorder %s20, 1
      %p101 = por %p99, %p100
      %p102 = scmp.ne.s32.totalorder %s93, %s94
      %p103 = scmp.eq.s32.totalorder %s20, 0
      %p104 = por %p102, %p103
      %p105 = scmp.ne.s32.totalorder %s93, %s94
      %p106 = scmp.eq.s32.totalorder %s21, 1
      %p107 = por %p105, %p106
      %p109 = scmp.ne.s32.totalorder %s94, %s108
      %p110 = scmp.eq.s32.totalorder %s21, 0
      %p111 = por %p109, %p110
      %s113 = sadd.s32 %s112, 1
      %p116 = scmp.eq.s32.totalorder %s15, 1
      %p117 = scmp.ne.s32.totalorder %s112, %s114
      %p118 = scmp.eq.s32.totalorder %s15, 0
      %p119 = por %p117, %p118
      %p120 = scmp.ne.s32.totalorder %s112, %s114
      %p121 = scmp.eq.s32.totalorder %s20, 1
      %p122 = por %p120, %p121
      %p123 = scmp.ne.s32.totalorder %s114, %s115
      %p124 = scmp.eq.s32.totalorder %s20, 0
      %p125 = por %p123, %p124
      %p126 = scmp.ne.s32.totalorder %s114, %s115
      %p127 = scmp.eq.s32.totalorder %s21, 1
      %p128 = por %p126, %p127
      %p130 = scmp.ne.s32.totalorder %s115, %s129
      %p131 = scmp.eq.s32.totalorder %s21, 0
      %p132 = por %p130, %p131
      %s134 = sadd.s32 %s133, 1
      %p137 = scmp.eq.s32.totalorder %s15, 1
      %p138 = scmp.ne.s32.totalorder %s133, %s135
      %p139 = scmp.eq.s32.totalorder %s15, 0
      %p140 = por %p138, %p139
      %p141 = scmp.ne.s32.totalorder %s133, %s135
      %p142 = scmp.eq.s32.totalorder %s20, 1
      %p143 = por %p141, %p142
      %p144 = scmp.ne.s32.totalorder %s135, %s136
      %p145 = scmp.eq.s32.totalorder %s20, 0
      %p146 = por %p144, %p145
      %p147 = scmp.ne.s32.totalorder %s135, %s136
      %p148 = scmp.eq.s32.totalorder %s21, 1
      %p149 = por %p147, %p148
      %p151 = scmp.ne.s32.totalorder %s136, %s150
      %p152 = scmp.eq.s32.totalorder %s21, 0
      %p153 = por %p151, %p152
      %s154 = ssub.s32 %s15, %s22
      %p155 = scmp.eq.s32.totalorder %s154, 0
      %s157 = sadd.s32 %s156, 1
      %s158 = scalar_select %p155, %s156, %s157
      %p161 = pneg %p155
      %p162 = scmp.eq.s32.totalorder %s15, 1
      %p163 = por %p161, %p162
      %p164 = scmp.ne.s32.totalorder %s156, %s159
      %p165 = scmp.eq.s32.totalorder %s15, 0
      %p166 = por %p164, %p165
      %p167 = scmp.ne.s32.totalorder %s156, %s159
      %p168 = scmp.eq.s32.totalorder %s20, 1
      %p169 = por %p167, %p168
      %p170 = scmp.ne.s32.totalorder %s159, %s160
      %p171 = scmp.eq.s32.totalorder %s20, 0
      %p172 = por %p170, %p171
      %p173 = scmp.ne.s32.totalorder %s159, %s160
      %p174 = scmp.eq.s32.totalorder %s21, 1
      %p175 = por %p173, %p174
      %p177 = scmp.ne.s32.totalorder %s160, %s176
      %p178 = scmp.eq.s32.totalorder %s21, 0
      %p179 = por %p177, %p178
      %p180 = scmp.le.s32.totalorder 1, %s15
      %p181 = scmp.lt.s32.totalorder %s15, 3
      %p182 = pnand %p180, %p181
      %p183 = pneg %p182
      // Predicated region
      $region9: #{vae_forward.5} parent=5 // pred_check
        _
      $region10: #{vae_forward.5} parent=5 // pred_check_branch
        %185 = sbr.rel (%p182) target = $region12
      $region11: #{vae_forward.5} parent=5 // pred_region
        %s186 = ssub.s32 %s15, 1
        // Predicated region
        $region13: #{vae_forward.5} parent=11 // pred_check
          %p187 = pneg %p62
        $region14: #{vae_forward.5} parent=11 // pred_check_branch
          %189 = sbr.rel (%p187) target = $region16
        $region15: #{vae_forward.5} parent=11 // pred_region
          _
        $region16: #{vae_forward.5} parent=11 // pred_fallthru
          _
        // Predicated region
        $region17: #{vae_forward.5} parent=11 // pred_check
          %p190 = pneg %p83
        $region18: #{vae_forward.5} parent=11 // pred_check_branch
          %192 = sbr.rel (%p190) target = $region20
        $region19: #{vae_forward.5} parent=11 // pred_region
          _
        $region20: #{vae_forward.5} parent=11 // pred_fallthru
          _
        // Predicated region
        $region21: #{vae_forward.5} parent=11 // pred_check
          %p193 = pneg %p104
        $region22: #{vae_forward.5} parent=11 // pred_check_branch
          %195 = sbr.rel (%p193) target = $region24
        $region23: #{vae_forward.5} parent=11 // pred_region
          _
        $region24: #{vae_forward.5} parent=11 // pred_fallthru
          _
        // Predicated region
        $region25: #{vae_forward.5} parent=11 // pred_check
          %p196 = pneg %p125
        $region26: #{vae_forward.5} parent=11 // pred_check_branch
          %198 = sbr.rel (%p196) target = $region28
        $region27: #{vae_forward.5} parent=11 // pred_region
          _
        $region28: #{vae_forward.5} parent=11 // pred_fallthru
          _
        // Predicated region
        $region29: #{vae_forward.5} parent=11 // pred_check
          %p199 = pneg %p146
        $region30: #{vae_forward.5} parent=11 // pred_check_branch
          %201 = sbr.rel (%p199) target = $region32
        $region31: #{vae_forward.5} parent=11 // pred_region
          _
        $region32: #{vae_forward.5} parent=11 // pred_fallthru
          _
      $region12: #{vae_forward.5} parent=5 // pred_fallthru
        _
      %p202 = scmp.lt.s32.totalorder %s15, 2
      // Predicated region
      $region33: #{vae_forward.5} parent=5 // pred_check
        %p203 = pneg %p202
      $region34: #{vae_forward.5} parent=5 // pred_check_branch
        %205 = sbr.rel (%p203) target = $region36
      $region35: #{vae_forward.5} parent=5 // pred_region
        // Predicated region
        $region37: #{vae_forward.5} parent=35 // pred_check
          %p206 = pneg %p35
        $region38: #{vae_forward.5} parent=35 // pred_check_branch
          %208 = sbr.rel (%p206) target = $region40
        $region39: #{vae_forward.5} parent=35 // pred_region
          %p209 = scmp.lt.s32.totalorder %s15, 1
          %s210 = scalar_select %p209, %s15, 1
          %s211 = smul.addr %s210, 4
          %s212 = scalar_lea.vmem %s0, %s211
        $region40: #{vae_forward.5} parent=35 // pred_fallthru
          _
      $region36: #{vae_forward.5} parent=5 // pred_fallthru
        _
      %p213 = scmp.le.s32.totalorder 1, %s15
      %p214 = scmp.lt.s32.totalorder %s15, 3
      %p215 = pnand %p213, %p214
      %p216 = pneg %p215
      // Predicated region
      $region41: #{vae_forward.5} parent=5 // pred_check
        _
      $region42: #{vae_forward.5} parent=5 // pred_check_branch
        %218 = sbr.rel (%p215) target = $region44
      $region43: #{vae_forward.5} parent=5 // pred_region
        %s219 = ssub.s32 %s15, 1
        %p220 = scmp.lt.s32.totalorder %s20, 1
        %s221 = scalar_select %p220, %s20, 1
        %s222 = smul.addr %s221, 4
        %s223 = scalar_lea.vmem %s0, %s222
        %p224 = pneg %p41
        %p225 = pneg %p38
        %p226 = pneg %p62
        %p227 = pneg %p59
        %p228 = pneg %p83
        %p229 = pneg %p80
        %p230 = pneg %p104
        %p231 = pneg %p101
        %p232 = pneg %p125
        %p233 = pneg %p122
        %p234 = pneg %p146
        %p235 = pneg %p143
        %p236 = pneg %p172
        %p237 = pneg %p169
        %s238 = sand.u32 %s159, 1
        %s239 = scalar_lea.sflag [#allocation3], %s238
        %s240 = sand.u32 %s159, 1
        %s241 = smul.addr %s240, 56
        %s242 = scalar_lea.vmem [#allocation2], %s241
        %p243 = scmp.lt.s32.totalorder %s20, 1
        %s244 = scalar_select %p243, %s20, 1
        %s245 = smul.addr %s244, 4
        %s246 = scalar_lea.vmem %s0, %s245
        %v248 = vld [vmem:[%s1] sm:$0xff]
        %s249 = scalar_lea.vmem %s1, 8
        %v250 = vld [vmem:[%s249] sm:$0xff]
        %v251 = vadd.f32 %v248, %v250
        %v252 = vmul.f32 %v251, 0.0625
        %v253 = vmul.f32 %v252, %v252
        %v255 = vrot.slane %v253, 7
        %v257 = vsub.f32 %v252, %v255
        %v258 = vmax.f32 %v257, 0.0
        %v259 = vld [vmem:[%s2] ss:$2 sm:$0xf]
        %v260 = vadd.f32 %v258, 1e-05
        %v261 = vrsqrt.pop %v260
        %v262 = vmul.f32 %v261, %v260
        %v263 = vmul.f32 %v262, %v261
        %v264 = vmul.f32 0.5, %v263
        %v265 = vsub.f32 1.5, %v264
        %v266 = vmul.f32 %v261, %v265
        %vm267 = vweird.f32 %v260
        %vm268 = vweird.f32 %v261
        %vm269 = vmor %vm267, %vm268
        %v270 = vsel %vm269, %v261, %v266
        %272 = vst [vmem:[#allocation1] sm:$0xff] %v270
        %s273 = scalar_lea.vmem [#allocation1], 1
        %v274 = vld [vmem:[%s273] ss:$2 sm:$0xff]
        %v276 = vmul.f32 %v259, %v274
        %s277 = scalar_lea.vmem %s2, 1
        %v278 = vld [vmem:[%s277] ss:$2 sm:$0xf]
        %v281 = vunpack.c.l.s4 857870592
        %v282 = vunpack.c.0.s8 %v281
        %v283 = vperm.slane %v276, %v282
        %v285 = vmul.f32 %v252, %v283
        %v287 = vrot.slane %v285, 1
        %v288 = vrot.slane %v285, 2
        %v289 = vrot.slane %v285, 3
        %vm290 = vcmask 1040384
        %v291 = vsel %vm290, %v285, %v287
        %vm292 = vcmask 1042434
        %v293 = vsel %vm292, %v288, %v289
        %vm294 = vcmask 1041408
        %v295 = vsel %vm294, %v291, %v293
        %v297 = vsub.f32 %v278, %v295
        %v298 = vld [vmem:[%s246] sm:$0xf]
        %v299 = vld [vmem:[%s3] sm:$0xff]
        %v300 = vld [vmem:[%s3 + $0x8] sm:$0xff]
        %v301 = vld [vmem:[%s3 + $0x10] sm:$0xff]
        %v302 = vld [vmem:[%s3 + $0x18] sm:$0xff]
        %v303 = vld [vmem:[%s3 + $0x20] sm:$0xff]
        %v304 = vld [vmem:[%s3 + $0x28] sm:$0xff]
        %v305 = vld [vmem:[%s3 + $0x30] sm:$0xff]
        %v306 = vld [vmem:[%s3 + $0x38] sm:$0xff]
        %v315 = vunpack.c.l.b16 %v299
        %v316 = vunpack.c.h.b16 %v299
        %v317 = vunpack.c.l.b16 %v300
        %v318 = vunpack.c.h.b16 %v300
        %v319 = vunpack.c.l.b16 %v301
        %v320 = vunpack.c.h.b16 %v301
        %v321 = vunpack.c.l.b16 %v302
        %v322 = vunpack.c.h.b16 %v302
        %v323 = vunpack.c.l.b16 %v303
        %v324 = vunpack.c.h.b16 %v303
        %v325 = vunpack.c.l.b16 %v304
        %v326 = vunpack.c.h.b16 %v304
        %v327 = vunpack.c.l.b16 %v305
        %v328 = vunpack.c.h.b16 %v305
        %v329 = vunpack.c.l.b16 %v306
        %v330 = vunpack.c.h.b16 %v306
        %v331 = vpack.c.b16 %v319, %v315
        %v332 = vpack.c.b16 %v320, %v316
        %v333 = vpack.c.b16 %v321, %v317
        %v334 = vpack.c.b16 %v322, %v318
        %v335 = vpack.c.b16 %v327, %v323
        %v336 = vpack.c.b16 %v328, %v324
        %v337 = vpack.c.b16 %v329, %v325
        %v338 = vpack.c.b16 %v330, %v326
        %vm347 = vcmask 261120
        %v349 = vsel %vm347, %v298, 0
        %351 = vmatpush.bf16.msra.mxu0 0
        %352 = vmatpush.bf16.msra.mxu0 0
        %353 = vmatpush.bf16.msra.mxu0 0
        %354 = vmatpush.bf16.msra.mxu0 0
        %355 = vmatpush.bf16.msra.mxu0 0
        %356 = vmatpush.bf16.msra.mxu0 0
        %357 = vmatpush.bf16.msra.mxu0 %v335
        %358 = vmatpush.bf16.msra.mxu0 %v331
        %359 = vmatmul.bf16.gmra.mxu0 %v349
        %v360 = vpop.f32.mrf.mxu0
        %v361 = vadd.f32 0.0, %v360
        %v362 = vpop.f32.mrf.mxu0
        %363 = vdwg.mxu0
        %364 = vmatpush.bf16.msra.mxu0 0
        %365 = vmatpush.bf16.msra.mxu0 0
        %366 = vmatpush.bf16.msra.mxu0 0
        %367 = vmatpush.bf16.msra.mxu0 0
        %368 = vmatpush.bf16.msra.mxu0 0
        %369 = vmatpush.bf16.msra.mxu0 0
        %370 = vmatpush.bf16.msra.mxu0 %v336
        %371 = vmatpush.bf16.msra.mxu0 %v332
        %372 = vmatmul.bf16.gmra.mxu0 %v349
        %v373 = vpop.f32.mrf.mxu0
        %v374 = vadd.f32 0.0, %v373
        %v375 = vpop.f32.mrf.mxu0
        %376 = vdwg.mxu0
        %377 = vmatpush.bf16.msra.mxu0 0
        %378 = vmatpush.bf16.msra.mxu0 0
        %379 = vmatpush.bf16.msra.mxu0 0
        %380 = vmatpush.bf16.msra.mxu0 0
        %381 = vmatpush.bf16.msra.mxu0 0
        %382 = vmatpush.bf16.msra.mxu0 0
        %383 = vmatpush.bf16.msra.mxu0 %v337
        %384 = vmatpush.bf16.msra.mxu0 %v333
        %385 = vmatmul.bf16.gmra.mxu0 %v349
        %v386 = vpop.f32.mrf.mxu0
        %v387 = vadd.f32 0.0, %v386
        %v388 = vpop.f32.mrf.mxu0
        %389 = vdwg.mxu0
        %390 = vmatpush.bf16.msra.mxu0 0
        %391 = vmatpush.bf16.msra.mxu0 0
        %392 = vmatpush.bf16.msra.mxu0 0
        %393 = vmatpush.bf16.msra.mxu0 0
        %394 = vmatpush.bf16.msra.mxu0 0
        %395 = vmatpush.bf16.msra.mxu0 0
        %396 = vmatpush.bf16.msra.mxu0 %v338
        %397 = vmatpush.bf16.msra.mxu0 %v334
        %398 = vmatmul.bf16.gmra.mxu0 %v349
        %v399 = vpop.f32.mrf.mxu0
        %v400 = vadd.f32 0.0, %v399
        %v401 = vpop.f32.mrf.mxu0
        %402 = vdwg.mxu0
        %v403 = vperm.slane %v276, 0
        %v404 = vperm.slane %v276, 1
        %v405 = vperm.slane %v276, 2
        %v406 = vperm.slane %v276, 3
        %v411 = vmul.f32 %v361, %v403
        %v412 = vmul.f32 %v374, %v404
        %v413 = vmul.f32 %v387, %v405
        %v414 = vmul.f32 %v400, %v406
        %v416 = vperm.slane %v297, 0
        %v417 = vperm.slane %v297, 1
        %v418 = vperm.slane %v297, 2
        %v419 = vperm.slane %v297, 3
        %v424 = vadd.f32 %v411, %v416
        %v425 = vadd.f32 %v412, %v417
        %v426 = vadd.f32 %v413, %v418
        %v427 = vadd.f32 %v414, %v419
        %v428 = vmax.f32 %v424, 0.0
        %v429 = vmax.f32 %v425, 0.0
        %v430 = vmax.f32 %v426, 0.0
        %v431 = vmax.f32 %v427, 0.0
        %v432 = vpack.c.bf16 %v428, %v428
        %v433 = vpack.c.bf16 %v429, %v429
        %v434 = vpack.c.bf16 %v430, %v430
        %v435 = vpack.c.bf16 %v431, %v431
        %v436 = vld [vmem:[%s4] sm:$0xff]
        %v437 = vld [vmem:[%s4 + $0x8] sm:$0xff]
        %v438 = vld [vmem:[%s4 + $0x10] sm:$0xff]
        %v439 = vld [vmem:[%s4 + $0x18] sm:$0xf]
        %v440 = vld [vmem:[%s4 + $0x1c] sm:$0xff]
        %v441 = vld [vmem:[%s4 + $0x24] sm:$0xff]
        %v442 = vld [vmem:[%s4 + $0x2c] sm:$0xff]
        %v443 = vld [vmem:[%s4 + $0x34] sm:$0xf]
        %v444 = vld [vmem:[%s4 + $0x38] sm:$0xff]
        %v445 = vld [vmem:[%s4 + $0x40] sm:$0xff]
        %v446 = vld [vmem:[%s4 + $0x48] sm:$0xff]
        %v447 = vld [vmem:[%s4 + $0x50] sm:$0xf]
        %v448 = vld [vmem:[%s4 + $0x54] sm:$0xff]
        %v449 = vld [vmem:[%s4 + $0x5c] sm:$0xff]
        %v450 = vld [vmem:[%s4 + $0x64] sm:$0xff]
        %v451 = vld [vmem:[%s4 + $0x6c] sm:$0xf]
        %v452 = vld [vmem:[%s4 + $0x70] sm:$0xff]
        %v453 = vld [vmem:[%s4 + $0x78] sm:$0xff]
        %v454 = vld [vmem:[%s4 + $0x80] sm:$0xff]
        %v455 = vld [vmem:[%s4 + $0x88] sm:$0xf]
        %v456 = vld [vmem:[%s4 + $0x8c] sm:$0xff]
        %v457 = vld [vmem:[%s4 + $0x94] sm:$0xff]
        %v458 = vld [vmem:[%s4 + $0x9c] sm:$0xff]
        %v459 = vld [vmem:[%s4 + $0xa4] sm:$0xf]
        %v460 = vld [vmem:[%s4 + $0xa8] sm:$0xff]
        %v461 = vld [vmem:[%s4 + $0xb0] sm:$0xff]
        %v462 = vld [vmem:[%s4 + $0xb8] sm:$0xff]
        %v463 = vld [vmem:[%s4 + $0xc0] sm:$0xf]
        %v464 = vld [vmem:[%s4 + $0xc4] sm:$0xff]
        %v465 = vld [vmem:[%s4 + $0xcc] sm:$0xff]
        %v466 = vld [vmem:[%s4 + $0xd4] sm:$0xff]
        %v467 = vld [vmem:[%s4 + $0xdc] sm:$0xf]
        %v468 = vld [vmem:[%s4 + $0xe0] sm:$0xff]
        %v469 = vld [vmem:[%s4 + $0xe8] sm:$0xff]
        %v470 = vld [vmem:[%s4 + $0xf0] sm:$0xff]
        %v471 = vld [vmem:[%s4 + $0xf8] sm:$0xf]
        %v472 = vld [vmem:[%s4 + $0xfc] sm:$0xff]
        %v473 = vld [vmem:[%s4 + $0x104] sm:$0xff]
        %v474 = vld [vmem:[%s4 + $0x10c] sm:$0xff]
        %v475 = vld [vmem:[%s4 + $0x114] sm:$0xf]
        %v476 = vld [vmem:[%s4 + $0x118] sm:$0xff]
        %v477 = vld [vmem:[%s4 + $0x120] sm:$0xff]
        %v478 = vld [vmem:[%s4 + $0x128] sm:$0xff]
        %v479 = vld [vmem:[%s4 + $0x130] sm:$0xf]
        %v480 = vld [vmem:[%s4 + $0x134] sm:$0xff]
        %v481 = vld [vmem:[%s4 + $0x13c] sm:$0xff]
        %v482 = vld [vmem:[%s4 + $0x144] sm:$0xff]
        %v483 = vld [vmem:[%s4 + $0x14c] sm:$0xf]
        %v484 = vld [vmem:[%s4 + $0x150] sm:$0xff]
        %v485 = vld [vmem:[%s4 + $0x158] sm:$0xff]
        %v486 = vld [vmem:[%s4 + $0x160] sm:$0xff]
        %v487 = vld [vmem:[%s4 + $0x168] sm:$0xf]
        %v488 = vld [vmem:[%s4 + $0x16c] sm:$0xff]
        %v489 = vld [vmem:[%s4 + $0x174] sm:$0xff]
        %v490 = vld [vmem:[%s4 + $0x17c] sm:$0xff]
        %v491 = vld [vmem:[%s4 + $0x184] sm:$0xf]
        %v492 = vld [vmem:[%s4 + $0x188] sm:$0xff]
        %v493 = vld [vmem:[%s4 + $0x190] sm:$0xff]
        %v494 = vld [vmem:[%s4 + $0x198] sm:$0xff]
        %v495 = vld [vmem:[%s4 + $0x1a0] sm:$0xf]
        %v496 = vld [vmem:[%s4 + $0x1a4] sm:$0xff]
        %v497 = vld [vmem:[%s4 + $0x1ac] sm:$0xff]
        %v498 = vld [vmem:[%s4 + $0x1b4] sm:$0xff]
        %v499 = vld [vmem:[%s4 + $0x1bc] sm:$0xf]
        %v500 = vld [vmem:[%s4 + $0x1c0] sm:$0xff]
        %v501 = vld [vmem:[%s4 + $0x1c8] sm:$0xff]
        %v502 = vld [vmem:[%s4 + $0x1d0] sm:$0xff]
        %v503 = vld [vmem:[%s4 + $0x1d8] sm:$0xf]
        %v504 = vld [vmem:[%s4 + $0x1dc] sm:$0xff]
        %v505 = vld [vmem:[%s4 + $0x1e4] sm:$0xff]
        %v506 = vld [vmem:[%s4 + $0x1ec] sm:$0xff]
        %v507 = vld [vmem:[%s4 + $0x1f4] sm:$0xf]
        %v508 = vld [vmem:[%s4 + $0x1f8] sm:$0xff]
        %v509 = vld [vmem:[%s4 + $0x200] sm:$0xff]
        %v510 = vld [vmem:[%s4 + $0x208] sm:$0xff]
        %v511 = vld [vmem:[%s4 + $0x210] sm:$0xf]
        %v512 = vld [vmem:[%s4 + $0x214] sm:$0xff]
        %v513 = vld [vmem:[%s4 + $0x21c] sm:$0xff]
        %v514 = vld [vmem:[%s4 + $0x224] sm:$0xff]
        %v515 = vld [vmem:[%s4 + $0x22c] sm:$0xf]
        %v516 = vld [vmem:[%s4 + $0x230] sm:$0xff]
        %v517 = vld [vmem:[%s4 + $0x238] sm:$0xff]
        %v518 = vld [vmem:[%s4 + $0x240] sm:$0xff]
        %v519 = vld [vmem:[%s4 + $0x248] sm:$0xf]
        %v520 = vld [vmem:[%s4 + $0x24c] sm:$0xff]
        %v521 = vld [vmem:[%s4 + $0x254] sm:$0xff]
        %v522 = vld [vmem:[%s4 + $0x25c] sm:$0xff]
        %v523 = vld [vmem:[%s4 + $0x264] sm:$0xf]
        %v524 = vld [vmem:[%s4 + $0x268] sm:$0xff]
        %v525 = vld [vmem:[%s4 + $0x270] sm:$0xff]
        %v526 = vld [vmem:[%s4 + $0x278] sm:$0xff]
        %v527 = vld [vmem:[%s4 + $0x280] sm:$0xf]
        %v528 = vld [vmem:[%s4 + $0x284] sm:$0xff]
        %v529 = vld [vmem:[%s4 + $0x28c] sm:$0xff]
        %v530 = vld [vmem:[%s4 + $0x294] sm:$0xff]
        %v531 = vld [vmem:[%s4 + $0x29c] sm:$0xf]
        %v532 = vld [vmem:[%s4 + $0x2a0] sm:$0xff]
        %v533 = vld [vmem:[%s4 + $0x2a8] sm:$0xff]
        %v534 = vld [vmem:[%s4 + $0x2b0] sm:$0xff]
        %v535 = vld [vmem:[%s4 + $0x2b8] sm:$0xf]
        %v536 = vld [vmem:[%s4 + $0x2bc] sm:$0xff]
        %v537 = vld [vmem:[%s4 + $0x2c4] sm:$0xff]
        %v538 = vld [vmem:[%s4 + $0x2cc] sm:$0xff]
        %v539 = vld [vmem:[%s4 + $0x2d4] sm:$0xf]
        %v540 = vld [vmem:[%s4 + $0x2d8] sm:$0xff]
        %v541 = vld [vmem:[%s4 + $0x2e0] sm:$0xff]
        %v542 = vld [vmem:[%s4 + $0x2e8] sm:$0xff]
        %v543 = vld [vmem:[%s4 + $0x2f0] sm:$0xf]
        %v544 = vld [vmem:[%s4 + $0x2f4] sm:$0xff]
        %v545 = vld [vmem:[%s4 + $0x2fc] sm:$0xff]
        %v546 = vld [vmem:[%s4 + $0x304] sm:$0xff]
        %v547 = vld [vmem:[%s4 + $0x30c] sm:$0xf]
        %v548 = vld [vmem:[%s4 + $0x310] sm:$0xff]
        %v549 = vld [vmem:[%s4 + $0x318] sm:$0xff]
        %v550 = vld [vmem:[%s4 + $0x320] sm:$0xff]
        %v551 = vld [vmem:[%s4 + $0x328] sm:$0xf]
        %v552 = vld [vmem:[%s4 + $0x32c] sm:$0xff]
        %v553 = vld [vmem:[%s4 + $0x334] sm:$0xff]
        %v554 = vld [vmem:[%s4 + $0x33c] sm:$0xff]
        %v555 = vld [vmem:[%s4 + $0x344] sm:$0xf]
        %v556 = vld [vmem:[%s4 + $0x348] sm:$0xff]
        %v557 = vld [vmem:[%s4 + $0x350] sm:$0xff]
        %v558 = vld [vmem:[%s4 + $0x358] sm:$0xff]
        %v559 = vld [vmem:[%s4 + $0x360] sm:$0xf]
        %v560 = vld [vmem:[%s4 + $0x364] sm:$0xff]
        %v561 = vld [vmem:[%s4 + $0x36c] sm:$0xff]
        %v562 = vld [vmem:[%s4 + $0x374] sm:$0xff]
        %v563 = vld [vmem:[%s4 + $0x37c] sm:$0xf]
        %v564 = vld [vmem:[%s4 + $0x380] sm:$0xff]
        %v565 = vld [vmem:[%s4 + $0x388] sm:$0xff]
        %v566 = vld [vmem:[%s4 + $0x390] sm:$0xff]
        %v567 = vld [vmem:[%s4 + $0x398] sm:$0xf]
        %v568 = vld [vmem:[%s4 + $0x39c] sm:$0xff]
        %v569 = vld [vmem:[%s4 + $0x3a4] sm:$0xff]
        %v570 = vld [vmem:[%s4 + $0x3ac] sm:$0xff]
        %v571 = vld [vmem:[%s4 + $0x3b4] sm:$0xf]
        %v572 = vld [vmem:[%s4 + $0x3b8] sm:$0xff]
        %v573 = vld [vmem:[%s4 + $0x3c0] sm:$0xff]
        %v574 = vld [vmem:[%s4 + $0x3c8] sm:$0xff]
        %v575 = vld [vmem:[%s4 + $0x3d0] sm:$0xf]
        %v576 = vld [vmem:[%s4 + $0x3d4] sm:$0xff]
        %v577 = vld [vmem:[%s4 + $0x3dc] sm:$0xff]
        %v578 = vld [vmem:[%s4 + $0x3e4] sm:$0xff]
        %v579 = vld [vmem:[%s4 + $0x3ec] sm:$0xf]
        %v580 = vld [vmem:[%s4 + $0x3f0] sm:$0xff]
        %v581 = vld [vmem:[%s4 + $0x3f8] sm:$0xff]
        %v582 = vld [vmem:[%s4 + $0x400] sm:$0xff]
        %v583 = vld [vmem:[%s4 + $0x408] sm:$0xf]
        %v584 = vld [vmem:[%s4 + $0x40c] sm:$0xff]
        %v585 = vld [vmem:[%s4 + $0x414] sm:$0xff]
        %v586 = vld [vmem:[%s4 + $0x41c] sm:$0xff]
        %v587 = vld [vmem:[%s4 + $0x424] sm:$0xf]
        %v588 = vld [vmem:[%s4 + $0x428] sm:$0xff]
        %v589 = vld [vmem:[%s4 + $0x430] sm:$0xff]
        %v590 = vld [vmem:[%s4 + $0x438] sm:$0xff]
        %v591 = vld [vmem:[%s4 + $0x440] sm:$0xf]
        %v592 = vld [vmem:[%s4 + $0x444] sm:$0xff]
        %v593 = vld [vmem:[%s4 + $0x44c] sm:$0xff]
        %v594 = vld [vmem:[%s4 + $0x454] sm:$0xff]
        %v595 = vld [vmem:[%s4 + $0x45c] sm:$0xf]
        %v596 = vld [vmem:[%s4 + $0x460] sm:$0xff]
        %v597 = vld [vmem:[%s4 + $0x468] sm:$0xff]
        %v598 = vld [vmem:[%s4 + $0x470] sm:$0xff]
        %v599 = vld [vmem:[%s4 + $0x478] sm:$0xf]
        %v600 = vld [vmem:[%s4 + $0x47c] sm:$0xff]
        %v601 = vld [vmem:[%s4 + $0x484] sm:$0xff]
        %v602 = vld [vmem:[%s4 + $0x48c] sm:$0xff]
        %v603 = vld [vmem:[%s4 + $0x494] sm:$0xf]
        %v604 = vld [vmem:[%s4 + $0x498] sm:$0xff]
        %v605 = vld [vmem:[%s4 + $0x4a0] sm:$0xff]
        %v606 = vld [vmem:[%s4 + $0x4a8] sm:$0xff]
        %v607 = vld [vmem:[%s4 + $0x4b0] sm:$0xf]
        %v608 = vld [vmem:[%s4 + $0x4b4] sm:$0xff]
        %v609 = vld [vmem:[%s4 + $0x4bc] sm:$0xff]
        %v610 = vld [vmem:[%s4 + $0x4c4] sm:$0xff]
        %v611 = vld [vmem:[%s4 + $0x4cc] sm:$0xf]
        %v612 = vld [vmem:[%s4 + $0x4d0] sm:$0xff]
        %v613 = vld [vmem:[%s4 + $0x4d8] sm:$0xff]
        %v614 = vld [vmem:[%s4 + $0x4e0] sm:$0xff]
        %v615 = vld [vmem:[%s4 + $0x4e8] sm:$0xf]
        %v616 = vld [vmem:[%s4 + $0x4ec] sm:$0xff]
        %v617 = vld [vmem:[%s4 + $0x4f4] sm:$0xff]
        %v618 = vld [vmem:[%s4 + $0x4fc] sm:$0xff]
        %v619 = vld [vmem:[%s4 + $0x504] sm:$0xf]
        %v620 = vld [vmem:[%s4 + $0x508] sm:$0xff]
        %v621 = vld [vmem:[%s4 + $0x510] sm:$0xff]
        %v622 = vld [vmem:[%s4 + $0x518] sm:$0xff]
        %v623 = vld [vmem:[%s4 + $0x520] sm:$0xf]
        %v624 = vld [vmem:[%s4 + $0x524] sm:$0xff]
        %v625 = vld [vmem:[%s4 + $0x52c] sm:$0xff]
        %v626 = vld [vmem:[%s4 + $0x534] sm:$0xff]
        %v627 = vld [vmem:[%s4 + $0x53c] sm:$0xf]
        %v628 = vld [vmem:[%s4 + $0x540] sm:$0xff]
        %v629 = vld [vmem:[%s4 + $0x548] sm:$0xff]
        %v630 = vld [vmem:[%s4 + $0x550] sm:$0xff]
        %v631 = vld [vmem:[%s4 + $0x558] sm:$0xf]
        %v632 = vld [vmem:[%s4 + $0x55c] sm:$0xff]
        %v633 = vld [vmem:[%s4 + $0x564] sm:$0xff]
        %v634 = vld [vmem:[%s4 + $0x56c] sm:$0xff]
        %v635 = vld [vmem:[%s4 + $0x574] sm:$0xf]
        %v636 = vld [vmem:[%s5] sm:$0x7f]
        %v638 = vperm.slane %v636, 0
        %v639 = vperm.slane %v636, 1
        %v640 = vperm.slane %v636, 2
        %v641 = vperm.slane %v636, 3
        %v642 = vperm.slane %v636, 4
        %v643 = vperm.slane %v636, 5
        %v644 = vperm.slane %v636, 6
        %v852 = vunpack.c.l.b16 %v436
        %v853 = vunpack.c.h.b16 %v436
        %v854 = vunpack.c.l.b16 %v437
        %v855 = vunpack.c.h.b16 %v437
        %v856 = vunpack.c.l.b16 %v438
        %v857 = vunpack.c.h.b16 %v438
        %v858 = vunpack.c.l.b16 %v439
        %v859 = vunpack.c.l.b16 %v440
        %v860 = vunpack.c.h.b16 %v440
        %v861 = vunpack.c.l.b16 %v441
        %v862 = vunpack.c.h.b16 %v441
        %v863 = vunpack.c.l.b16 %v442
        %v864 = vunpack.c.h.b16 %v442
        %v865 = vunpack.c.l.b16 %v443
        %v866 = vunpack.c.l.b16 %v444
        %v867 = vunpack.c.h.b16 %v444
        %v868 = vunpack.c.l.b16 %v445
        %v869 = vunpack.c.h.b16 %v445
        %v870 = vunpack.c.l.b16 %v446
        %v871 = vunpack.c.h.b16 %v446
        %v872 = vunpack.c.l.b16 %v447
        %v873 = vunpack.c.l.b16 %v448
        %v874 = vunpack.c.h.b16 %v448
        %v875 = vunpack.c.l.b16 %v449
        %v876 = vunpack.c.h.b16 %v449
        %v877 = vunpack.c.l.b16 %v450
        %v878 = vunpack.c.h.b16 %v450
        %v879 = vunpack.c.l.b16 %v451
        %v880 = vunpack.c.l.b16 %v452
        %v881 = vunpack.c.h.b16 %v452
        %v882 = vunpack.c.l.b16 %v453
        %v883 = vunpack.c.h.b16 %v453
        %v884 = vunpack.c.l.b16 %v454
        %v885 = vunpack.c.h.b16 %v454
        %v886 = vunpack.c.l.b16 %v455
        %v887 = vunpack.c.l.b16 %v456
        %v888 = vunpack.c.h.b16 %v456
        %v889 = vunpack.c.l.b16 %v457
        %v890 = vunpack.c.h.b16 %v457
        %v891 = vunpack.c.l.b16 %v458
        %v892 = vunpack.c.h.b16 %v458
        %v893 = vunpack.c.l.b16 %v459
        %v894 = vunpack.c.l.b16 %v460
        %v895 = vunpack.c.h.b16 %v460
        %v896 = vunpack.c.l.b16 %v461
        %v897 = vunpack.c.h.b16 %v461
        %v898 = vunpack.c.l.b16 %v462
        %v899 = vunpack.c.h.b16 %v462
        %v900 = vunpack.c.l.b16 %v463
        %v901 = vunpack.c.l.b16 %v464
        %v902 = vunpack.c.h.b16 %v464
        %v903 = vunpack.c.l.b16 %v465
        %v904 = vunpack.c.h.b16 %v465
        %v905 = vunpack.c.l.b16 %v466
        %v906 = vunpack.c.h.b16 %v466
        %v907 = vunpack.c.l.b16 %v467
        %v908 = vunpack.c.l.b16 %v468
        %v909 = vunpack.c.h.b16 %v468
        %v910 = vunpack.c.l.b16 %v469
        %v911 = vunpack.c.h.b16 %v469
        %v912 = vunpack.c.l.b16 %v470
        %v913 = vunpack.c.h.b16 %v470
        %v914 = vunpack.c.l.b16 %v471
        %v915 = vunpack.c.l.b16 %v472
        %v916 = vunpack.c.h.b16 %v472
        %v917 = vunpack.c.l.b16 %v473
        %v918 = vunpack.c.h.b16 %v473
        %v919 = vunpack.c.l.b16 %v474
        %v920 = vunpack.c.h.b16 %v474
        %v921 = vunpack.c.l.b16 %v475
        %v922 = vunpack.c.l.b16 %v476
        %v923 = vunpack.c.h.b16 %v476
        %v924 = vunpack.c.l.b16 %v477
        %v925 = vunpack.c.h.b16 %v477
        %v926 = vunpack.c.l.b16 %v478
        %v927 = vunpack.c.h.b16 %v478
        %v928 = vunpack.c.l.b16 %v479
        %v929 = vunpack.c.l.b16 %v480
        %v930 = vunpack.c.h.b16 %v480
        %v931 = vunpack.c.l.b16 %v481
        %v932 = vunpack.c.h.b16 %v481
        %v933 = vunpack.c.l.b16 %v482
        %v934 = vunpack.c.h.b16 %v482
        %v935 = vunpack.c.l.b16 %v483
        %v936 = vunpack.c.l.b16 %v484
        %v937 = vunpack.c.h.b16 %v484
        %v938 = vunpack.c.l.b16 %v485
        %v939 = vunpack.c.h.b16 %v485
        %v940 = vunpack.c.l.b16 %v486
        %v941 = vunpack.c.h.b16 %v486
        %v942 = vunpack.c.l.b16 %v487
        %v943 = vunpack.c.l.b16 %v488
        %v944 = vunpack.c.h.b16 %v488
        %v945 = vunpack.c.l.b16 %v489
        %v946 = vunpack.c.h.b16 %v489
        %v947 = vunpack.c.l.b16 %v490
        %v948 = vunpack.c.h.b16 %v490
        %v949 = vunpack.c.l.b16 %v491
        %v950 = vunpack.c.l.b16 %v492
        %v951 = vunpack.c.h.b16 %v492
        %v952 = vunpack.c.l.b16 %v493
        %v953 = vunpack.c.h.b16 %v493
        %v954 = vunpack.c.l.b16 %v494
        %v955 = vunpack.c.h.b16 %v494
        %v956 = vunpack.c.l.b16 %v495
        %v957 = vunpack.c.l.b16 %v496
        %v958 = vunpack.c.h.b16 %v496
        %v959 = vunpack.c.l.b16 %v497
        %v960 = vunpack.c.h.b16 %v497
        %v961 = vunpack.c.l.b16 %v498
        %v962 = vunpack.c.h.b16 %v498
        %v963 = vunpack.c.l.b16 %v499
        %v964 = vunpack.c.l.b16 %v500
        %v965 = vunpack.c.h.b16 %v500
        %v966 = vunpack.c.l.b16 %v501
        %v967 = vunpack.c.h.b16 %v501
        %v968 = vunpack.c.l.b16 %v502
        %v969 = vunpack.c.h.b16 %v502
        %v970 = vunpack.c.l.b16 %v503
        %v971 = vunpack.c.l.b16 %v504
        %v972 = vunpack.c.h.b16 %v504
        %v973 = vunpack.c.l.b16 %v505
        %v974 = vunpack.c.h.b16 %v505
        %v975 = vunpack.c.l.b16 %v506
        %v976 = vunpack.c.h.b16 %v506
        %v977 = vunpack.c.l.b16 %v507
        %v978 = vunpack.c.l.b16 %v508
        %v979 = vunpack.c.h.b16 %v508
        %v980 = vunpack.c.l.b16 %v509
        %v981 = vunpack.c.h.b16 %v509
        %v982 = vunpack.c.l.b16 %v510
        %v983 = vunpack.c.h.b16 %v510
        %v984 = vunpack.c.l.b16 %v511
        %v985 = vunpack.c.l.b16 %v512
        %v986 = vunpack.c.h.b16 %v512
        %v987 = vunpack.c.l.b16 %v513
        %v988 = vunpack.c.h.b16 %v513
        %v989 = vunpack.c.l.b16 %v514
        %v990 = vunpack.c.h.b16 %v514
        %v991 = vunpack.c.l.b16 %v515
        %v992 = vunpack.c.l.b16 %v516
        %v993 = vunpack.c.h.b16 %v516
        %v994 = vunpack.c.l.b16 %v517
        %v995 = vunpack.c.h.b16 %v517
        %v996 = vunpack.c.l.b16 %v518
        %v997 = vunpack.c.h.b16 %v518
        %v998 = vunpack.c.l.b16 %v519
        %v999 = vunpack.c.l.b16 %v520
        %v1000 = vunpack.c.h.b16 %v520
        %v1001 = vunpack.c.l.b16 %v521
        %v1002 = vunpack.c.h.b16 %v521
        %v1003 = vunpack.c.l.b16 %v522
        %v1004 = vunpack.c.h.b16 %v522
        %v1005 = vunpack.c.l.b16 %v523
        %v1006 = vunpack.c.l.b16 %v524
        %v1007 = vunpack.c.h.b16 %v524
        %v1008 = vunpack.c.l.b16 %v525
        %v1009 = vunpack.c.h.b16 %v525
        %v1010 = vunpack.c.l.b16 %v526
        %v1011 = vunpack.c.h.b16 %v526
        %v1012 = vunpack.c.l.b16 %v527
        %v1013 = vunpack.c.l.b16 %v528
        %v1014 = vunpack.c.h.b16 %v528
        %v1015 = vunpack.c.l.b16 %v529
        %v1016 = vunpack.c.h.b16 %v529
        %v1017 = vunpack.c.l.b16 %v530
        %v1018 = vunpack.c.h.b16 %v530
        %v1019 = vunpack.c.l.b16 %v531
        %v1020 = vunpack.c.l.b16 %v532
        %v1021 = vunpack.c.h.b16 %v532
        %v1022 = vunpack.c.l.b16 %v533
        %v1023 = vunpack.c.h.b16 %v533
        %v1024 = vunpack.c.l.b16 %v534
        %v1025 = vunpack.c.h.b16 %v534
        %v1026 = vunpack.c.l.b16 %v535
        %v1027 = vunpack.c.l.b16 %v536
        %v1028 = vunpack.c.h.b16 %v536
        %v1029 = vunpack.c.l.b16 %v537
        %v1030 = vunpack.c.h.b16 %v537
        %v1031 = vunpack.c.l.b16 %v538
        %v1032 = vunpack.c.h.b16 %v538
        %v1033 = vunpack.c.l.b16 %v539
        %v1034 = vunpack.c.l.b16 %v540
        %v1035 = vunpack.c.h.b16 %v540
        %v1036 = vunpack.c.l.b16 %v541
        %v1037 = vunpack.c.h.b16 %v541
        %v1038 = vunpack.c.l.b16 %v542
        %v1039 = vunpack.c.h.b16 %v542
        %v1040 = vunpack.c.l.b16 %v543
        %v1041 = vunpack.c.l.b16 %v544
        %v1042 = vunpack.c.h.b16 %v544
        %v1043 = vunpack.c.l.b16 %v545
        %v1044 = vunpack.c.h.b16 %v545
        %v1045 = vunpack.c.l.b16 %v546
        %v1046 = vunpack.c.h.b16 %v546
        %v1047 = vunpack.c.l.b16 %v547
        %v1048 = vunpack.c.l.b16 %v548
        %v1049 = vunpack.c.h.b16 %v548
        %v1050 = vunpack.c.l.b16 %v549
        %v1051 = vunpack.c.h.b16 %v549
        %v1052 = vunpack.c.l.b16 %v550
        %v1053 = vunpack.c.h.b16 %v550
        %v1054 = vunpack.c.l.b16 %v551
        %v1055 = vunpack.c.l.b16 %v552
        %v1056 = vunpack.c.h.b16 %v552
        %v1057 = vunpack.c.l.b16 %v553
        %v1058 = vunpack.c.h.b16 %v553
        %v1059 = vunpack.c.l.b16 %v554
        %v1060 = vunpack.c.h.b16 %v554
        %v1061 = vunpack.c.l.b16 %v555
        %v1062 = vunpack.c.l.b16 %v556
        %v1063 = vunpack.c.h.b16 %v556
        %v1064 = vunpack.c.l.b16 %v557
        %v1065 = vunpack.c.h.b16 %v557
        %v1066 = vunpack.c.l.b16 %v558
        %v1067 = vunpack.c.h.b16 %v558
        %v1068 = vunpack.c.l.b16 %v559
        %v1069 = vunpack.c.l.b16 %v560
        %v1070 = vunpack.c.h.b16 %v560
        %v1071 = vunpack.c.l.b16 %v561
        %v1072 = vunpack.c.h.b16 %v561
        %v1073 = vunpack.c.l.b16 %v562
        %v1074 = vunpack.c.h.b16 %v562
        %v1075 = vunpack.c.l.b16 %v563
        %v1076 = vunpack.c.l.b16 %v564
        %v1077 = vunpack.c.h.b16 %v564
        %v1078 = vunpack.c.l.b16 %v565
        %v1079 = vunpack.c.h.b16 %v565
        %v1080 = vunpack.c.l.b16 %v566
        %v1081 = vunpack.c.h.b16 %v566
        %v1082 = vunpack.c.l.b16 %v567
        %v1083 = vunpack.c.l.b16 %v568
        %v1084 = vunpack.c.h.b16 %v568
        %v1085 = vunpack.c.l.b16 %v569
        %v1086 = vunpack.c.h.b16 %v569
        %v1087 = vunpack.c.l.b16 %v570
        %v1088 = vunpack.c.h.b16 %v570
        %v1089 = vunpack.c.l.b16 %v571
        %v1090 = vunpack.c.l.b16 %v572
        %v1091 = vunpack.c.h.b16 %v572
        %v1092 = vunpack.c.l.b16 %v573
        %v1093 = vunpack.c.h.b16 %v573
        %v1094 = vunpack.c.l.b16 %v574
        %v1095 = vunpack.c.h.b16 %v574
        %v1096 = vunpack.c.l.b16 %v575
        %v1097 = vunpack.c.l.b16 %v576
        %v1098 = vunpack.c.h.b16 %v576
        %v1099 = vunpack.c.l.b16 %v577
        %v1100 = vunpack.c.h.b16 %v577
        %v1101 = vunpack.c.l.b16 %v578
        %v1102 = vunpack.c.h.b16 %v578
        %v1103 = vunpack.c.l.b16 %v579
        %v1104 = vunpack.c.l.b16 %v580
        %v1105 = vunpack.c.h.b16 %v580
        %v1106 = vunpack.c.l.b16 %v581
        %v1107 = vunpack.c.h.b16 %v581
        %v1108 = vunpack.c.l.b16 %v582
        %v1109 = vunpack.c.h.b16 %v582
        %v1110 = vunpack.c.l.b16 %v583
        %v1111 = vunpack.c.l.b16 %v584
        %v1112 = vunpack.c.h.b16 %v584
        %v1113 = vunpack.c.l.b16 %v585
        %v1114 = vunpack.c.h.b16 %v585
        %v1115 = vunpack.c.l.b16 %v586
        %v1116 = vunpack.c.h.b16 %v586
        %v1117 = vunpack.c.l.b16 %v587
        %v1118 = vunpack.c.l.b16 %v588
        %v1119 = vunpack.c.h.b16 %v588
        %v1120 = vunpack.c.l.b16 %v589
        %v1121 = vunpack.c.h.b16 %v589
        %v1122 = vunpack.c.l.b16 %v590
        %v1123 = vunpack.c.h.b16 %v590
        %v1124 = vunpack.c.l.b16 %v591
        %v1125 = vunpack.c.l.b16 %v592
        %v1126 = vunpack.c.h.b16 %v592
        %v1127 = vunpack.c.l.b16 %v593
        %v1128 = vunpack.c.h.b16 %v593
        %v1129 = vunpack.c.l.b16 %v594
        %v1130 = vunpack.c.h.b16 %v594
        %v1131 = vunpack.c.l.b16 %v595
        %v1132 = vunpack.c.l.b16 %v596
        %v1133 = vunpack.c.h.b16 %v596
        %v1134 = vunpack.c.l.b16 %v597
        %v1135 = vunpack.c.h.b16 %v597
        %v1136 = vunpack.c.l.b16 %v598
        %v1137 = vunpack.c.h.b16 %v598
        %v1138 = vunpack.c.l.b16 %v599
        %v1139 = vunpack.c.l.b16 %v600
        %v1140 = vunpack.c.h.b16 %v600
        %v1141 = vunpack.c.l.b16 %v601
        %v1142 = vunpack.c.h.b16 %v601
        %v1143 = vunpack.c.l.b16 %v602
        %v1144 = vunpack.c.h.b16 %v602
        %v1145 = vunpack.c.l.b16 %v603
        %v1146 = vunpack.c.l.b16 %v604
        %v1147 = vunpack.c.h.b16 %v604
        %v1148 = vunpack.c.l.b16 %v605
        %v1149 = vunpack.c.h.b16 %v605
        %v1150 = vunpack.c.l.b16 %v606
        %v1151 = vunpack.c.h.b16 %v606
        %v1152 = vunpack.c.l.b16 %v607
        %v1153 = vunpack.c.l.b16 %v608
        %v1154 = vunpack.c.h.b16 %v608
        %v1155 = vunpack.c.l.b16 %v609
        %v1156 = vunpack.c.h.b16 %v609
        %v1157 = vunpack.c.l.b16 %v610
        %v1158 = vunpack.c.h.b16 %v610
        %v1159 = vunpack.c.l.b16 %v611
        %v1160 = vunpack.c.l.b16 %v612
        %v1161 = vunpack.c.h.b16 %v612
        %v1162 = vunpack.c.l.b16 %v613
        %v1163 = vunpack.c.h.b16 %v613
        %v1164 = vunpack.c.l.b16 %v614
        %v1165 = vunpack.c.h.b16 %v614
        %v1166 = vunpack.c.l.b16 %v615
        %v1167 = vunpack.c.l.b16 %v616
        %v1168 = vunpack.c.h.b16 %v616
        %v1169 = vunpack.c.l.b16 %v617
        %v1170 = vunpack.c.h.b16 %v617
        %v1171 = vunpack.c.l.b16 %v618
        %v1172 = vunpack.c.h.b16 %v618
        %v1173 = vunpack.c.l.b16 %v619
        %v1174 = vunpack.c.l.b16 %v620
        %v1175 = vunpack.c.h.b16 %v620
        %v1176 = vunpack.c.l.b16 %v621
        %v1177 = vunpack.c.h.b16 %v621
        %v1178 = vunpack.c.l.b16 %v622
        %v1179 = vunpack.c.h.b16 %v622
        %v1180 = vunpack.c.l.b16 %v623
        %v1181 = vunpack.c.l.b16 %v624
        %v1182 = vunpack.c.h.b16 %v624
        %v1183 = vunpack.c.l.b16 %v625
        %v1184 = vunpack.c.h.b16 %v625
        %v1185 = vunpack.c.l.b16 %v626
        %v1186 = vunpack.c.h.b16 %v626
        %v1187 = vunpack.c.l.b16 %v627
        %v1188 = vunpack.c.l.b16 %v628
        %v1189 = vunpack.c.h.b16 %v628
        %v1190 = vunpack.c.l.b16 %v629
        %v1191 = vunpack.c.h.b16 %v629
        %v1192 = vunpack.c.l.b16 %v630
        %v1193 = vunpack.c.h.b16 %v630
        %v1194 = vunpack.c.l.b16 %v631
        %v1195 = vunpack.c.l.b16 %v632
        %v1196 = vunpack.c.h.b16 %v632
        %v1197 = vunpack.c.l.b16 %v633
        %v1198 = vunpack.c.h.b16 %v633
        %v1199 = vunpack.c.l.b16 %v634
        %v1200 = vunpack.c.h.b16 %v634
        %v1201 = vunpack.c.l.b16 %v635
        %v1202 = vpack.c.b16 %v859, %v852
        %v1203 = vpack.c.b16 %v860, %v853
        %v1204 = vpack.c.b16 %v861, %v854
        %v1205 = vpack.c.b16 %v862, %v855
        %v1206 = vpack.c.b16 %v863, %v856
        %v1207 = vpack.c.b16 %v864, %v857
        %v1208 = vpack.c.b16 %v865, %v858
        %v1209 = vpack.c.b16 %v873, %v866
        %v1210 = vpack.c.b16 %v874, %v867
        %v1211 = vpack.c.b16 %v875, %v868
        %v1212 = vpack.c.b16 %v876, %v869
        %v1213 = vpack.c.b16 %v877, %v870
        %v1214 = vpack.c.b16 %v878, %v871
        %v1215 = vpack.c.b16 %v879, %v872
        %v1216 = vpack.c.b16 %v887, %v880
        %v1217 = vpack.c.b16 %v888, %v881
        %v1218 = vpack.c.b16 %v889, %v882
        %v1219 = vpack.c.b16 %v890, %v883
        %v1220 = vpack.c.b16 %v891, %v884
        %v1221 = vpack.c.b16 %v892, %v885
        %v1222 = vpack.c.b16 %v893, %v886
        %v1223 = vpack.c.b16 %v901, %v894
        %v1224 = vpack.c.b16 %v902, %v895
        %v1225 = vpack.c.b16 %v903, %v896
        %v1226 = vpack.c.b16 %v904, %v897
        %v1227 = vpack.c.b16 %v905, %v898
        %v1228 = vpack.c.b16 %v906, %v899
        %v1229 = vpack.c.b16 %v907, %v900
        %v1230 = vpack.c.b16 %v915, %v908
        %v1231 = vpack.c.b16 %v916, %v909
        %v1232 = vpack.c.b16 %v917, %v910
        %v1233 = vpack.c.b16 %v918, %v911
        %v1234 = vpack.c.b16 %v919, %v912
        %v1235 = vpack.c.b16 %v920, %v913
        %v1236 = vpack.c.b16 %v921, %v914
        %v1237 = vpack.c.b16 %v929, %v922
        %v1238 = vpack.c.b16 %v930, %v923
        %v1239 = vpack.c.b16 %v931, %v924
        %v1240 = vpack.c.b16 %v932, %v925
        %v1241 = vpack.c.b16 %v933, %v926
        %v1242 = vpack.c.b16 %v934, %v927
        %v1243 = vpack.c.b16 %v935, %v928
        %v1244 = vpack.c.b16 %v943, %v936
        %v1245 = vpack.c.b16 %v944, %v937
        %v1246 = vpack.c.b16 %v945, %v938
        %v1247 = vpack.c.b16 %v946, %v939
        %v1248 = vpack.c.b16 %v947, %v940
        %v1249 = vpack.c.b16 %v948, %v941
        %v1250 = vpack.c.b16 %v949, %v942
        %v1251 = vpack.c.b16 %v957, %v950
        %v1252 = vpack.c.b16 %v958, %v951
        %v1253 = vpack.c.b16 %v959, %v952
        %v1254 = vpack.c.b16 %v960, %v953
        %v1255 = vpack.c.b16 %v961, %v954
        %v1256 = vpack.c.b16 %v962, %v955
        %v1257 = vpack.c.b16 %v963, %v956
        %v1258 = vpack.c.b16 %v971, %v964
        %v1259 = vpack.c.b16 %v972, %v965
        %v1260 = vpack.c.b16 %v973, %v966
        %v1261 = vpack.c.b16 %v974, %v967
        %v1262 = vpack.c.b16 %v975, %v968
        %v1263 = vpack.c.b16 %v976, %v969
        %v1264 = vpack.c.b16 %v977, %v970
        %v1265 = vpack.c.b16 %v985, %v978
        %v1266 = vpack.c.b16 %v986, %v979
        %v1267 = vpack.c.b16 %v987, %v980
        %v1268 = vpack.c.b16 %v988, %v981
        %v1269 = vpack.c.b16 %v989, %v982
        %v1270 = vpack.c.b16 %v990, %v983
        %v1271 = vpack.c.b16 %v991, %v984
        %v1272 = vpack.c.b16 %v999, %v992
        %v1273 = vpack.c.b16 %v1000, %v993
        %v1274 = vpack.c.b16 %v1001, %v994
        %v1275 = vpack.c.b16 %v1002, %v995
        %v1276 = vpack.c.b16 %v1003, %v996
        %v1277 = vpack.c.b16 %v1004, %v997
        %v1278 = vpack.c.b16 %v1005, %v998
        %v1279 = vpack.c.b16 %v1013, %v1006
        %v1280 = vpack.c.b16 %v1014, %v1007
        %v1281 = vpack.c.b16 %v1015, %v1008
        %v1282 = vpack.c.b16 %v1016, %v1009
        %v1283 = vpack.c.b16 %v1017, %v1010
        %v1284 = vpack.c.b16 %v1018, %v1011
        %v1285 = vpack.c.b16 %v1019, %v1012
        %v1286 = vpack.c.b16 %v1027, %v1020
        %v1287 = vpack.c.b16 %v1028, %v1021
        %v1288 = vpack.c.b16 %v1029, %v1022
        %v1289 = vpack.c.b16 %v1030, %v1023
        %v1290 = vpack.c.b16 %v1031, %v1024
        %v1291 = vpack.c.b16 %v1032, %v1025
        %v1292 = vpack.c.b16 %v1033, %v1026
        %v1293 = vpack.c.b16 %v1041, %v1034
        %v1294 = vpack.c.b16 %v1042, %v1035
        %v1295 = vpack.c.b16 %v1043, %v1036
        %v1296 = vpack.c.b16 %v1044, %v1037
        %v1297 = vpack.c.b16 %v1045, %v1038
        %v1298 = vpack.c.b16 %v1046, %v1039
        %v1299 = vpack.c.b16 %v1047, %v1040
        %v1300 = vpack.c.b16 %v1055, %v1048
        %v1301 = vpack.c.b16 %v1056, %v1049
        %v1302 = vpack.c.b16 %v1057, %v1050
        %v1303 = vpack.c.b16 %v1058, %v1051
        %v1304 = vpack.c.b16 %v1059, %v1052
        %v1305 = vpack.c.b16 %v1060, %v1053
        %v1306 = vpack.c.b16 %v1061, %v1054
        %v1307 = vpack.c.b16 %v1069, %v1062
        %v1308 = vpack.c.b16 %v1070, %v1063
        %v1309 = vpack.c.b16 %v1071, %v1064
        %v1310 = vpack.c.b16 %v1072, %v1065
        %v1311 = vpack.c.b16 %v1073, %v1066
        %v1312 = vpack.c.b16 %v1074, %v1067
        %v1313 = vpack.c.b16 %v1075, %v1068
        %v1314 = vpack.c.b16 %v1083, %v1076
        %v1315 = vpack.c.b16 %v1084, %v1077
        %v1316 = vpack.c.b16 %v1085, %v1078
        %v1317 = vpack.c.b16 %v1086, %v1079
        %v1318 = vpack.c.b16 %v1087, %v1080
        %v1319 = vpack.c.b16 %v1088, %v1081
        %v1320 = vpack.c.b16 %v1089, %v1082
        %v1321 = vpack.c.b16 %v1097, %v1090
        %v1322 = vpack.c.b16 %v1098, %v1091
        %v1323 = vpack.c.b16 %v1099, %v1092
        %v1324 = vpack.c.b16 %v1100, %v1093
        %v1325 = vpack.c.b16 %v1101, %v1094
        %v1326 = vpack.c.b16 %v1102, %v1095
        %v1327 = vpack.c.b16 %v1103, %v1096
        %v1328 = vpack.c.b16 %v1111, %v1104
        %v1329 = vpack.c.b16 %v1112, %v1105
        %v1330 = vpack.c.b16 %v1113, %v1106
        %v1331 = vpack.c.b16 %v1114, %v1107
        %v1332 = vpack.c.b16 %v1115, %v1108
        %v1333 = vpack.c.b16 %v1116, %v1109
        %v1334 = vpack.c.b16 %v1117, %v1110
        %v1335 = vpack.c.b16 %v1125, %v1118
        %v1336 = vpack.c.b16 %v1126, %v1119
        %v1337 = vpack.c.b16 %v1127, %v1120
        %v1338 = vpack.c.b16 %v1128, %v1121
        %v1339 = vpack.c.b16 %v1129, %v1122
        %v1340 = vpack.c.b16 %v1130, %v1123
        %v1341 = vpack.c.b16 %v1131, %v1124
        %v1342 = vpack.c.b16 %v1139, %v1132
        %v1343 = vpack.c.b16 %v1140, %v1133
        %v1344 = vpack.c.b16 %v1141, %v1134
        %v1345 = vpack.c.b16 %v1142, %v1135
        %v1346 = vpack.c.b16 %v1143, %v1136
        %v1347 = vpack.c.b16 %v1144, %v1137
        %v1348 = vpack.c.b16 %v1145, %v1138
        %v1349 = vpack.c.b16 %v1153, %v1146
        %v1350 = vpack.c.b16 %v1154, %v1147
        %v1351 = vpack.c.b16 %v1155, %v1148
        %v1352 = vpack.c.b16 %v1156, %v1149
        %v1353 = vpack.c.b16 %v1157, %v1150
        %v1354 = vpack.c.b16 %v1158, %v1151
        %v1355 = vpack.c.b16 %v1159, %v1152
        %v1356 = vpack.c.b16 %v1167, %v1160
        %v1357 = vpack.c.b16 %v1168, %v1161
        %v1358 = vpack.c.b16 %v1169, %v1162
        %v1359 = vpack.c.b16 %v1170, %v1163
        %v1360 = vpack.c.b16 %v1171, %v1164
        %v1361 = vpack.c.b16 %v1172, %v1165
        %v1362 = vpack.c.b16 %v1173, %v1166
        %v1363 = vpack.c.b16 %v1181, %v1174
        %v1364 = vpack.c.b16 %v1182, %v1175
        %v1365 = vpack.c.b16 %v1183, %v1176
        %v1366 = vpack.c.b16 %v1184, %v1177
        %v1367 = vpack.c.b16 %v1185, %v1178
        %v1368 = vpack.c.b16 %v1186, %v1179
        %v1369 = vpack.c.b16 %v1187, %v1180
        %v1370 = vpack.c.b16 %v1195, %v1188
        %v1371 = vpack.c.b16 %v1196, %v1189
        %v1372 = vpack.c.b16 %v1197, %v1190
        %v1373 = vpack.c.b16 %v1198, %v1191
        %v1374 = vpack.c.b16 %v1199, %v1192
        %v1375 = vpack.c.b16 %v1200, %v1193
        %v1376 = vpack.c.b16 %v1201, %v1194
        %vm1552 = vcmask 130048
        %v1554 = vsel %vm1552, %v435, 0
        %1556 = vmatpush.bf16.msra.mxu0 %v1251
        %1557 = vmatpush.bf16.msra.mxu0 %v1244
        %1558 = vmatpush.bf16.msra.mxu0 %v1237
        %1559 = vmatpush.bf16.msra.mxu0 %v1230
        %1560 = vmatpush.bf16.msra.mxu0 %v1223
        %1561 = vmatpush.bf16.msra.mxu0 %v1216
        %1562 = vmatpush.bf16.msra.mxu0 %v1209
        %1563 = vmatpush.bf16.msra.mxu0 %v1202
        %1564 = vmatmul.bf16.gmra.mxu0 %v432
        %v1565 = vpop.f32.mrf.mxu0
        %v1566 = vadd.f32 %v638, %v1565
        %v1567 = vpop.f32.mrf.mxu0
        %1568 = vdwg.mxu0
        %1569 = vmatpush.bf16.msra.mxu0 %v1307
        %1570 = vmatpush.bf16.msra.mxu0 %v1300
        %1571 = vmatpush.bf16.msra.mxu0 %v1293
        %1572 = vmatpush.bf16.msra.mxu0 %v1286
        %1573 = vmatpush.bf16.msra.mxu0 %v1279
        %1574 = vmatpush.bf16.msra.mxu0 %v1272
        %1575 = vmatpush.bf16.msra.mxu0 %v1265
        %1576 = vmatpush.bf16.msra.mxu0 %v1258
        %1577 = vmatmul.bf16.gmra.mxu0 %v433
        %v1578 = vpop.f32.mrf.mxu0
        %v1579 = vadd.f32 %v1566, %v1578
        %v1580 = vpop.f32.mrf.mxu0
        %1581 = vdwg.mxu0
        %1582 = vmatpush.bf16.msra.mxu0 %v1363
        %1583 = vmatpush.bf16.msra.mxu0 %v1356
        %1584 = vmatpush.bf16.msra.mxu0 %v1349
        %1585 = vmatpush.bf16.msra.mxu0 %v1342
        %1586 = vmatpush.bf16.msra.mxu0 %v1335
        %1587 = vmatpush.bf16.msra.mxu0 %v1328
        %1588 = vmatpush.bf16.msra.mxu0 %v1321
        %1589 = vmatpush.bf16.msra.mxu0 %v1314
        %1590 = vmatmul.bf16.gmra.mxu0 %v434
        %v1591 = vpop.f32.mrf.mxu0
        %v1592 = vadd.f32 %v1579, %v1591
        %v1593 = vpop.f32.mrf.mxu0
        %1594 = vdwg.mxu0
        %1595 = vmatpush.bf16.msra.mxu0 0
        %1596 = vmatpush.bf16.msra.mxu0 0
        %1597 = vmatpush.bf16.msra.mxu0 0
        %1598 = vmatpush.bf16.msra.mxu0 0
        %1599 = vmatpush.bf16.msra.mxu0 0
        %1600 = vmatpush.bf16.msra.mxu0 0
        %1601 = vmatpush.bf16.msra.mxu0 0
        %1602 = vmatpush.bf16.msra.mxu0 %v1370
        %1603 = vmatmul.bf16.gmra.mxu0 %v1554
        %v1604 = vpop.f32.mrf.mxu0
        %v1605 = vadd.f32 %v1592, %v1604
        %v1606 = vpop.f32.mrf.mxu0
        %1607 = vdwg.mxu0
        %1608 = vmatpush.bf16.msra.mxu0 %v1252
        %1609 = vmatpush.bf16.msra.mxu0 %v1245
        %1610 = vmatpush.bf16.msra.mxu0 %v1238
        %1611 = vmatpush.bf16.msra.mxu0 %v1231
        %1612 = vmatpush.bf16.msra.mxu0 %v1224
        %1613 = vmatpush.bf16.msra.mxu0 %v1217
        %1614 = vmatpush.bf16.msra.mxu0 %v1210
        %1615 = vmatpush.bf16.msra.mxu0 %v1203
        %1616 = vmatmul.bf16.gmra.mxu0 %v432
        %v1617 = vpop.f32.mrf.mxu0
        %v1618 = vadd.f32 %v639, %v1617
        %v1619 = vpop.f32.mrf.mxu0
        %1620 = vdwg.mxu0
        %1621 = vmatpush.bf16.msra.mxu0 %v1308
        %1622 = vmatpush.bf16.msra.mxu0 %v1301
        %1623 = vmatpush.bf16.msra.mxu0 %v1294
        %1624 = vmatpush.bf16.msra.mxu0 %v1287
        %1625 = vmatpush.bf16.msra.mxu0 %v1280
        %1626 = vmatpush.bf16.msra.mxu0 %v1273
        %1627 = vmatpush.bf16.msra.mxu0 %v1266
        %1628 = vmatpush.bf16.msra.mxu0 %v1259
        %1629 = vmatmul.bf16.gmra.mxu0 %v433
        %v1630 = vpop.f32.mrf.mxu0
        %v1631 = vadd.f32 %v1618, %v1630
        %v1632 = vpop.f32.mrf.mxu0
        %1633 = vdwg.mxu0
        %1634 = vmatpush.bf16.msra.mxu0 %v1364
        %1635 = vmatpush.bf16.msra.mxu0 %v1357
        %1636 = vmatpush.bf16.msra.mxu0 %v1350
        %1637 = vmatpush.bf16.msra.mxu0 %v1343
        %1638 = vmatpush.bf16.msra.mxu0 %v1336
        %1639 = vmatpush.bf16.msra.mxu0 %v1329
        %1640 = vmatpush.bf16.msra.mxu0 %v1322
        %1641 = vmatpush.bf16.msra.mxu0 %v1315
        %1642 = vmatmul.bf16.gmra.mxu0 %v434
        %v1643 = vpop.f32.mrf.mxu0
        %v1644 = vadd.f32 %v1631, %v1643
        %v1645 = vpop.f32.mrf.mxu0
        %1646 = vdwg.mxu0
        %1647 = vmatpush.bf16.msra.mxu0 0
        %1648 = vmatpush.bf16.msra.mxu0 0
        %1649 = vmatpush.bf16.msra.mxu0 0
        %1650 = vmatpush.bf16.msra.mxu0 0
        %1651 = vmatpush.bf16.msra.mxu0 0
        %1652 = vmatpush.bf16.msra.mxu0 0
        %1653 = vmatpush.bf16.msra.mxu0 0
        %1654 = vmatpush.bf16.msra.mxu0 %v1371
        %1655 = vmatmul.bf16.gmra.mxu0 %v1554
        %v1656 = vpop.f32.mrf.mxu0
        %v1657 = vadd.f32 %v1644, %v1656
        %v1658 = vpop.f32.mrf.mxu0
        %1659 = vdwg.mxu0
        %1660 = vmatpush.bf16.msra.mxu0 %v1253
        %1661 = vmatpush.bf16.msra.mxu0 %v1246
        %1662 = vmatpush.bf16.msra.mxu0 %v1239
        %1663 = vmatpush.bf16.msra.mxu0 %v1232
        %1664 = vmatpush.bf16.msra.mxu0 %v1225
        %1665 = vmatpush.bf16.msra.mxu0 %v1218
        %1666 = vmatpush.bf16.msra.mxu0 %v1211
        %1667 = vmatpush.bf16.msra.mxu0 %v1204
        %1668 = vmatmul.bf16.gmra.mxu0 %v432
        %v1669 = vpop.f32.mrf.mxu0
        %v1670 = vadd.f32 %v640, %v1669
        %v1671 = vpop.f32.mrf.mxu0
        %1672 = vdwg.mxu0
        %1673 = vmatpush.bf16.msra.mxu0 %v1309
        %1674 = vmatpush.bf16.msra.mxu0 %v1302
        %1675 = vmatpush.bf16.msra.mxu0 %v1295
        %1676 = vmatpush.bf16.msra.mxu0 %v1288
        %1677 = vmatpush.bf16.msra.mxu0 %v1281
        %1678 = vmatpush.bf16.msra.mxu0 %v1274
        %1679 = vmatpush.bf16.msra.mxu0 %v1267
        %1680 = vmatpush.bf16.msra.mxu0 %v1260
        %1681 = vmatmul.bf16.gmra.mxu0 %v433
        %v1682 = vpop.f32.mrf.mxu0
        %v1683 = vadd.f32 %v1670, %v1682
        %v1684 = vpop.f32.mrf.mxu0
        %1685 = vdwg.mxu0
        %1686 = vmatpush.bf16.msra.mxu0 %v1365
        %1687 = vmatpush.bf16.msra.mxu0 %v1358
        %1688 = vmatpush.bf16.msra.mxu0 %v1351
        %1689 = vmatpush.bf16.msra.mxu0 %v1344
        %1690 = vmatpush.bf16.msra.mxu0 %v1337
        %1691 = vmatpush.bf16.msra.mxu0 %v1330
        %1692 = vmatpush.bf16.msra.mxu0 %v1323
        %1693 = vmatpush.bf16.msra.mxu0 %v1316
        %1694 = vmatmul.bf16.gmra.mxu0 %v434
        %v1695 = vpop.f32.mrf.mxu0
        %v1696 = vadd.f32 %v1683, %v1695
        %v1697 = vpop.f32.mrf.mxu0
        %1698 = vdwg.mxu0
        %1699 = vmatpush.bf16.msra.mxu0 0
        %1700 = vmatpush.bf16.msra.mxu0 0
        %1701 = vmatpush.bf16.msra.mxu0 0
        %1702 = vmatpush.bf16.msra.mxu0 0
        %1703 = vmatpush.bf16.msra.mxu0 0
        %1704 = vmatpush.bf16.msra.mxu0 0
        %1705 = vmatpush.bf16.msra.mxu0 0
        %1706 = vmatpush.bf16.msra.mxu0 %v1372
        %1707 = vmatmul.bf16.gmra.mxu0 %v1554
        %v1708 = vpop.f32.mrf.mxu0
        %v1709 = vadd.f32 %v1696, %v1708
        %v1710 = vpop.f32.mrf.mxu0
        %1711 = vdwg.mxu0
        %1712 = vmatpush.bf16.msra.mxu0 %v1254
        %1713 = vmatpush.bf16.msra.mxu0 %v1247
        %1714 = vmatpush.bf16.msra.mxu0 %v1240
        %1715 = vmatpush.bf16.msra.mxu0 %v1233
        %1716 = vmatpush.bf16.msra.mxu0 %v1226
        %1717 = vmatpush.bf16.msra.mxu0 %v1219
        %1718 = vmatpush.bf16.msra.mxu0 %v1212
        %1719 = vmatpush.bf16.msra.mxu0 %v1205
        %1720 = vmatmul.bf16.gmra.mxu0 %v432
        %v1721 = vpop.f32.mrf.mxu0
        %v1722 = vadd.f32 %v641, %v1721
        %v1723 = vpop.f32.mrf.mxu0
        %1724 = vdwg.mxu0
        %1725 = vmatpush.bf16.msra.mxu0 %v1310
        %1726 = vmatpush.bf16.msra.mxu0 %v1303
        %1727 = vmatpush.bf16.msra.mxu0 %v1296
        %1728 = vmatpush.bf16.msra.mxu0 %v1289
        %1729 = vmatpush.bf16.msra.mxu0 %v1282
        %1730 = vmatpush.bf16.msra.mxu0 %v1275
        %1731 = vmatpush.bf16.msra.mxu0 %v1268
        %1732 = vmatpush.bf16.msra.mxu0 %v1261
        %1733 = vmatmul.bf16.gmra.mxu0 %v433
        %v1734 = vpop.f32.mrf.mxu0
        %v1735 = vadd.f32 %v1722, %v1734
        %v1736 = vpop.f32.mrf.mxu0
        %1737 = vdwg.mxu0
        %1738 = vmatpush.bf16.msra.mxu0 %v1366
        %1739 = vmatpush.bf16.msra.mxu0 %v1359
        %1740 = vmatpush.bf16.msra.mxu0 %v1352
        %1741 = vmatpush.bf16.msra.mxu0 %v1345
        %1742 = vmatpush.bf16.msra.mxu0 %v1338
        %1743 = vmatpush.bf16.msra.mxu0 %v1331
        %1744 = vmatpush.bf16.msra.mxu0 %v1324
        %1745 = vmatpush.bf16.msra.mxu0 %v1317
        %1746 = vmatmul.bf16.gmra.mxu0 %v434
        %v1747 = vpop.f32.mrf.mxu0
        %v1748 = vadd.f32 %v1735, %v1747
        %v1749 = vpop.f32.mrf.mxu0
        %1750 = vdwg.mxu0
        %1751 = vmatpush.bf16.msra.mxu0 0
        %1752 = vmatpush.bf16.msra.mxu0 0
        %1753 = vmatpush.bf16.msra.mxu0 0
        %1754 = vmatpush.bf16.msra.mxu0 0
        %1755 = vmatpush.bf16.msra.mxu0 0
        %1756 = vmatpush.bf16.msra.mxu0 0
        %1757 = vmatpush.bf16.msra.mxu0 0
        %1758 = vmatpush.bf16.msra.mxu0 %v1373
        %1759 = vmatmul.bf16.gmra.mxu0 %v1554
        %v1760 = vpop.f32.mrf.mxu0
        %v1761 = vadd.f32 %v1748, %v1760
        %v1762 = vpop.f32.mrf.mxu0
        %1763 = vdwg.mxu0
        %1764 = vmatpush.bf16.msra.mxu0 %v1255
        %1765 = vmatpush.bf16.msra.mxu0 %v1248
        %1766 = vmatpush.bf16.msra.mxu0 %v1241
        %1767 = vmatpush.bf16.msra.mxu0 %v1234
        %1768 = vmatpush.bf16.msra.mxu0 %v1227
        %1769 = vmatpush.bf16.msra.mxu0 %v1220
        %1770 = vmatpush.bf16.msra.mxu0 %v1213
        %1771 = vmatpush.bf16.msra.mxu0 %v1206
        %1772 = vmatmul.bf16.gmra.mxu0 %v432
        %v1773 = vpop.f32.mrf.mxu0
        %v1774 = vadd.f32 %v642, %v1773
        %v1775 = vpop.f32.mrf.mxu0
        %1776 = vdwg.mxu0
        %1777 = vmatpush.bf16.msra.mxu0 %v1311
        %1778 = vmatpush.bf16.msra.mxu0 %v1304
        %1779 = vmatpush.bf16.msra.mxu0 %v1297
        %1780 = vmatpush.bf16.msra.mxu0 %v1290
        %1781 = vmatpush.bf16.msra.mxu0 %v1283
        %1782 = vmatpush.bf16.msra.mxu0 %v1276
        %1783 = vmatpush.bf16.msra.mxu0 %v1269
        %1784 = vmatpush.bf16.msra.mxu0 %v1262
        %1785 = vmatmul.bf16.gmra.mxu0 %v433
        %v1786 = vpop.f32.mrf.mxu0
        %v1787 = vadd.f32 %v1774, %v1786
        %v1788 = vpop.f32.mrf.mxu0
        %1789 = vdwg.mxu0
        %1790 = vmatpush.bf16.msra.mxu0 %v1367
        %1791 = vmatpush.bf16.msra.mxu0 %v1360
        %1792 = vmatpush.bf16.msra.mxu0 %v1353
        %1793 = vmatpush.bf16.msra.mxu0 %v1346
        %1794 = vmatpush.bf16.msra.mxu0 %v1339
        %1795 = vmatpush.bf16.msra.mxu0 %v1332
        %1796 = vmatpush.bf16.msra.mxu0 %v1325
        %1797 = vmatpush.bf16.msra.mxu0 %v1318
        %1798 = vmatmul.bf16.gmra.mxu0 %v434
        %v1799 = vpop.f32.mrf.mxu0
        %v1800 = vadd.f32 %v1787, %v1799
        %v1801 = vpop.f32.mrf.mxu0
        %1802 = vdwg.mxu0
        %1803 = vmatpush.bf16.msra.mxu0 0
        %1804 = vmatpush.bf16.msra.mxu0 0
        %1805 = vmatpush.bf16.msra.mxu0 0
        %1806 = vmatpush.bf16.msra.mxu0 0
        %1807 = vmatpush.bf16.msra.mxu0 0
        %1808 = vmatpush.bf16.msra.mxu0 0
        %1809 = vmatpush.bf16.msra.mxu0 0
        %1810 = vmatpush.bf16.msra.mxu0 %v1374
        %1811 = vmatmul.bf16.gmra.mxu0 %v1554
        %v1812 = vpop.f32.mrf.mxu0
        %v1813 = vadd.f32 %v1800, %v1812
        %v1814 = vpop.f32.mrf.mxu0
        %1815 = vdwg.mxu0
        %1816 = vmatpush.bf16.msra.mxu0 %v1256
        %1817 = vmatpush.bf16.msra.mxu0 %v1249
        %1818 = vmatpush.bf16.msra.mxu0 %v1242
        %1819 = vmatpush.bf16.msra.mxu0 %v1235
        %1820 = vmatpush.bf16.msra.mxu0 %v1228
        %1821 = vmatpush.bf16.msra.mxu0 %v1221
        %1822 = vmatpush.bf16.msra.mxu0 %v1214
        %1823 = vmatpush.bf16.msra.mxu0 %v1207
        %1824 = vmatmul.bf16.gmra.mxu0 %v432
        %v1825 = vpop.f32.mrf.mxu0
        %v1826 = vadd.f32 %v643, %v1825
        %v1827 = vpop.f32.mrf.mxu0
        %1828 = vdwg.mxu0
        %1829 = vmatpush.bf16.msra.mxu0 %v1312
        %1830 = vmatpush.bf16.msra.mxu0 %v1305
        %1831 = vmatpush.bf16.msra.mxu0 %v1298
        %1832 = vmatpush.bf16.msra.mxu0 %v1291
        %1833 = vmatpush.bf16.msra.mxu0 %v1284
        %1834 = vmatpush.bf16.msra.mxu0 %v1277
        %1835 = vmatpush.bf16.msra.mxu0 %v1270
        %1836 = vmatpush.bf16.msra.mxu0 %v1263
        %1837 = vmatmul.bf16.gmra.mxu0 %v433
        %v1838 = vpop.f32.mrf.mxu0
        %v1839 = vadd.f32 %v1826, %v1838
        %v1840 = vpop.f32.mrf.mxu0
        %1841 = vdwg.mxu0
        %1842 = vmatpush.bf16.msra.mxu0 %v1368
        %1843 = vmatpush.bf16.msra.mxu0 %v1361
        %1844 = vmatpush.bf16.msra.mxu0 %v1354
        %1845 = vmatpush.bf16.msra.mxu0 %v1347
        %1846 = vmatpush.bf16.msra.mxu0 %v1340
        %1847 = vmatpush.bf16.msra.mxu0 %v1333
        %1848 = vmatpush.bf16.msra.mxu0 %v1326
        %1849 = vmatpush.bf16.msra.mxu0 %v1319
        %1850 = vmatmul.bf16.gmra.mxu0 %v434
        %v1851 = vpop.f32.mrf.mxu0
        %v1852 = vadd.f32 %v1839, %v1851
        %v1853 = vpop.f32.mrf.mxu0
        %1854 = vdwg.mxu0
        %1855 = vmatpush.bf16.msra.mxu0 0
        %1856 = vmatpush.bf16.msra.mxu0 0
        %1857 = vmatpush.bf16.msra.mxu0 0
        %1858 = vmatpush.bf16.msra.mxu0 0
        %1859 = vmatpush.bf16.msra.mxu0 0
        %1860 = vmatpush.bf16.msra.mxu0 0
        %1861 = vmatpush.bf16.msra.mxu0 0
        %1862 = vmatpush.bf16.msra.mxu0 %v1375
        %1863 = vmatmul.bf16.gmra.mxu0 %v1554
        %v1864 = vpop.f32.mrf.mxu0
        %v1865 = vadd.f32 %v1852, %v1864
        %v1866 = vpop.f32.mrf.mxu0
        %1867 = vdwg.mxu0
        %1868 = vmatpush.bf16.msra.mxu0 %v1257
        %1869 = vmatpush.bf16.msra.mxu0 %v1250
        %1870 = vmatpush.bf16.msra.mxu0 %v1243
        %1871 = vmatpush.bf16.msra.mxu0 %v1236
        %1872 = vmatpush.bf16.msra.mxu0 %v1229
        %1873 = vmatpush.bf16.msra.mxu0 %v1222
        %1874 = vmatpush.bf16.msra.mxu0 %v1215
        %1875 = vmatpush.bf16.msra.mxu0 %v1208
        %1876 = vmatmul.bf16.gmra.mxu0 %v432
        %v1877 = vpop.f32.mrf.mxu0
        %v1878 = vadd.f32 %v644, %v1877
        %v1879 = vpop.f32.mrf.mxu0
        %1880 = vdwg.mxu0
        %1881 = vmatpush.bf16.msra.mxu0 %v1313
        %1882 = vmatpush.bf16.msra.mxu0 %v1306
        %1883 = vmatpush.bf16.msra.mxu0 %v1299
        %1884 = vmatpush.bf16.msra.mxu0 %v1292
        %1885 = vmatpush.bf16.msra.mxu0 %v1285
        %1886 = vmatpush.bf16.msra.mxu0 %v1278
        %1887 = vmatpush.bf16.msra.mxu0 %v1271
        %1888 = vmatpush.bf16.msra.mxu0 %v1264
        %1889 = vmatmul.bf16.gmra.mxu0 %v433
        %v1890 = vpop.f32.mrf.mxu0
        %v1891 = vadd.f32 %v1878, %v1890
        %v1892 = vpop.f32.mrf.mxu0
        %1893 = vdwg.mxu0
        %1894 = vmatpush.bf16.msra.mxu0 %v1369
        %1895 = vmatpush.bf16.msra.mxu0 %v1362
        %1896 = vmatpush.bf16.msra.mxu0 %v1355
        %1897 = vmatpush.bf16.msra.mxu0 %v1348
        %1898 = vmatpush.bf16.msra.mxu0 %v1341
        %1899 = vmatpush.bf16.msra.mxu0 %v1334
        %1900 = vmatpush.bf16.msra.mxu0 %v1327
        %1901 = vmatpush.bf16.msra.mxu0 %v1320
        %1902 = vmatmul.bf16.gmra.mxu0 %v434
        %v1903 = vpop.f32.mrf.mxu0
        %v1904 = vadd.f32 %v1891, %v1903
        %v1905 = vpop.f32.mrf.mxu0
        %1906 = vdwg.mxu0
        %1907 = vmatpush.bf16.msra.mxu0 0
        %1908 = vmatpush.bf16.msra.mxu0 0
        %1909 = vmatpush.bf16.msra.mxu0 0
        %1910 = vmatpush.bf16.msra.mxu0 0
        %1911 = vmatpush.bf16.msra.mxu0 0
        %1912 = vmatpush.bf16.msra.mxu0 0
        %1913 = vmatpush.bf16.msra.mxu0 0
        %1914 = vmatpush.bf16.msra.mxu0 %v1376
        %1915 = vmatmul.bf16.gmra.mxu0 %v1554
        %v1916 = vpop.f32.mrf.mxu0
        %v1917 = vadd.f32 %v1904, %v1916
        %v1918 = vpop.f32.mrf.mxu0
        %1919 = vdwg.mxu0
        %v1920 = vxor.u32 %v1605, 2147483648
        %v1921 = vxor.u32 %v1657, 2147483648
        %v1922 = vxor.u32 %v1709, 2147483648
        %v1923 = vxor.u32 %v1761, 2147483648
        %v1924 = vxor.u32 %v1813, 2147483648
        %v1925 = vxor.u32 %v1865, 2147483648
        %v1926 = vxor.u32 %v1917, 2147483648
        %v1927 = vmul.f32 %v1920, 1.442695
        %v1928 = vpow.pop %v1927
        %v1929 = vmul.f32 %v1921, 1.442695
        %v1930 = vpow.pop %v1929
        %v1931 = vmul.f32 %v1922, 1.442695
        %v1932 = vpow.pop %v1931
        %v1933 = vmul.f32 %v1923, 1.442695
        %v1934 = vpow.pop %v1933
        %v1935 = vmul.f32 %v1924, 1.442695
        %v1936 = vpow.pop %v1935
        %v1937 = vmul.f32 %v1925, 1.442695
        %v1938 = vpow.pop %v1937
        %v1939 = vmul.f32 %v1926, 1.442695
        %v1940 = vpow.pop %v1939
        %v1941 = vadd.f32 %v1928, 1.0
        %v1942 = vadd.f32 %v1930, 1.0
        %v1943 = vadd.f32 %v1932, 1.0
        %v1944 = vadd.f32 %v1934, 1.0
        %v1945 = vadd.f32 %v1936, 1.0
        %v1946 = vadd.f32 %v1938, 1.0
        %v1947 = vadd.f32 %v1940, 1.0
        %v1948 = vrcp.pop %v1941
        %v1949 = vmul.f32 %v1941, %v1948
        %v1950 = vsub.f32 1.0, %v1949
        %v1951 = vmul.f32 %v1948, %v1950
        %v1952 = vadd.f32 %v1948, %v1951
        %vm1953 = vweird.f32 %v1941
        %vm1954 = vweird.f32 %v1948
        %vm1955 = vmor %vm1953, %vm1954
        %v1956 = vsel %vm1955, %v1948, %v1952
        %v1957 = vand.u32 2147483647, %v1941
        %vm1958 = vcmp.eq.f32.partialorder %v1957, 8.507059e+37
        %v1959 = vand.u32 %v1941, 2147483648
        %v1960 = vor.u32 1.1754944e-38, %v1959
        %v1961 = vsel %vm1958, %v1960, %v1956
        %v1962 = vmul.f32 1.0, %v1961
        %v1963 = vrcp.pop %v1942
        %v1964 = vmul.f32 %v1942, %v1963
        %v1965 = vsub.f32 1.0, %v1964
        %v1966 = vmul.f32 %v1963, %v1965
        %v1967 = vadd.f32 %v1963, %v1966
        %vm1968 = vweird.f32 %v1942
        %vm1969 = vweird.f32 %v1963
        %vm1970 = vmor %vm1968, %vm1969
        %v1971 = vsel %vm1970, %v1963, %v1967
        %v1972 = vand.u32 2147483647, %v1942
        %vm1973 = vcmp.eq.f32.partialorder %v1972, 8.507059e+37
        %v1974 = vand.u32 %v1942, 2147483648
        %v1975 = vor.u32 1.1754944e-38, %v1974
        %v1976 = vsel %vm1973, %v1975, %v1971
        %v1977 = vmul.f32 1.0, %v1976
        %v1978 = vrcp.pop %v1943
        %v1979 = vmul.f32 %v1943, %v1978
        %v1980 = vsub.f32 1.0, %v1979
        %v1981 = vmul.f32 %v1978, %v1980
        %v1982 = vadd.f32 %v1978, %v1981
        %vm1983 = vweird.f32 %v1943
        %vm1984 = vweird.f32 %v1978
        %vm1985 = vmor %vm1983, %vm1984
        %v1986 = vsel %vm1985, %v1978, %v1982
        %v1987 = vand.u32 2147483647, %v1943
        %vm1988 = vcmp.eq.f32.partialorder %v1987, 8.507059e+37
        %v1989 = vand.u32 %v1943, 2147483648
        %v1990 = vor.u32 1.1754944e-38, %v1989
        %v1991 = vsel %vm1988, %v1990, %v1986
        %v1992 = vmul.f32 1.0, %v1991
        %v1993 = vrcp.pop %v1944
        %v1994 = vmul.f32 %v1944, %v1993
        %v1995 = vsub.f32 1.0, %v1994
        %v1996 = vmul.f32 %v1993, %v1995
        %v1997 = vadd.f32 %v1993, %v1996
        %vm1998 = vweird.f32 %v1944
        %vm1999 = vweird.f32 %v1993
        %vm2000 = vmor %vm1998, %vm1999
        %v2001 = vsel %vm2000, %v1993, %v1997
        %v2002 = vand.u32 2147483647, %v1944
        %vm2003 = vcmp.eq.f32.partialorder %v2002, 8.507059e+37
        %v2004 = vand.u32 %v1944, 2147483648
        %v2005 = vor.u32 1.1754944e-38, %v2004
        %v2006 = vsel %vm2003, %v2005, %v2001
        %v2007 = vmul.f32 1.0, %v2006
        %v2008 = vrcp.pop %v1945
        %v2009 = vmul.f32 %v1945, %v2008
        %v2010 = vsub.f32 1.0, %v2009
        %v2011 = vmul.f32 %v2008, %v2010
        %v2012 = vadd.f32 %v2008, %v2011
        %vm2013 = vweird.f32 %v1945
        %vm2014 = vweird.f32 %v2008
        %vm2015 = vmor %vm2013, %vm2014
        %v2016 = vsel %vm2015, %v2008, %v2012
        %v2017 = vand.u32 2147483647, %v1945
        %vm2018 = vcmp.eq.f32.partialorder %v2017, 8.507059e+37
        %v2019 = vand.u32 %v1945, 2147483648
        %v2020 = vor.u32 1.1754944e-38, %v2019
        %v2021 = vsel %vm2018, %v2020, %v2016
        %v2022 = vmul.f32 1.0, %v2021
        %v2023 = vrcp.pop %v1946
        %v2024 = vmul.f32 %v1946, %v2023
        %v2025 = vsub.f32 1.0, %v2024
        %v2026 = vmul.f32 %v2023, %v2025
        %v2027 = vadd.f32 %v2023, %v2026
        %vm2028 = vweird.f32 %v1946
        %vm2029 = vweird.f32 %v2023
        %vm2030 = vmor %vm2028, %vm2029
        %v2031 = vsel %vm2030, %v2023, %v2027
        %v2032 = vand.u32 2147483647, %v1946
        %vm2033 = vcmp.eq.f32.partialorder %v2032, 8.507059e+37
        %v2034 = vand.u32 %v1946, 2147483648
        %v2035 = vor.u32 1.1754944e-38, %v2034
        %v2036 = vsel %vm2033, %v2035, %v2031
        %v2037 = vmul.f32 1.0, %v2036
        %v2038 = vrcp.pop %v1947
        %v2039 = vmul.f32 %v1947, %v2038
        %v2040 = vsub.f32 1.0, %v2039
        %v2041 = vmul.f32 %v2038, %v2040
        %v2042 = vadd.f32 %v2038, %v2041
        %vm2043 = vweird.f32 %v1947
        %vm2044 = vweird.f32 %v2038
        %vm2045 = vmor %vm2043, %vm2044
        %v2046 = vsel %vm2045, %v2038, %v2042
        %v2047 = vand.u32 2147483647, %v1947
        %vm2048 = vcmp.eq.f32.partialorder %v2047, 8.507059e+37
        %v2049 = vand.u32 %v1947, 2147483648
        %v2050 = vor.u32 1.1754944e-38, %v2049
        %v2051 = vsel %vm2048, %v2050, %v2046
        %v2052 = vmul.f32 1.0, %v2051
        %2053 = vst [vmem:[%s242] sm:$0xff] %v1962
        %2054 = vst [vmem:[%s242 + $0x8] sm:$0xff] %v1977
        %2055 = vst [vmem:[%s242 + $0x10] sm:$0xff] %v1992
        %2056 = vst [vmem:[%s242 + $0x18] sm:$0xff] %v2007
        %2057 = vst [vmem:[%s242 + $0x20] sm:$0xff] %v2022
        %2058 = vst [vmem:[%s242 + $0x28] sm:$0xff] %v2037
        %2059 = vst.msk [vmem:[%s242 + $0x30] sm:$0xff] %vm1552, %v2052
        %s2060 = sand.u32 %s159, 1
        %s2061 = scalar_lea.sflag [#allocation3], %s2060
        %s2062 = sand.u32 %s159, 1
        %s2063 = smul.addr %s2062, 56
        %s2064 = scalar_lea.vmem [#allocation2], %s2063
        // Predicated region
        $region45: #{vae_forward.5} parent=43 // pred_check
          %p2065 = pneg %p169
        $region46: #{vae_forward.5} parent=43 // pred_check_branch
          %2067 = sbr.rel (%p2065) target = $region48
        $region47: #{vae_forward.5} parent=43 // pred_region
          %2069 = vsyncadd %s2061, 0
          %s2070 = smul.addr %s20, 7
          %s2071 = smul.addr %s2070, 8
          %s2072 = scalar_lea.hbm %s6, %s2071
          %s2074 = sshll.u32 %s2064, 4
          %s2075 = int_to_ptr.vmem [resolvable:$true] %s2074
          %s2076 = sshll.u32 %s2072, 4
          %s2077 = int_to_ptr.hbm [resolvable:$true] %s2076
          %2079 = dma.vmem_to_hbm [thread:$0]  %s2075, 896, %s2077, %s2061
        $region48: #{vae_forward.5} parent=43 // pred_fallthru
          _
      $region44: #{vae_forward.5} parent=5 // pred_fallthru
        _
      %p2080 = scmp.le.s32.totalorder 2, %s15
      // Predicated region
      $region49: #{vae_forward.5} parent=5 // pred_check
        %p2081 = pneg %p2080
      $region50: #{vae_forward.5} parent=5 // pred_check_branch
        %2083 = sbr.rel (%p2081) target = $region52
      $region51: #{vae_forward.5} parent=5 // pred_region
        %s2084 = ssub.s32 %s15, 2
        // Predicated region
        $region53: #{vae_forward.5} parent=51 // pred_check
          %p2085 = pneg %p175
        $region54: #{vae_forward.5} parent=51 // pred_check_branch
          %2087 = sbr.rel (%p2085) target = $region56
        $region55: #{vae_forward.5} parent=51 // pred_region
          %s2088 = sand.u32 %s160, 1
          %s2089 = scalar_lea.sflag [#allocation3], %s2088
          %s2090 = sand.u32 %s160, 1
          %s2091 = smul.addr %s2090, 56
          %s2092 = scalar_lea.vmem [#allocation2], %s2091
          %2094 = dma.done %s2089, 896
        $region56: #{vae_forward.5} parent=51 // pred_fallthru
          _
      $region52: #{vae_forward.5} parent=5 // pred_fallthru
        _
    $region6: #{vae_forward.5} parent=1 // loop_footer
      %s19 = sadd.s32 1, %s15
    $region7: #{vae_forward.5} parent=1 // loop_footer_branch
      %14 = sbr.rel target = $region3
    $region8: #{vae_forward.5} parent=1 // loop_exit
      _
    %2095 = vsyncpa [#allocation3], 1
    %s2096 = scalar_lea.sflag [#allocation3], 1
    %2097 = vsyncpa %s2096, 1

</llo_original>
